<compile_context>
chip_gen: v6e
topology: v6e:2x2x1
jax: 0.10.0
libtpu: 0.0.40
codegen_flags: <defaults>
</compile_context>

<pallas_src>
import functools
import math

import jax
import jax.numpy as jnp
from jax.experimental import pallas as pl
from jax.experimental.pallas import tpu as pltpu


# --------------------------------------------------------------------------------------
# Hardware-aware sizing helpers
# --------------------------------------------------------------------------------------
@functools.lru_cache(maxsize=None)
def _hw():
    """(vmem_capacity, budget, row_tile_target, vmem_limit_cap) in bytes."""
    try:
        cap = int(pltpu.get_tpu_info().vmem_capacity_bytes)
    except Exception:
        cap = 64 * 1024 * 1024          # conservative: v7x has 64 MiB / TensorCore
    budget = int(cap * 0.60)            # working-set budget with headroom
    target = 512 if cap >= 96 * 1024 * 1024 else 256   # v5e/v6e (128 MiB) vs v7x
    limit_cap = int(cap * 0.75)
    return cap, budget, target, limit_cap


def _choose_row_tile(n_rows, per_row_bytes, resident_bytes, budget, target):
    """Largest power-of-two-times-8 tile <= target that fits the VMEM budget, shrunk so
    the grid keeps >= 2 steps whenever n_rows allows (v7x megacore split)."""
    tile = 8
    cand = 16
    while cand <= target and resident_bytes + cand * per_row_bytes <= budget:
        tile = cand
        cand *= 2
    while tile > 8 and pl.cdiv(n_rows, tile) < 2:
        tile //= 2
    return tile


def _pad_rows(x, row_tile):
    """Pad the leading (row) dim up to a multiple of row_tile (masked tail > ragged block)."""
    n = x.shape[0]
    n_pad = pl.cdiv(n, row_tile) * row_tile
    if n_pad == n:
        return x, n
    return jnp.pad(x, ((0, n_pad - n), (0, 0))), n_pad


def _compiler_params(n_grid_axes, est_vmem_bytes):
    cap, _, _, limit_cap = _hw()
    kw = dict(dimension_semantics=("parallel",) * n_grid_axes)
    # v5e default scoped-VMEM limit is only 16 MiB -> raise early (>12 MiB) when needed.
    if est_vmem_bytes > 12 * 1024 * 1024:
        kw["vmem_limit_bytes"] = int(min(est_vmem_bytes * 1.5, limit_cap))
    return pltpu.CompilerParams(**kw)


def _gelu_tanh(h):
    # tanh-approx GELU (tanh runs on the EUP slot).
    # TODO(synk): if config.hidden_act is the exact erf-based "gelu", swap in an erf
    # formulation once lax.erf lowering is available in this Mosaic build.
    c = math.sqrt(2.0 / math.pi)
    return 0.5 * h * (1.0 + jnp.tanh(c * (h + 0.044715 * h * h * h)))


# --------------------------------------------------------------------------------------
# Kernel 1: row-tiled dense projection (fused QKV / fused KV / Q)
# --------------------------------------------------------------------------------------
def _linear_kernel(x_ref, w_ref, b_ref, o_ref):
    h = jnp.dot(x_ref[...], w_ref[...], preferred_element_type=jnp.float32)
    h = h + b_ref[...].astype(jnp.float32)
    o_ref[...] = h.astype(o_ref.dtype)


def linear(x2, w_t, bias, *, row_tile=None):
    """x2: (N, Din); w_t: (Din, Dout) pre-transposed at model-load time; bias: (Dout,)."""
    n, din = x2.shape
    dout = w_t.shape[1]
    dt = jnp.dtype(x2.dtype).itemsize
    _, budget, target, _ = _hw()
    per_row = 2 * dt * (din + dout) + 4 * dout
    resident = 2 * dt * (din * dout + dout)
    if row_tile is None:
        row_tile = _choose_row_tile(n, per_row, resident, budget, target)
    x2p, n_pad = _pad_rows(x2, row_tile)
    grid = (n_pad // row_tile,)
    est_vmem = resident + row_tile * per_row
    cost = pl.CostEstimate(
        flops=int(2 * n * din * dout),
        transcendentals=0,
        bytes_accessed=int(dt * (n * din + din * dout + dout + n * dout)))
    out = pl.pallas_call(
        _linear_kernel,
        out_shape=jax.ShapeDtypeStruct((n_pad, dout), x2.dtype),
        grid=grid,
        in_specs=[
            pl.BlockSpec((row_tile, din), lambda i: (i, 0)),
            pl.BlockSpec((din, dout), lambda i: (0, 0)),
            pl.BlockSpec((1, dout), lambda i: (0, 0)),
        ],
        out_specs=pl.BlockSpec((row_tile, dout), lambda i: (i, 0)),
        compiler_params=_compiler_params(1, est_vmem),
        cost_estimate=cost,
    )(x2p, w_t, bias.reshape(1, dout))
    return out[:n] if n_pad != n else out


# --------------------------------------------------------------------------------------
# Kernel 2: attention core.  Grid over batch; fused QKV activation DMA'd once per step,
# heads sliced with pl.ds inside the kernel, context written back in merged layout.
# --------------------------------------------------------------------------------------
def _attention_body(q_ref, kv_ref, o_ref, *, n_heads, head_dim, q_off, k_off, v_off):
    # q_ref: (Sq, Cq), kv_ref: (Sk, Ck), o_ref: (Sq, H).  Scale folded into Wq/bq.
    # TODO(synk): additive attention_mask / head_mask / attention-prob dropout not
    # emitted (None / eval-mode path of the reference module); clamp_inf is fp16-only.
    # TODO(synk): for S >~ 1k, tile the query dim (online softmax) instead of the full
    # (Sq, Sk) score block.
    ctxs = []
    for h in range(n_heads):
        qh = q_ref[:, pl.ds(q_off + h * head_dim, head_dim)]
        kh = kv_ref[:, pl.ds(k_off + h * head_dim, head_dim)]
        vh = kv_ref[:, pl.ds(v_off + h * head_dim, head_dim)]
        s = jnp.dot(qh, kh.T, preferred_element_type=jnp.float32)
        m = jnp.max(s, axis=-1, keepdims=True)
        p = jnp.exp(s - m)                                   # unnormalized
        l = jnp.sum(p, axis=-1, keepdims=True)
        ctx = jnp.dot(p.astype(vh.dtype), vh, preferred_element_type=jnp.float32)
        ctxs.append(ctx * pl.reciprocal(l, approx=False))    # deferred normalization
    # Single lane-dense store of all heads in merged layout.
    o_ref[...] = jnp.concatenate(ctxs, axis=-1).astype(o_ref.dtype)


def _cross_attention_kernel(q_ref, kv_ref, o_ref, *, n_heads, head_dim, hidden):
    _attention_body(q_ref, kv_ref, o_ref, n_heads=n_heads, head_dim=head_dim,
                    q_off=0, k_off=0, v_off=hidden)


def _self_attention_kernel(qkv_ref, o_ref, *, n_heads, head_dim, hidden):
    _attention_body(qkv_ref, qkv_ref, o_ref, n_heads=n_heads, head_dim=head_dim,
                    q_off=0, k_off=hidden, v_off=2 * hidden)


def attention_cross(q3, kv3, *, n_heads, head_dim):
    """q3: (B, Sq, H) scaled-Q; kv3: (B, Sk, 2H) with K in [:H], V in [H:]."""
    b, sq, hdn = q3.shape
    sk, ck = kv3.shape[1], kv3.shape[2]
    dt = jnp.dtype(q3.dtype).itemsize
    est_vmem = 2 * dt * (sq * hdn + sk * ck + sq * hdn) + 4 * (sq * sk + sq * hdn)
    cost = pl.CostEstimate(
        flops=int(4 * b * n_heads * sq * sk * head_dim),
        transcendentals=int(b * n_heads * sq * sk),
        bytes_accessed=int(dt * b * (sq * hdn + sk * ck + sq * hdn)))
    kernel = functools.partial(_cross_attention_kernel, n_heads=n_heads,
                               head_dim=head_dim, hidden=hdn)
    return pl.pallas_call(
        kernel,
        out_shape=jax.ShapeDtypeStruct((b, sq, hdn), q3.dtype),
        grid=(b,),
        in_specs=[
            pl.BlockSpec((None, sq, hdn), lambda i: (i, 0, 0)),
            pl.BlockSpec((None, sk, ck), lambda i: (i, 0, 0)),
        ],
        out_specs=pl.BlockSpec((None, sq, hdn), lambda i: (i, 0, 0)),
        compiler_params=_compiler_params(1, est_vmem),
        cost_estimate=cost,
    )(q3, kv3)


def attention_self(qkv3, *, n_heads, head_dim):
    """qkv3: (B, S, 3H) with scaled-Q in [:H], K in [H:2H], V in [2H:]."""
    b, sq, c = qkv3.shape
    hdn = n_heads * head_dim
    dt = jnp.dtype(qkv3.dtype).itemsize
    est_vmem = 2 * dt * (sq * c + sq * hdn) + 4 * (sq * sq + sq * hdn)
    cost = pl.CostEstimate(
        flops=int(4 * b * n_heads * sq * sq * head_dim),
        transcendentals=int(b * n_heads * sq * sq),
        bytes_accessed=int(dt * b * (sq * c + sq * hdn)))
    kernel = functools.partial(_self_attention_kernel, n_heads=n_heads,
                               head_dim=head_dim, hidden=hdn)
    return pl.pallas_call(
        kernel,
        out_shape=jax.ShapeDtypeStruct((b, sq, hdn), qkv3.dtype),
        grid=(b,),
        in_specs=[pl.BlockSpec((None, sq, c), lambda i: (i, 0, 0))],
        out_specs=pl.BlockSpec((None, sq, hdn), lambda i: (i, 0, 0)),
        compiler_params=_compiler_params(1, est_vmem),
        cost_estimate=cost,
    )(qkv3)


# --------------------------------------------------------------------------------------
# Kernel 3: dense -> +residual -> LayerNorm (BertSelfOutput)
# --------------------------------------------------------------------------------------
def _dense_add_ln_kernel(x_ref, res_ref, w_ref, b_ref, g_ref, beta_ref, o_ref, *, eps):
    h = jnp.dot(x_ref[...], w_ref[...], preferred_element_type=jnp.float32)
    h = h + b_ref[...].astype(jnp.float32) + res_ref[...].astype(jnp.float32)
    # Two-pass LayerNorm statistics (avoids E[x^2]-E[x]^2 cancellation).
    mean = jnp.mean(h, axis=-1, keepdims=True)
    cen = h - mean
    var = jnp.mean(cen * cen, axis=-1, keepdims=True)
    out = cen * jax.lax.rsqrt(var + eps)
    out = out * g_ref[...].astype(jnp.float32) + beta_ref[...].astype(jnp.float32)
    o_ref[...] = out.astype(o_ref.dtype)


def dense_add_layernorm(x2, res2, w_t, bias, gamma, beta, *, eps, alias_residual,
                        row_tile=None):
    """LayerNorm(x2 @ w_t + bias + res2).  x2: (N, Din); res2: (N, Dout)."""
    n, din = x2.shape
    dout = res2.shape[1]
    dt = jnp.dtype(x2.dtype).itemsize
    _, budget, target, _ = _hw()
    per_row = 2 * dt * (din + 2 * dout) + 8 * dout
    resident = 2 * dt * (din * dout + 3 * dout)
    if row_tile is None:
        row_tile = _choose_row_tile(n, per_row, resident, budget, target)
    x2p, n_pad = _pad_rows(x2, row_tile)
    res2p, _ = _pad_rows(res2, row_tile)
    grid = (n_pad // row_tile,)
    est_vmem = resident + row_tile * per_row
    cost = pl.CostEstimate(
        flops=int(2 * n * din * dout + 10 * n * dout),
        transcendentals=int(n),
        bytes_accessed=int(dt * (n * din + 2 * n * dout + din * dout + 3 * dout)))
    out = pl.pallas_call(
        functools.partial(_dense_add_ln_kernel, eps=eps),
        out_shape=jax.ShapeDtypeStruct((n_pad, dout), res2.dtype),
        grid=grid,
        in_specs=[
            pl.BlockSpec((row_tile, din), lambda i: (i, 0)),
            pl.BlockSpec((row_tile, dout), lambda i: (i, 0)),
            pl.BlockSpec((din, dout), lambda i: (0, 0)),
            pl.BlockSpec((1, dout), lambda i: (0, 0)),
            pl.BlockSpec((1, dout), lambda i: (0, 0)),
            pl.BlockSpec((1, dout), lambda i: (0, 0)),
        ],
        out_specs=pl.BlockSpec((row_tile, dout), lambda i: (i, 0)),
        # Only donate the residual when it is an intermediate produced by this layer.
        input_output_aliases=({1: 0} if alias_residual else {}),
        compiler_params=_compiler_params(1, est_vmem),
        cost_estimate=cost,
    )(x2p, res2p, w_t, bias.reshape(1, dout), gamma.reshape(1, dout),
      beta.reshape(1, dout))
    return out[:n] if n_pad != n else out


# --------------------------------------------------------------------------------------
# Kernel 4: fused FFN  (up-proj -> GELU -> down-proj -> +residual -> LayerNorm)
# The (row_tile, intermediate) activation lives only in VMEM.
# --------------------------------------------------------------------------------------
def _ffn_kernel(x_ref, res_ref, wi_ref, bi_ref, wo_ref, bo_ref, g_ref, beta_ref, o_ref,
                *, eps):
    h = jnp.dot(x_ref[...], wi_ref[...], preferred_element_type=jnp.float32)
    h = h + bi_ref[...].astype(jnp.float32)
    h = _gelu_tanh(h)
    y = jnp.dot(h.astype(x_ref.dtype), wo_ref[...], preferred_element_type=jnp.float32)
    y = y + bo_ref[...].astype(jnp.float32) + res_ref[...].astype(jnp.float32)
    mean = jnp.mean(y, axis=-1, keepdims=True)
    cen = y - mean
    var = jnp.mean(cen * cen, axis=-1, keepdims=True)
    out = cen * jax.lax.rsqrt(var + eps)
    out = out * g_ref[...].astype(jnp.float32) + beta_ref[...].astype(jnp.float32)
    o_ref[...] = out.astype(o_ref.dtype)


def ffn_fused(x2, wi_t, bi, wo_t, bo, gamma, beta, *, eps, row_tile=None):
    """LayerNorm(gelu(x2 @ wi_t + bi) @ wo_t + bo + x2)."""
    n, hdn = x2.shape
    inter = wi_t.shape[1]
    dt = jnp.dtype(x2.dtype).itemsize
    _, budget, target, _ = _hw()
    per_row = 2 * dt * (3 * hdn) + 4 * (inter + hdn)
    resident = 2 * dt * (hdn * inter + inter * hdn + inter + 3 * hdn)
    if row_tile is None:
        row_tile = _choose_row_tile(n, per_row, resident, budget, target)
    x2p, n_pad = _pad_rows(x2, row_tile)
    grid = (n_pad // row_tile,)
    est_vmem = resident + row_tile * per_row
    cost = pl.CostEstimate(
        flops=int(2 * n * hdn * inter + 2 * n * inter * hdn + 10 * n * hdn),
        transcendentals=int(n * inter + n),
        bytes_accessed=int(dt * (2 * n * hdn + hdn * inter + inter * hdn
                                 + inter + 3 * hdn + n * hdn)))
    out = pl.pallas_call(
        functools.partial(_ffn_kernel, eps=eps),
        out_shape=jax.ShapeDtypeStruct((n_pad, hdn), x2.dtype),
        grid=grid,
        in_specs=[
            pl.BlockSpec((row_tile, hdn), lambda i: (i, 0)),
            pl.BlockSpec((row_tile, hdn), lambda i: (i, 0)),
            pl.BlockSpec((hdn, inter), lambda i: (0, 0)),
            pl.BlockSpec((1, inter), lambda i: (0, 0)),
            pl.BlockSpec((inter, hdn), lambda i: (0, 0)),
            pl.BlockSpec((1, hdn), lambda i: (0, 0)),
            pl.BlockSpec((1, hdn), lambda i: (0, 0)),
            pl.BlockSpec((1, hdn), lambda i: (0, 0)),
        ],
        out_specs=pl.BlockSpec((row_tile, hdn), lambda i: (i, 0)),
        input_output_aliases={1: 0},     # residual is an intermediate of this layer
        compiler_params=_compiler_params(1, est_vmem),
        cost_estimate=cost,
    )(x2p, x2p, wi_t, bi.reshape(1, inter), wo_t, bo.reshape(1, hdn),
      gamma.reshape(1, hdn), beta.reshape(1, hdn))
    return out[:n] if n_pad != n else out


# --------------------------------------------------------------------------------------
# FusionLayer orchestration
# --------------------------------------------------------------------------------------
def fusion_layer_apply(params, hidden_states, encoder_hidden_states, config):
    """FusionLayer.forward (eval mode): cross-attention -> self-attention -> FFN.
    Returns layer_output only, matching `outputs = outputs[0]` in the torch module."""
    b, s, h = hidden_states.shape
    s_enc = encoder_hidden_states.shape[1]
    e = encoder_hidden_states.shape[2]
    nh = config["num_attention_heads"]
    hd = h // nh
    eps = config["layer_norm_eps"]

    x2 = hidden_states.reshape(b * s, h)
    enc2 = encoder_hidden_states.reshape(b * s_enc, e)

    # ---- cross-attention block (Q from hidden, K/V fused from encoder) ----
    q2 = linear(x2, params["cross_wq_s"], params["cross_bq_s"])          # (B*S, H)
    kv2 = linear(enc2, params["cross_wkv"], params["cross_bkv"])         # (B*Se, 2H)
    ctx1 = attention_cross(q2.reshape(b, s, h), kv2.reshape(b, s_enc, 2 * h),
                           n_heads=nh, head_dim=hd)
    attn1 = dense_add_layernorm(ctx1.reshape(b * s, h), x2,
                                params["cross_wo"], params["cross_bo"],
                                params["cross_ln_g"], params["cross_ln_b"],
                                eps=eps, alias_residual=False)           # residual = input

    # ---- self-attention block (fused QKV projection) ----
    qkv2 = linear(attn1, params["self_wqkv"], params["self_bqkv"])       # (B*S, 3H)
    ctx2 = attention_self(qkv2.reshape(b, s, 3 * h), n_heads=nh, head_dim=hd)
    attn2 = dense_add_layernorm(ctx2.reshape(b * s, h), attn1,
                                params["self_wo"], params["self_bo"],
                                params["self_ln_g"], params["self_ln_b"],
                                eps=eps, alias_residual=True)

    # ---- fused FFN ----
    out = ffn_fused(attn2, params["ffn_wi"], params["ffn_bi"],
                    params["ffn_wo"], params["ffn_bo"],
                    params["ffn_ln_g"], params["ffn_ln_b"], eps=eps)
    return out.reshape(b, s, h)


# --------------------------------------------------------------------------------------
# Parameters: raw "torch-style" matrices, then model-load-time fusion / scale folding
# --------------------------------------------------------------------------------------
def _init_params(key, hidden, encoder_width, intermediate, dtype=jnp.float32):
    def dense(k, din, dout):
        kw, kb = jax.random.split(k)
        w = (jax.random.normal(kw, (din, dout), jnp.float32) / math.sqrt(din)).astype(dtype)
        b = (jax.random.normal(kb, (dout,), jnp.float32) * 0.02).astype(dtype)
        return w, b

    keys = jax.random.split(key, 10)
    p = {}
    p["cross_wq"], p["cross_bq"] = dense(keys[0], hidden, hidden)
    p["cross_wk"], p["cross_bk"] = dense(keys[1], encoder_width, hidden)
    p["cross_wv"], p["cross_bv"] = dense(keys[2], encoder_width, hidden)
    p["cross_wo"], p["cross_bo"] = dense(keys[3], hidden, hidden)
    p["cross_ln_g"], p["cross_ln_b"] = jnp.ones((hidden,), dtype), jnp.zeros((hidden,), dtype)
    p["self_wq"], p["self_bq"] = dense(keys[4], hidden, hidden)
    p["self_wk"], p["self_bk"] = dense(keys[5], hidden, hidden)
    p["self_wv"], p["self_bv"] = dense(keys[6], hidden, hidden)
    p["self_wo"], p["self_bo"] = dense(keys[7], hidden, hidden)
    p["self_ln_g"], p["self_ln_b"] = jnp.ones((hidden,), dtype), jnp.zeros((hidden,), dtype)
    p["ffn_wi"], p["ffn_bi"] = dense(keys[8], hidden, intermediate)
    p["ffn_wo"], p["ffn_bo"] = dense(keys[9], intermediate, hidden)
    p["ffn_ln_g"], p["ffn_ln_b"] = jnp.ones((hidden,), dtype), jnp.zeros((hidden,), dtype)
    return p


def prepare_fused_params(p, n_heads):
    """Model-load-time prep: weights are (in, out); fuse QKV / KV; fold 1/sqrt(d) into Wq."""
    hidden = p["cross_wq"].shape[1]
    scale = 1.0 / math.sqrt(hidden // n_heads)
    fp = dict(p)
    fp["cross_wq_s"] = p["cross_wq"] * scale
    fp["cross_bq_s"] = p["cross_bq"] * scale
    fp["cross_wkv"] = jnp.concatenate([p["cross_wk"], p["cross_wv"]], axis=1)
    fp["cross_bkv"] = jnp.concatenate([p["cross_bk"], p["cross_bv"]], axis=0)
    fp["self_wqkv"] = jnp.concatenate(
        [p["self_wq"] * scale, p["self_wk"], p["self_wv"]], axis=1)
    fp["self_bqkv"] = jnp.concatenate(
        [p["self_bq"] * scale, p["self_bk"], p["self_bv"]], axis=0)
    return fp


# --------------------------------------------------------------------------------------
# Pure-JAX reference (unfused weights, standard attention) for validation
# --------------------------------------------------------------------------------------
def _ref_gelu(x):
    c = math.sqrt(2.0 / math.pi)
    return 0.5 * x * (1.0 + jnp.tanh(c * (x + 0.044715 * x ** 3)))


def _ref_ln(x, g, b, eps):
    m = jnp.mean(x, axis=-1, keepdims=True)
    v = jnp.mean((x - m) ** 2, axis=-1, keepdims=True)
    return (x - m) * jax.lax.rsqrt(v + eps) * g + b


def _ref_mha(xq, kv, p, prefix, n_heads, eps):
    hp = jax.lax.Precision.HIGHEST
    b, s, h = xq.shape
    sk = kv.shape[1]
    hd = h // n_heads
    q = jnp.einsum("bse,eh->bsh", xq, p[prefix + "wq"], precision=hp) + p[prefix + "bq"]
    k = jnp.einsum("bse,eh->bsh", kv, p[prefix + "wk"], precision=hp) + p[prefix + "bk"]
    v = jnp.einsum("bse,eh->bsh", kv, p[prefix + "wv"], precision=hp) + p[prefix + "bv"]
    split = lambda t, seq: jnp.transpose(t.reshape(b, seq, n_heads, hd), (0, 2, 1, 3))
    q, k, v = split(q, s), split(k, sk), split(v, sk)
    scores = jnp.einsum("bhqd,bhkd->bhqk", q, k, precision=hp) / math.sqrt(hd)
    probs = jax.nn.softmax(scores, axis=-1)
    ctx = jnp.einsum("bhqk,bhkd->bhqd", probs, v, precision=hp)
    ctx = jnp.transpose(ctx, (0, 2, 1, 3)).reshape(b, s, h)
    out = jnp.einsum("bsh,ho->bso", ctx, p[prefix + "wo"], precision=hp) + p[prefix + "bo"]
    return _ref_ln(out + xq, p[prefix + "ln_g"], p[prefix + "ln_b"], eps)


def _ref_fusion_layer(p, hidden_states, encoder_hidden_states, n_heads, eps):
    hp = jax.lax.Precision.HIGHEST
    x = _ref_mha(hidden_states, encoder_hidden_states, p, "cross_", n_heads, eps)
    x = _ref_mha(x, x, p, "self_", n_heads, eps)
    inter = _ref_gelu(jnp.einsum("bsh,hi->bsi", x, p["ffn_wi"], precision=hp) + p["ffn_bi"])
    out = jnp.einsum("bsi,ih->bsh", inter, p["ffn_wo"], precision=hp) + p["ffn_bo"]
    return _ref_ln(out + x, p["ffn_ln_g"], p["ffn_ln_b"], eps)


if __name__ == "__main__":
    key = jax.random.PRNGKey(0)
    B, S, S_ENC = 2, 8, 16
    HIDDEN, N_HEADS, INTERMEDIATE = 32, 4, 64
    EPS = 1e-12
    config = {"num_attention_heads": N_HEADS, "layer_norm_eps": EPS}

    k_h, k_e, k_p = jax.random.split(key, 3)
    hidden_states = jax.random.normal(k_h, (B, S, HIDDEN), dtype=jnp.float32)
    encoder_hidden_states = jax.random.normal(k_e, (B, S_ENC, HIDDEN), dtype=jnp.float32)
    raw_params = _init_params(k_p, HIDDEN, HIDDEN, INTERMEDIATE)
    fused_params = prepare_fused_params(raw_params, N_HEADS)

    apply_fn = jax.jit(lambda fp, hs, ehs: fusion_layer_apply(fp, hs, ehs, config))
    out = apply_fn(fused_params, hidden_states, encoder_hidden_states)
    out = jax.block_until_ready(out)

    ref = _ref_fusion_layer(raw_params, hidden_states, encoder_hidden_states, N_HEADS, EPS)
    ref = jax.block_until_ready(ref)

    assert out.shape == (B, S, HIDDEN)
    max_diff = float(jnp.max(jnp.abs(out - ref)))
    assert jnp.allclose(out, ref, atol=2e-4, rtol=2e-4), f"mismatch vs reference: {max_diff}"

    print("KERNEL_OK")
</pallas_src>

<mosaic_0001>
module attributes {stable_mosaic.version = 11 : i64} {
  func.func @_dense_add_ln_kernel(%arg0: i32, %arg1: memref<8x32xf32, #tpu.memory_space<vmem>>, %arg2: memref<8x32xf32, #tpu.memory_space<vmem>>, %arg3: memref<32x32xf32, #tpu.memory_space<vmem>>, %arg4: memref<1x32xf32, #tpu.memory_space<vmem>>, %arg5: memref<1x32xf32, #tpu.memory_space<vmem>>, %arg6: memref<1x32xf32, #tpu.memory_space<vmem>>, %arg7: memref<8x32xf32, #tpu.memory_space<vmem>>) attributes {dimension_semantics = [#tpu.dimension_semantics<parallel>], iteration_bounds = array<i64: 2>, scalar_prefetch = 0 : i64, scratch_operands = 0 : i64, tpu.core_type = #tpu.core_type<tc>, window_params = [{transform_indices = @transform_0, window_bounds = array<i64: 8, 32>}, {transform_indices = @transform_1, window_bounds = array<i64: 8, 32>}, {pipeline_mode = #tpu.pipeline_mode<synchronous>, transform_indices = @transform_2, window_bounds = array<i64: 32, 32>}, {pipeline_mode = #tpu.pipeline_mode<synchronous>, transform_indices = @transform_3, window_bounds = array<i64: 1, 32>}, {pipeline_mode = #tpu.pipeline_mode<synchronous>, transform_indices = @transform_4, window_bounds = array<i64: 1, 32>}, {pipeline_mode = #tpu.pipeline_mode<synchronous>, transform_indices = @transform_5, window_bounds = array<i64: 1, 32>}, {transform_indices = @transform_6, window_bounds = array<i64: 8, 32>}]} {
    %c0 = arith.constant 0 : index
    %c0_0 = arith.constant 0 : index
    %0 = vector.load %arg1[%c0, %c0_0] : memref<8x32xf32, #tpu.memory_space<vmem>>, vector<8x32xf32>
    %c0_1 = arith.constant 0 : index
    %c0_2 = arith.constant 0 : index
    %1 = vector.load %arg3[%c0_1, %c0_2] : memref<32x32xf32, #tpu.memory_space<vmem>>, vector<32x32xf32>
    %cst = arith.constant dense<0.000000e+00> : vector<8x32xf32>
    %2 = tpu.matmul %0, %1, %cst {dimension_numbers = #tpu.dot_dimension_numbers<[1], [0], [0], [1], [0, 0, 1, 1], [], []>} : vector<8x32xf32>, vector<32x32xf32>, vector<8x32xf32> -> vector<8x32xf32>
    %c0_3 = arith.constant 0 : index
    %c0_4 = arith.constant 0 : index
    %3 = vector.load %arg4[%c0_3, %c0_4] : memref<1x32xf32, #tpu.memory_space<vmem>>, vector<1x32xf32>
    %4 = vector.broadcast %3 : vector<1x32xf32> to vector<8x32xf32>
    %5 = arith.addf %2, %4 : vector<8x32xf32>
    %c0_5 = arith.constant 0 : index
    %c0_6 = arith.constant 0 : index
    %6 = vector.load %arg2[%c0_5, %c0_6] : memref<8x32xf32, #tpu.memory_space<vmem>>, vector<8x32xf32>
    %7 = arith.addf %5, %6 : vector<8x32xf32>
    %cst_7 = arith.constant dense<0.000000e+00> : vector<8xf32>
    %8 = vector.multi_reduction <add>, %7, %cst_7 [1] : vector<8x32xf32> to vector<8xf32>
    %9 = vector.shape_cast %8 : vector<8xf32> to vector<8x1xf32>
    %cst_8 = arith.constant 3.200000e+01 : f32
    %10 = vector.broadcast %cst_8 : f32 to vector<8x1xf32>
    %11 = arith.divf %9, %10 : vector<8x1xf32>
    %12 = vector.broadcast %11 : vector<8x1xf32> to vector<8x32xf32>
    %13 = arith.subf %7, %12 : vector<8x32xf32>
    %14 = arith.mulf %13, %13 : vector<8x32xf32>
    %cst_9 = arith.constant dense<0.000000e+00> : vector<8xf32>
    %15 = vector.multi_reduction <add>, %14, %cst_9 [1] : vector<8x32xf32> to vector<8xf32>
    %16 = vector.shape_cast %15 : vector<8xf32> to vector<8x1xf32>
    %cst_10 = arith.constant 3.200000e+01 : f32
    %17 = vector.broadcast %cst_10 : f32 to vector<8x1xf32>
    %18 = arith.divf %16, %17 : vector<8x1xf32>
    %cst_11 = arith.constant 9.99999996E-13 : f32
    %19 = vector.broadcast %cst_11 : f32 to vector<8x1xf32>
    %20 = arith.addf %18, %19 : vector<8x1xf32>
    %21 = math.rsqrt %20 : vector<8x1xf32>
    %22 = vector.broadcast %21 : vector<8x1xf32> to vector<8x32xf32>
    %23 = arith.mulf %13, %22 : vector<8x32xf32>
    %c0_12 = arith.constant 0 : index
    %c0_13 = arith.constant 0 : index
    %24 = vector.load %arg5[%c0_12, %c0_13] : memref<1x32xf32, #tpu.memory_space<vmem>>, vector<1x32xf32>
    %25 = vector.broadcast %24 : vector<1x32xf32> to vector<8x32xf32>
    %26 = arith.mulf %23, %25 : vector<8x32xf32>
    %c0_14 = arith.constant 0 : index
    %c0_15 = arith.constant 0 : index
    %27 = vector.load %arg6[%c0_14, %c0_15] : memref<1x32xf32, #tpu.memory_space<vmem>>, vector<1x32xf32>
    %28 = vector.broadcast %27 : vector<1x32xf32> to vector<8x32xf32>
    %29 = arith.addf %26, %28 : vector<8x32xf32>
    %c0_16 = arith.constant 0 : index
    %c0_17 = arith.constant 0 : index
    %30 = vector.load %arg7[%c0_16, %c0_17] : memref<8x32xf32, #tpu.memory_space<vmem>>, vector<8x32xf32>
    tpu.vector_store %arg7[%c0_16, %c0_17], %29 {strides = array<i32>} : memref<8x32xf32, #tpu.memory_space<vmem>>, vector<8x32xf32>,
    return
  }
  func.func @transform_0(%arg0: i32) -> (i32, i32) {
    %c0_i32 = arith.constant 0 : i32
    %c0_i32_0 = arith.constant 0 : i32
    return %arg0, %c0_i32 : i32, i32
  }
  func.func @transform_1(%arg0: i32) -> (i32, i32) {
    %c0_i32 = arith.constant 0 : i32
    %c0_i32_0 = arith.constant 0 : i32
    return %arg0, %c0_i32 : i32, i32
  }
  func.func @transform_2(%arg0: i32) -> (i32, i32) {
    %c0_i32 = arith.constant 0 : i32
    %c0_i32_0 = arith.constant 0 : i32
    %c0_i32_1 = arith.constant 0 : i32
    return %c0_i32, %c0_i32_0 : i32, i32
  }
  func.func @transform_3(%arg0: i32) -> (i32, i32) {
    %c0_i32 = arith.constant 0 : i32
    %c0_i32_0 = arith.constant 0 : i32
    %c0_i32_1 = arith.constant 0 : i32
    return %c0_i32, %c0_i32_0 : i32, i32
  }
  func.func @transform_4(%arg0: i32) -> (i32, i32) {
    %c0_i32 = arith.constant 0 : i32
    %c0_i32_0 = arith.constant 0 : i32
    %c0_i32_1 = arith.constant 0 : i32
    return %c0_i32, %c0_i32_0 : i32, i32
  }
  func.func @transform_5(%arg0: i32) -> (i32, i32) {
    %c0_i32 = arith.constant 0 : i32
    %c0_i32_0 = arith.constant 0 : i32
    %c0_i32_1 = arith.constant 0 : i32
    return %c0_i32, %c0_i32_0 : i32, i32
  }
  func.func @transform_6(%arg0: i32) -> (i32, i32) {
    %c0_i32 = arith.constant 0 : i32
    %c0_i32_0 = arith.constant 0 : i32
    return %arg0, %c0_i32 : i32, i32
  }
}

module attributes {stable_mosaic.version = 11 : i64} {
  func.func @_linear_kernel(%arg0: i32, %arg1: memref<16x32xf32, #tpu.memory_space<vmem>>, %arg2: memref<32x64xf32, #tpu.memory_space<vmem>>, %arg3: memref<1x64xf32, #tpu.memory_space<vmem>>, %arg4: memref<16x64xf32, #tpu.memory_space<vmem>>) attributes {dimension_semantics = [#tpu.dimension_semantics<parallel>], iteration_bounds = array<i64: 2>, scalar_prefetch = 0 : i64, scratch_operands = 0 : i64, tpu.core_type = #tpu.core_type<tc>, window_params = [{transform_indices = @transform_0, window_bounds = array<i64: 16, 32>}, {pipeline_mode = #tpu.pipeline_mode<synchronous>, transform_indices = @transform_1, window_bounds = array<i64: 32, 64>}, {pipeline_mode = #tpu.pipeline_mode<synchronous>, transform_indices = @transform_2, window_bounds = array<i64: 1, 64>}, {transform_indices = @transform_3, window_bounds = array<i64: 16, 64>}]} {
    %c0 = arith.constant 0 : index
    %c0_0 = arith.constant 0 : index
    %0 = vector.load %arg1[%c0, %c0_0] : memref<16x32xf32, #tpu.memory_space<vmem>>, vector<16x32xf32>
    %c0_1 = arith.constant 0 : index
    %c0_2 = arith.constant 0 : index
    %1 = vector.load %arg2[%c0_1, %c0_2] : memref<32x64xf32, #tpu.memory_space<vmem>>, vector<32x64xf32>
    %cst = arith.constant dense<0.000000e+00> : vector<16x64xf32>
    %2 = tpu.matmul %0, %1, %cst {dimension_numbers = #tpu.dot_dimension_numbers<[1], [0], [0], [1], [0, 0, 1, 1], [], []>} : vector<16x32xf32>, vector<32x64xf32>, vector<16x64xf32> -> vector<16x64xf32>
    %c0_3 = arith.constant 0 : index
    %c0_4 = arith.constant 0 : index
    %3 = vector.load %arg3[%c0_3, %c0_4] : memref<1x64xf32, #tpu.memory_space<vmem>>, vector<1x64xf32>
    %4 = vector.broadcast %3 : vector<1x64xf32> to vector<16x64xf32>
    %5 = arith.addf %2, %4 : vector<16x64xf32>
    %c0_5 = arith.constant 0 : index
    %c0_6 = arith.constant 0 : index
    %6 = vector.load %arg4[%c0_5, %c0_6] : memref<16x64xf32, #tpu.memory_space<vmem>>, vector<16x64xf32>
    tpu.vector_store %arg4[%c0_5, %c0_6], %5 {strides = array<i32>} : memref<16x64xf32, #tpu.memory_space<vmem>>, vector<16x64xf32>,
    return
  }
  func.func @transform_0(%arg0: i32) -> (i32, i32) {
    %c0_i32 = arith.constant 0 : i32
    %c0_i32_0 = arith.constant 0 : i32
    return %arg0, %c0_i32 : i32, i32
  }
  func.func @transform_1(%arg0: i32) -> (i32, i32) {
    %c0_i32 = arith.constant 0 : i32
    %c0_i32_0 = arith.constant 0 : i32
    %c0_i32_1 = arith.constant 0 : i32
    return %c0_i32, %c0_i32_0 : i32, i32
  }
  func.func @transform_2(%arg0: i32) -> (i32, i32) {
    %c0_i32 = arith.constant 0 : i32
    %c0_i32_0 = arith.constant 0 : i32
    %c0_i32_1 = arith.constant 0 : i32
    return %c0_i32, %c0_i32_0 : i32, i32
  }
  func.func @transform_3(%arg0: i32) -> (i32, i32) {
    %c0_i32 = arith.constant 0 : i32
    %c0_i32_0 = arith.constant 0 : i32
    return %arg0, %c0_i32 : i32, i32
  }
}

module attributes {stable_mosaic.version = 11 : i64} {
  func.func @_cross_attention_kernel(%arg0: i32, %arg1: memref<1x8x32xf32, #tpu.memory_space<vmem>>, %arg2: memref<1x16x64xf32, #tpu.memory_space<vmem>>, %arg3: memref<1x8x32xf32, #tpu.memory_space<vmem>>) attributes {dimension_semantics = [#tpu.dimension_semantics<parallel>], iteration_bounds = array<i64: 2>, scalar_prefetch = 0 : i64, scratch_operands = 0 : i64, tpu.core_type = #tpu.core_type<tc>, window_params = [{transform_indices = @transform_0, window_bounds = array<i64: 1, 8, 32>}, {transform_indices = @transform_1, window_bounds = array<i64: 1, 16, 64>}, {transform_indices = @transform_2, window_bounds = array<i64: 1, 8, 32>}]} {
    %c0 = arith.constant 0 : index
    %c0_0 = arith.constant 0 : index
    %c0_1 = arith.constant 0 : index
    %0 = vector.load %arg1[%c0, %c0_0, %c0_1] : memref<1x8x32xf32, #tpu.memory_space<vmem>>, vector<1x8x8xf32>
    %1 = vector.shape_cast %0 : vector<1x8x8xf32> to vector<8x8xf32>
    %c0_2 = arith.constant 0 : index
    %c0_3 = arith.constant 0 : index
    %c0_4 = arith.constant 0 : index
    %2 = vector.load %arg2[%c0_2, %c0_3, %c0_4] : memref<1x16x64xf32, #tpu.memory_space<vmem>>, vector<1x16x8xf32>
    %3 = vector.shape_cast %2 : vector<1x16x8xf32> to vector<16x8xf32>
    %c0_5 = arith.constant 0 : index
    %c0_6 = arith.constant 0 : index
    %c32 = arith.constant 32 : index
    %4 = vector.load %arg2[%c0_5, %c0_6, %c32] : memref<1x16x64xf32, #tpu.memory_space<vmem>>, vector<1x16x8xf32>
    %5 = vector.shape_cast %4 : vector<1x16x8xf32> to vector<16x8xf32>
    %6 = tpu.transpose %3, [1, 0] : vector<16x8xf32> -> vector<8x16xf32>
    %cst = arith.constant dense<0.000000e+00> : vector<8x16xf32>
    %7 = tpu.matmul %1, %6, %cst {dimension_numbers = #tpu.dot_dimension_numbers<[1], [0], [0], [1], [0, 0, 1, 1], [], []>} : vector<8x8xf32>, vector<8x16xf32>, vector<8x16xf32> -> vector<8x16xf32>
    %cst_7 = arith.constant dense<0xFF800000> : vector<8xf32>
    %8 = vector.multi_reduction <maximumf>, %7, %cst_7 [1] : vector<8x16xf32> to vector<8xf32>
    %9 = vector.shape_cast %8 : vector<8xf32> to vector<8x1xf32>
    %10 = vector.broadcast %9 : vector<8x1xf32> to vector<8x16xf32>
    %11 = arith.subf %7, %10 : vector<8x16xf32>
    %12 = math.exp %11 : vector<8x16xf32>
    %cst_8 = arith.constant dense<0.000000e+00> : vector<8xf32>
    %13 = vector.multi_reduction <add>, %12, %cst_8 [1] : vector<8x16xf32> to vector<8xf32>
    %14 = vector.shape_cast %13 : vector<8xf32> to vector<8x1xf32>
    %cst_9 = arith.constant dense<0.000000e+00> : vector<8x8xf32>
    %15 = tpu.matmul %12, %5, %cst_9 {dimension_numbers = #tpu.dot_dimension_numbers<[1], [0], [0], [1], [0, 0, 1, 1], [], []>} : vector<8x16xf32>, vector<16x8xf32>, vector<8x8xf32> -> vector<8x8xf32>
    %16 = tpu.reciprocal %14 : vector<8x1xf32> -> vector<8x1xf32>
    %17 = vector.broadcast %16 : vector<8x1xf32> to vector<8x8xf32>
    %18 = arith.mulf %15, %17 : vector<8x8xf32>
    %c0_10 = arith.constant 0 : index
    %c0_11 = arith.constant 0 : index
    %c8 = arith.constant 8 : index
    %19 = vector.load %arg1[%c0_10, %c0_11, %c8] : memref<1x8x32xf32, #tpu.memory_space<vmem>>, vector<1x8x8xf32>
    %20 = vector.shape_cast %19 : vector<1x8x8xf32> to vector<8x8xf32>
    %c0_12 = arith.constant 0 : index
    %c0_13 = arith.constant 0 : index
    %c8_14 = arith.constant 8 : index
    %21 = vector.load %arg2[%c0_12, %c0_13, %c8_14] : memref<1x16x64xf32, #tpu.memory_space<vmem>>, vector<1x16x8xf32>
    %22 = vector.shape_cast %21 : vector<1x16x8xf32> to vector<16x8xf32>
    %c0_15 = arith.constant 0 : index
    %c0_16 = arith.constant 0 : index
    %c40 = arith.constant 40 : index
    %23 = vector.load %arg2[%c0_15, %c0_16, %c40] : memref<1x16x64xf32, #tpu.memory_space<vmem>>, vector<1x16x8xf32>
    %24 = vector.shape_cast %23 : vector<1x16x8xf32> to vector<16x8xf32>
    %25 = tpu.transpose %22, [1, 0] : vector<16x8xf32> -> vector<8x16xf32>
    %cst_17 = arith.constant dense<0.000000e+00> : vector<8x16xf32>
    %26 = tpu.matmul %20, %25, %cst_17 {dimension_numbers = #tpu.dot_dimension_numbers<[1], [0], [0], [1], [0, 0, 1, 1], [], []>} : vector<8x8xf32>, vector<8x16xf32>, vector<8x16xf32> -> vector<8x16xf32>
    %cst_18 = arith.constant dense<0xFF800000> : vector<8xf32>
    %27 = vector.multi_reduction <maximumf>, %26, %cst_18 [1] : vector<8x16xf32> to vector<8xf32>
    %28 = vector.shape_cast %27 : vector<8xf32> to vector<8x1xf32>
    %29 = vector.broadcast %28 : vector<8x1xf32> to vector<8x16xf32>
    %30 = arith.subf %26, %29 : vector<8x16xf32>
    %31 = math.exp %30 : vector<8x16xf32>
    %cst_19 = arith.constant dense<0.000000e+00> : vector<8xf32>
    %32 = vector.multi_reduction <add>, %31, %cst_19 [1] : vector<8x16xf32> to vector<8xf32>
    %33 = vector.shape_cast %32 : vector<8xf32> to vector<8x1xf32>
    %cst_20 = arith.constant dense<0.000000e+00> : vector<8x8xf32>
    %34 = tpu.matmul %31, %24, %cst_20 {dimension_numbers = #tpu.dot_dimension_numbers<[1], [0], [0], [1], [0, 0, 1, 1], [], []>} : vector<8x16xf32>, vector<16x8xf32>, vector<8x8xf32> -> vector<8x8xf32>
    %35 = tpu.reciprocal %33 : vector<8x1xf32> -> vector<8x1xf32>
    %36 = vector.broadcast %35 : vector<8x1xf32> to vector<8x8xf32>
    %37 = arith.mulf %34, %36 : vector<8x8xf32>
    %c0_21 = arith.constant 0 : index
    %c0_22 = arith.constant 0 : index
    %c16 = arith.constant 16 : index
    %38 = vector.load %arg1[%c0_21, %c0_22, %c16] : memref<1x8x32xf32, #tpu.memory_space<vmem>>, vector<1x8x8xf32>
    %39 = vector.shape_cast %38 : vector<1x8x8xf32> to vector<8x8xf32>
    %c0_23 = arith.constant 0 : index
    %c0_24 = arith.constant 0 : index
    %c16_25 = arith.constant 16 : index
    %40 = vector.load %arg2[%c0_23, %c0_24, %c16_25] : memref<1x16x64xf32, #tpu.memory_space<vmem>>, vector<1x16x8xf32>
    %41 = vector.shape_cast %40 : vector<1x16x8xf32> to vector<16x8xf32>
    %c0_26 = arith.constant 0 : index
    %c0_27 = arith.constant 0 : index
    %c48 = arith.constant 48 : index
    %42 = vector.load %arg2[%c0_26, %c0_27, %c48] : memref<1x16x64xf32, #tpu.memory_space<vmem>>, vector<1x16x8xf32>
    %43 = vector.shape_cast %42 : vector<1x16x8xf32> to vector<16x8xf32>
    %44 = tpu.transpose %41, [1, 0] : vector<16x8xf32> -> vector<8x16xf32>
    %cst_28 = arith.constant dense<0.000000e+00> : vector<8x16xf32>
    %45 = tpu.matmul %39, %44, %cst_28 {dimension_numbers = #tpu.dot_dimension_numbers<[1], [0], [0], [1], [0, 0, 1, 1], [], []>} : vector<8x8xf32>, vector<8x16xf32>, vector<8x16xf32> -> vector<8x16xf32>
    %cst_29 = arith.constant dense<0xFF800000> : vector<8xf32>
    %46 = vector.multi_reduction <maximumf>, %45, %cst_29 [1] : vector<8x16xf32> to vector<8xf32>
    %47 = vector.shape_cast %46 : vector<8xf32> to vector<8x1xf32>
    %48 = vector.broadcast %47 : vector<8x1xf32> to vector<8x16xf32>
    %49 = arith.subf %45, %48 : vector<8x16xf32>
    %50 = math.exp %49 : vector<8x16xf32>
    %cst_30 = arith.constant dense<0.000000e+00> : vector<8xf32>
    %51 = vector.multi_reduction <add>, %50, %cst_30 [1] : vector<8x16xf32> to vector<8xf32>
    %52 = vector.shape_cast %51 : vector<8xf32> to vector<8x1xf32>
    %cst_31 = arith.constant dense<0.000000e+00> : vector<8x8xf32>
    %53 = tpu.matmul %50, %43, %cst_31 {dimension_numbers = #tpu.dot_dimension_numbers<[1], [0], [0], [1], [0, 0, 1, 1], [], []>} : vector<8x16xf32>, vector<16x8xf32>, vector<8x8xf32> -> vector<8x8xf32>
    %54 = tpu.reciprocal %52 : vector<8x1xf32> -> vector<8x1xf32>
    %55 = vector.broadcast %54 : vector<8x1xf32> to vector<8x8xf32>
    %56 = arith.mulf %53, %55 : vector<8x8xf32>
    %c0_32 = arith.constant 0 : index
    %c0_33 = arith.constant 0 : index
    %c24 = arith.constant 24 : index
    %57 = vector.load %arg1[%c0_32, %c0_33, %c24] : memref<1x8x32xf32, #tpu.memory_space<vmem>>, vector<1x8x8xf32>
    %58 = vector.shape_cast %57 : vector<1x8x8xf32> to vector<8x8xf32>
    %c0_34 = arith.constant 0 : index
    %c0_35 = arith.constant 0 : index
    %c24_36 = arith.constant 24 : index
    %59 = vector.load %arg2[%c0_34, %c0_35, %c24_36] : memref<1x16x64xf32, #tpu.memory_space<vmem>>, vector<1x16x8xf32>
    %60 = vector.shape_cast %59 : vector<1x16x8xf32> to vector<16x8xf32>
    %c0_37 = arith.constant 0 : index
    %c0_38 = arith.constant 0 : index
    %c56 = arith.constant 56 : index
    %61 = vector.load %arg2[%c0_37, %c0_38, %c56] : memref<1x16x64xf32, #tpu.memory_space<vmem>>, vector<1x16x8xf32>
    %62 = vector.shape_cast %61 : vector<1x16x8xf32> to vector<16x8xf32>
    %63 = tpu.transpose %60, [1, 0] : vector<16x8xf32> -> vector<8x16xf32>
    %cst_39 = arith.constant dense<0.000000e+00> : vector<8x16xf32>
    %64 = tpu.matmul %58, %63, %cst_39 {dimension_numbers = #tpu.dot_dimension_numbers<[1], [0], [0], [1], [0, 0, 1, 1], [], []>} : vector<8x8xf32>, vector<8x16xf32>, vector<8x16xf32> -> vector<8x16xf32>
    %cst_40 = arith.constant dense<0xFF800000> : vector<8xf32>
    %65 = vector.multi_reduction <maximumf>, %64, %cst_40 [1] : vector<8x16xf32> to vector<8xf32>
    %66 = vector.shape_cast %65 : vector<8xf32> to vector<8x1xf32>
    %67 = vector.broadcast %66 : vector<8x1xf32> to vector<8x16xf32>
    %68 = arith.subf %64, %67 : vector<8x16xf32>
    %69 = math.exp %68 : vector<8x16xf32>
    %cst_41 = arith.constant dense<0.000000e+00> : vector<8xf32>
    %70 = vector.multi_reduction <add>, %69, %cst_41 [1] : vector<8x16xf32> to vector<8xf32>
    %71 = vector.shape_cast %70 : vector<8xf32> to vector<8x1xf32>
    %cst_42 = arith.constant dense<0.000000e+00> : vector<8x8xf32>
    %72 = tpu.matmul %69, %62, %cst_42 {dimension_numbers = #tpu.dot_dimension_numbers<[1], [0], [0], [1], [0, 0, 1, 1], [], []>} : vector<8x16xf32>, vector<16x8xf32>, vector<8x8xf32> -> vector<8x8xf32>
    %73 = tpu.reciprocal %71 : vector<8x1xf32> -> vector<8x1xf32>
    %74 = vector.broadcast %73 : vector<8x1xf32> to vector<8x8xf32>
    %75 = arith.mulf %72, %74 : vector<8x8xf32>
    %76 = tpu.concatenate %18, %37, %56, %75 in 1 : vector<8x8xf32>, vector<8x8xf32>, vector<8x8xf32>, vector<8x8xf32> -> vector<8x32xf32>
    %c0_43 = arith.constant 0 : index
    %c0_44 = arith.constant 0 : index
    %c0_45 = arith.constant 0 : index
    %77 = vector.load %arg3[%c0_43, %c0_44, %c0_45] : memref<1x8x32xf32, #tpu.memory_space<vmem>>, vector<1x8x32xf32>
    %78 = vector.shape_cast %77 : vector<1x8x32xf32> to vector<8x32xf32>
    %79 = vector.shape_cast %76 : vector<8x32xf32> to vector<1x8x32xf32>
    tpu.vector_store %arg3[%c0_43, %c0_44, %c0_45], %79 {strides = array<i32>} : memref<1x8x32xf32, #tpu.memory_space<vmem>>, vector<1x8x32xf32>,
    return
  }
  func.func @transform_0(%arg0: i32) -> (i32, i32, i32) {
    %c0_i32 = arith.constant 0 : i32
    %c0_i32_0 = arith.constant 0 : i32
    %c0_i32_1 = arith.constant 0 : i32
    return %arg0, %c0_i32, %c0_i32_0 : i32, i32, i32
  }
  func.func @transform_1(%arg0: i32) -> (i32, i32, i32) {
    %c0_i32 = arith.constant 0 : i32
    %c0_i32_0 = arith.constant 0 : i32
    %c0_i32_1 = arith.constant 0 : i32
    return %arg0, %c0_i32, %c0_i32_0 : i32, i32, i32
  }
  func.func @transform_2(%arg0: i32) -> (i32, i32, i32) {
    %c0_i32 = arith.constant 0 : i32
    %c0_i32_0 = arith.constant 0 : i32
    %c0_i32_1 = arith.constant 0 : i32
    return %arg0, %c0_i32, %c0_i32_0 : i32, i32, i32
  }
}

module attributes {stable_mosaic.version = 11 : i64} {
  func.func @_linear_kernel(%arg0: i32, %arg1: memref<8x32xf32, #tpu.memory_space<vmem>>, %arg2: memref<32x32xf32, #tpu.memory_space<vmem>>, %arg3: memref<1x32xf32, #tpu.memory_space<vmem>>, %arg4: memref<8x32xf32, #tpu.memory_space<vmem>>) attributes {dimension_semantics = [#tpu.dimension_semantics<parallel>], iteration_bounds = array<i64: 2>, scalar_prefetch = 0 : i64, scratch_operands = 0 : i64, tpu.core_type = #tpu.core_type<tc>, window_params = [{transform_indices = @transform_0, window_bounds = array<i64: 8, 32>}, {pipeline_mode = #tpu.pipeline_mode<synchronous>, transform_indices = @transform_1, window_bounds = array<i64: 32, 32>}, {pipeline_mode = #tpu.pipeline_mode<synchronous>, transform_indices = @transform_2, window_bounds = array<i64: 1, 32>}, {transform_indices = @transform_3, window_bounds = array<i64: 8, 32>}]} {
    %c0 = arith.constant 0 : index
    %c0_0 = arith.constant 0 : index
    %0 = vector.load %arg1[%c0, %c0_0] : memref<8x32xf32, #tpu.memory_space<vmem>>, vector<8x32xf32>
    %c0_1 = arith.constant 0 : index
    %c0_2 = arith.constant 0 : index
    %1 = vector.load %arg2[%c0_1, %c0_2] : memref<32x32xf32, #tpu.memory_space<vmem>>, vector<32x32xf32>
    %cst = arith.constant dense<0.000000e+00> : vector<8x32xf32>
    %2 = tpu.matmul %0, %1, %cst {dimension_numbers = #tpu.dot_dimension_numbers<[1], [0], [0], [1], [0, 0, 1, 1], [], []>} : vector<8x32xf32>, vector<32x32xf32>, vector<8x32xf32> -> vector<8x32xf32>
    %c0_3 = arith.constant 0 : index
    %c0_4 = arith.constant 0 : index
    %3 = vector.load %arg3[%c0_3, %c0_4] : memref<1x32xf32, #tpu.memory_space<vmem>>, vector<1x32xf32>
    %4 = vector.broadcast %3 : vector<1x32xf32> to vector<8x32xf32>
    %5 = arith.addf %2, %4 : vector<8x32xf32>
    %c0_5 = arith.constant 0 : index
    %c0_6 = arith.constant 0 : index
    %6 = vector.load %arg4[%c0_5, %c0_6] : memref<8x32xf32, #tpu.memory_space<vmem>>, vector<8x32xf32>
    tpu.vector_store %arg4[%c0_5, %c0_6], %5 {strides = array<i32>} : memref<8x32xf32, #tpu.memory_space<vmem>>, vector<8x32xf32>,
    return
  }
  func.func @transform_0(%arg0: i32) -> (i32, i32) {
    %c0_i32 = arith.constant 0 : i32
    %c0_i32_0 = arith.constant 0 : i32
    return %arg0, %c0_i32 : i32, i32
  }
  func.func @transform_1(%arg0: i32) -> (i32, i32) {
    %c0_i32 = arith.constant 0 : i32
    %c0_i32_0 = arith.constant 0 : i32
    %c0_i32_1 = arith.constant 0 : i32
    return %c0_i32, %c0_i32_0 : i32, i32
  }
  func.func @transform_2(%arg0: i32) -> (i32, i32) {
    %c0_i32 = arith.constant 0 : i32
    %c0_i32_0 = arith.constant 0 : i32
    %c0_i32_1 = arith.constant 0 : i32
    return %c0_i32, %c0_i32_0 : i32, i32
  }
  func.func @transform_3(%arg0: i32) -> (i32, i32) {
    %c0_i32 = arith.constant 0 : i32
    %c0_i32_0 = arith.constant 0 : i32
    return %arg0, %c0_i32 : i32, i32
  }
}

module attributes {stable_mosaic.version = 11 : i64} {
  func.func @_linear_kernel(%arg0: i32, %arg1: memref<8x32xf32, #tpu.memory_space<vmem>>, %arg2: memref<32x96xf32, #tpu.memory_space<vmem>>, %arg3: memref<1x96xf32, #tpu.memory_space<vmem>>, %arg4: memref<8x96xf32, #tpu.memory_space<vmem>>) attributes {dimension_semantics = [#tpu.dimension_semantics<parallel>], iteration_bounds = array<i64: 2>, scalar_prefetch = 0 : i64, scratch_operands = 0 : i64, tpu.core_type = #tpu.core_type<tc>, window_params = [{transform_indices = @transform_0, window_bounds = array<i64: 8, 32>}, {pipeline_mode = #tpu.pipeline_mode<synchronous>, transform_indices = @transform_1, window_bounds = array<i64: 32, 96>}, {pipeline_mode = #tpu.pipeline_mode<synchronous>, transform_indices = @transform_2, window_bounds = array<i64: 1, 96>}, {transform_indices = @transform_3, window_bounds = array<i64: 8, 96>}]} {
    %c0 = arith.constant 0 : index
    %c0_0 = arith.constant 0 : index
    %0 = vector.load %arg1[%c0, %c0_0] : memref<8x32xf32, #tpu.memory_space<vmem>>, vector<8x32xf32>
    %c0_1 = arith.constant 0 : index
    %c0_2 = arith.constant 0 : index
    %1 = vector.load %arg2[%c0_1, %c0_2] : memref<32x96xf32, #tpu.memory_space<vmem>>, vector<32x96xf32>
    %cst = arith.constant dense<0.000000e+00> : vector<8x96xf32>
    %2 = tpu.matmul %0, %1, %cst {dimension_numbers = #tpu.dot_dimension_numbers<[1], [0], [0], [1], [0, 0, 1, 1], [], []>} : vector<8x32xf32>, vector<32x96xf32>, vector<8x96xf32> -> vector<8x96xf32>
    %c0_3 = arith.constant 0 : index
    %c0_4 = arith.constant 0 : index
    %3 = vector.load %arg3[%c0_3, %c0_4] : memref<1x96xf32, #tpu.memory_space<vmem>>, vector<1x96xf32>
    %4 = vector.broadcast %3 : vector<1x96xf32> to vector<8x96xf32>
    %5 = arith.addf %2, %4 : vector<8x96xf32>
    %c0_5 = arith.constant 0 : index
    %c0_6 = arith.constant 0 : index
    %6 = vector.load %arg4[%c0_5, %c0_6] : memref<8x96xf32, #tpu.memory_space<vmem>>, vector<8x96xf32>
    tpu.vector_store %arg4[%c0_5, %c0_6], %5 {strides = array<i32>} : memref<8x96xf32, #tpu.memory_space<vmem>>, vector<8x96xf32>,
    return
  }
  func.func @transform_0(%arg0: i32) -> (i32, i32) {
    %c0_i32 = arith.constant 0 : i32
    %c0_i32_0 = arith.constant 0 : i32
    return %arg0, %c0_i32 : i32, i32
  }
  func.func @transform_1(%arg0: i32) -> (i32, i32) {
    %c0_i32 = arith.constant 0 : i32
    %c0_i32_0 = arith.constant 0 : i32
    %c0_i32_1 = arith.constant 0 : i32
    return %c0_i32, %c0_i32_0 : i32, i32
  }
  func.func @transform_2(%arg0: i32) -> (i32, i32) {
    %c0_i32 = arith.constant 0 : i32
    %c0_i32_0 = arith.constant 0 : i32
    %c0_i32_1 = arith.constant 0 : i32
    return %c0_i32, %c0_i32_0 : i32, i32
  }
  func.func @transform_3(%arg0: i32) -> (i32, i32) {
    %c0_i32 = arith.constant 0 : i32
    %c0_i32_0 = arith.constant 0 : i32
    return %arg0, %c0_i32 : i32, i32
  }
}

module attributes {stable_mosaic.version = 11 : i64} {
  func.func @_self_attention_kernel(%arg0: i32, %arg1: memref<1x8x96xf32, #tpu.memory_space<vmem>>, %arg2: memref<1x8x32xf32, #tpu.memory_space<vmem>>) attributes {dimension_semantics = [#tpu.dimension_semantics<parallel>], iteration_bounds = array<i64: 2>, scalar_prefetch = 0 : i64, scratch_operands = 0 : i64, tpu.core_type = #tpu.core_type<tc>, window_params = [{transform_indices = @transform_0, window_bounds = array<i64: 1, 8, 96>}, {transform_indices = @transform_1, window_bounds = array<i64: 1, 8, 32>}]} {
    %c0 = arith.constant 0 : index
    %c0_0 = arith.constant 0 : index
    %c0_1 = arith.constant 0 : index
    %0 = vector.load %arg1[%c0, %c0_0, %c0_1] : memref<1x8x96xf32, #tpu.memory_space<vmem>>, vector<1x8x8xf32>
    %1 = vector.shape_cast %0 : vector<1x8x8xf32> to vector<8x8xf32>
    %c0_2 = arith.constant 0 : index
    %c0_3 = arith.constant 0 : index
    %c32 = arith.constant 32 : index
    %2 = vector.load %arg1[%c0_2, %c0_3, %c32] : memref<1x8x96xf32, #tpu.memory_space<vmem>>, vector<1x8x8xf32>
    %3 = vector.shape_cast %2 : vector<1x8x8xf32> to vector<8x8xf32>
    %c0_4 = arith.constant 0 : index
    %c0_5 = arith.constant 0 : index
    %c64 = arith.constant 64 : index
    %4 = vector.load %arg1[%c0_4, %c0_5, %c64] : memref<1x8x96xf32, #tpu.memory_space<vmem>>, vector<1x8x8xf32>
    %5 = vector.shape_cast %4 : vector<1x8x8xf32> to vector<8x8xf32>
    %6 = tpu.transpose %3, [1, 0] : vector<8x8xf32> -> vector<8x8xf32>
    %cst = arith.constant dense<0.000000e+00> : vector<8x8xf32>
    %7 = tpu.matmul %1, %6, %cst {dimension_numbers = #tpu.dot_dimension_numbers<[1], [0], [0], [1], [0, 0, 1, 1], [], []>} : vector<8x8xf32>, vector<8x8xf32>, vector<8x8xf32> -> vector<8x8xf32>
    %cst_6 = arith.constant dense<0xFF800000> : vector<8xf32>
    %8 = vector.multi_reduction <maximumf>, %7, %cst_6 [1] : vector<8x8xf32> to vector<8xf32>
    %9 = vector.shape_cast %8 : vector<8xf32> to vector<8x1xf32>
    %10 = vector.broadcast %9 : vector<8x1xf32> to vector<8x8xf32>
    %11 = arith.subf %7, %10 : vector<8x8xf32>
    %12 = math.exp %11 : vector<8x8xf32>
    %cst_7 = arith.constant dense<0.000000e+00> : vector<8xf32>
    %13 = vector.multi_reduction <add>, %12, %cst_7 [1] : vector<8x8xf32> to vector<8xf32>
    %14 = vector.shape_cast %13 : vector<8xf32> to vector<8x1xf32>
    %cst_8 = arith.constant dense<0.000000e+00> : vector<8x8xf32>
    %15 = tpu.matmul %12, %5, %cst_8 {dimension_numbers = #tpu.dot_dimension_numbers<[1], [0], [0], [1], [0, 0, 1, 1], [], []>} : vector<8x8xf32>, vector<8x8xf32>, vector<8x8xf32> -> vector<8x8xf32>
    %16 = tpu.reciprocal %14 : vector<8x1xf32> -> vector<8x1xf32>
    %17 = vector.broadcast %16 : vector<8x1xf32> to vector<8x8xf32>
    %18 = arith.mulf %15, %17 : vector<8x8xf32>
    %c0_9 = arith.constant 0 : index
    %c0_10 = arith.constant 0 : index
    %c8 = arith.constant 8 : index
    %19 = vector.load %arg1[%c0_9, %c0_10, %c8] : memref<1x8x96xf32, #tpu.memory_space<vmem>>, vector<1x8x8xf32>
    %20 = vector.shape_cast %19 : vector<1x8x8xf32> to vector<8x8xf32>
    %c0_11 = arith.constant 0 : index
    %c0_12 = arith.constant 0 : index
    %c40 = arith.constant 40 : index
    %21 = vector.load %arg1[%c0_11, %c0_12, %c40] : memref<1x8x96xf32, #tpu.memory_space<vmem>>, vector<1x8x8xf32>
    %22 = vector.shape_cast %21 : vector<1x8x8xf32> to vector<8x8xf32>
    %c0_13 = arith.constant 0 : index
    %c0_14 = arith.constant 0 : index
    %c72 = arith.constant 72 : index
    %23 = vector.load %arg1[%c0_13, %c0_14, %c72] : memref<1x8x96xf32, #tpu.memory_space<vmem>>, vector<1x8x8xf32>
    %24 = vector.shape_cast %23 : vector<1x8x8xf32> to vector<8x8xf32>
    %25 = tpu.transpose %22, [1, 0] : vector<8x8xf32> -> vector<8x8xf32>
    %cst_15 = arith.constant dense<0.000000e+00> : vector<8x8xf32>
    %26 = tpu.matmul %20, %25, %cst_15 {dimension_numbers = #tpu.dot_dimension_numbers<[1], [0], [0], [1], [0, 0, 1, 1], [], []>} : vector<8x8xf32>, vector<8x8xf32>, vector<8x8xf32> -> vector<8x8xf32>
    %cst_16 = arith.constant dense<0xFF800000> : vector<8xf32>
    %27 = vector.multi_reduction <maximumf>, %26, %cst_16 [1] : vector<8x8xf32> to vector<8xf32>
    %28 = vector.shape_cast %27 : vector<8xf32> to vector<8x1xf32>
    %29 = vector.broadcast %28 : vector<8x1xf32> to vector<8x8xf32>
    %30 = arith.subf %26, %29 : vector<8x8xf32>
    %31 = math.exp %30 : vector<8x8xf32>
    %cst_17 = arith.constant dense<0.000000e+00> : vector<8xf32>
    %32 = vector.multi_reduction <add>, %31, %cst_17 [1] : vector<8x8xf32> to vector<8xf32>
    %33 = vector.shape_cast %32 : vector<8xf32> to vector<8x1xf32>
    %cst_18 = arith.constant dense<0.000000e+00> : vector<8x8xf32>
    %34 = tpu.matmul %31, %24, %cst_18 {dimension_numbers = #tpu.dot_dimension_numbers<[1], [0], [0], [1], [0, 0, 1, 1], [], []>} : vector<8x8xf32>, vector<8x8xf32>, vector<8x8xf32> -> vector<8x8xf32>
    %35 = tpu.reciprocal %33 : vector<8x1xf32> -> vector<8x1xf32>
    %36 = vector.broadcast %35 : vector<8x1xf32> to vector<8x8xf32>
    %37 = arith.mulf %34, %36 : vector<8x8xf32>
    %c0_19 = arith.constant 0 : index
    %c0_20 = arith.constant 0 : index
    %c16 = arith.constant 16 : index
    %38 = vector.load %arg1[%c0_19, %c0_20, %c16] : memref<1x8x96xf32, #tpu.memory_space<vmem>>, vector<1x8x8xf32>
    %39 = vector.shape_cast %38 : vector<1x8x8xf32> to vector<8x8xf32>
    %c0_21 = arith.constant 0 : index
    %c0_22 = arith.constant 0 : index
    %c48 = arith.constant 48 : index
    %40 = vector.load %arg1[%c0_21, %c0_22, %c48] : memref<1x8x96xf32, #tpu.memory_space<vmem>>, vector<1x8x8xf32>
    %41 = vector.shape_cast %40 : vector<1x8x8xf32> to vector<8x8xf32>
    %c0_23 = arith.constant 0 : index
    %c0_24 = arith.constant 0 : index
    %c80 = arith.constant 80 : index
    %42 = vector.load %arg1[%c0_23, %c0_24, %c80] : memref<1x8x96xf32, #tpu.memory_space<vmem>>, vector<1x8x8xf32>
    %43 = vector.shape_cast %42 : vector<1x8x8xf32> to vector<8x8xf32>
    %44 = tpu.transpose %41, [1, 0] : vector<8x8xf32> -> vector<8x8xf32>
    %cst_25 = arith.constant dense<0.000000e+00> : vector<8x8xf32>
    %45 = tpu.matmul %39, %44, %cst_25 {dimension_numbers = #tpu.dot_dimension_numbers<[1], [0], [0], [1], [0, 0, 1, 1], [], []>} : vector<8x8xf32>, vector<8x8xf32>, vector<8x8xf32> -> vector<8x8xf32>
    %cst_26 = arith.constant dense<0xFF800000> : vector<8xf32>
    %46 = vector.multi_reduction <maximumf>, %45, %cst_26 [1] : vector<8x8xf32> to vector<8xf32>
    %47 = vector.shape_cast %46 : vector<8xf32> to vector<8x1xf32>
    %48 = vector.broadcast %47 : vector<8x1xf32> to vector<8x8xf32>
    %49 = arith.subf %45, %48 : vector<8x8xf32>
    %50 = math.exp %49 : vector<8x8xf32>
    %cst_27 = arith.constant dense<0.000000e+00> : vector<8xf32>
    %51 = vector.multi_reduction <add>, %50, %cst_27 [1] : vector<8x8xf32> to vector<8xf32>
    %52 = vector.shape_cast %51 : vector<8xf32> to vector<8x1xf32>
    %cst_28 = arith.constant dense<0.000000e+00> : vector<8x8xf32>
    %53 = tpu.matmul %50, %43, %cst_28 {dimension_numbers = #tpu.dot_dimension_numbers<[1], [0], [0], [1], [0, 0, 1, 1], [], []>} : vector<8x8xf32>, vector<8x8xf32>, vector<8x8xf32> -> vector<8x8xf32>
    %54 = tpu.reciprocal %52 : vector<8x1xf32> -> vector<8x1xf32>
    %55 = vector.broadcast %54 : vector<8x1xf32> to vector<8x8xf32>
    %56 = arith.mulf %53, %55 : vector<8x8xf32>
    %c0_29 = arith.constant 0 : index
    %c0_30 = arith.constant 0 : index
    %c24 = arith.constant 24 : index
    %57 = vector.load %arg1[%c0_29, %c0_30, %c24] : memref<1x8x96xf32, #tpu.memory_space<vmem>>, vector<1x8x8xf32>
    %58 = vector.shape_cast %57 : vector<1x8x8xf32> to vector<8x8xf32>
    %c0_31 = arith.constant 0 : index
    %c0_32 = arith.constant 0 : index
    %c56 = arith.constant 56 : index
    %59 = vector.load %arg1[%c0_31, %c0_32, %c56] : memref<1x8x96xf32, #tpu.memory_space<vmem>>, vector<1x8x8xf32>
    %60 = vector.shape_cast %59 : vector<1x8x8xf32> to vector<8x8xf32>
    %c0_33 = arith.constant 0 : index
    %c0_34 = arith.constant 0 : index
    %c88 = arith.constant 88 : index
    %61 = vector.load %arg1[%c0_33, %c0_34, %c88] : memref<1x8x96xf32, #tpu.memory_space<vmem>>, vector<1x8x8xf32>
    %62 = vector.shape_cast %61 : vector<1x8x8xf32> to vector<8x8xf32>
    %63 = tpu.transpose %60, [1, 0] : vector<8x8xf32> -> vector<8x8xf32>
    %cst_35 = arith.constant dense<0.000000e+00> : vector<8x8xf32>
    %64 = tpu.matmul %58, %63, %cst_35 {dimension_numbers = #tpu.dot_dimension_numbers<[1], [0], [0], [1], [0, 0, 1, 1], [], []>} : vector<8x8xf32>, vector<8x8xf32>, vector<8x8xf32> -> vector<8x8xf32>
    %cst_36 = arith.constant dense<0xFF800000> : vector<8xf32>
    %65 = vector.multi_reduction <maximumf>, %64, %cst_36 [1] : vector<8x8xf32> to vector<8xf32>
    %66 = vector.shape_cast %65 : vector<8xf32> to vector<8x1xf32>
    %67 = vector.broadcast %66 : vector<8x1xf32> to vector<8x8xf32>
    %68 = arith.subf %64, %67 : vector<8x8xf32>
    %69 = math.exp %68 : vector<8x8xf32>
    %cst_37 = arith.constant dense<0.000000e+00> : vector<8xf32>
    %70 = vector.multi_reduction <add>, %69, %cst_37 [1] : vector<8x8xf32> to vector<8xf32>
    %71 = vector.shape_cast %70 : vector<8xf32> to vector<8x1xf32>
    %cst_38 = arith.constant dense<0.000000e+00> : vector<8x8xf32>
    %72 = tpu.matmul %69, %62, %cst_38 {dimension_numbers = #tpu.dot_dimension_numbers<[1], [0], [0], [1], [0, 0, 1, 1], [], []>} : vector<8x8xf32>, vector<8x8xf32>, vector<8x8xf32> -> vector<8x8xf32>
    %73 = tpu.reciprocal %71 : vector<8x1xf32> -> vector<8x1xf32>
    %74 = vector.broadcast %73 : vector<8x1xf32> to vector<8x8xf32>
    %75 = arith.mulf %72, %74 : vector<8x8xf32>
    %76 = tpu.concatenate %18, %37, %56, %75 in 1 : vector<8x8xf32>, vector<8x8xf32>, vector<8x8xf32>, vector<8x8xf32> -> vector<8x32xf32>
    %c0_39 = arith.constant 0 : index
    %c0_40 = arith.constant 0 : index
    %c0_41 = arith.constant 0 : index
    %77 = vector.load %arg2[%c0_39, %c0_40, %c0_41] : memref<1x8x32xf32, #tpu.memory_space<vmem>>, vector<1x8x32xf32>
    %78 = vector.shape_cast %77 : vector<1x8x32xf32> to vector<8x32xf32>
    %79 = vector.shape_cast %76 : vector<8x32xf32> to vector<1x8x32xf32>
    tpu.vector_store %arg2[%c0_39, %c0_40, %c0_41], %79 {strides = array<i32>} : memref<1x8x32xf32, #tpu.memory_space<vmem>>, vector<1x8x32xf32>,
    return
  }
  func.func @transform_0(%arg0: i32) -> (i32, i32, i32) {
    %c0_i32 = arith.constant 0 : i32
    %c0_i32_0 = arith.constant 0 : i32
    %c0_i32_1 = arith.constant 0 : i32
    return %arg0, %c0_i32, %c0_i32_0 : i32, i32, i32
  }
  func.func @transform_1(%arg0: i32) -> (i32, i32, i32) {
    %c0_i32 = arith.constant 0 : i32
    %c0_i32_0 = arith.constant 0 : i32
    %c0_i32_1 = arith.constant 0 : i32
    return %arg0, %c0_i32, %c0_i32_0 : i32, i32, i32
  }
}

module attributes {stable_mosaic.version = 11 : i64} {
  func.func @_dense_add_ln_kernel(%arg0: i32, %arg1: memref<8x32xf32, #tpu.memory_space<vmem>>, %arg2: memref<8x32xf32, #tpu.memory_space<vmem>>, %arg3: memref<32x32xf32, #tpu.memory_space<vmem>>, %arg4: memref<1x32xf32, #tpu.memory_space<vmem>>, %arg5: memref<1x32xf32, #tpu.memory_space<vmem>>, %arg6: memref<1x32xf32, #tpu.memory_space<vmem>>, %arg7: memref<8x32xf32, #tpu.memory_space<vmem>>) attributes {dimension_semantics = [#tpu.dimension_semantics<parallel>], iteration_bounds = array<i64: 2>, scalar_prefetch = 0 : i64, scratch_operands = 0 : i64, tpu.core_type = #tpu.core_type<tc>, window_params = [{transform_indices = @transform_0, window_bounds = array<i64: 8, 32>}, {transform_indices = @transform_1, window_bounds = array<i64: 8, 32>}, {pipeline_mode = #tpu.pipeline_mode<synchronous>, transform_indices = @transform_2, window_bounds = array<i64: 32, 32>}, {pipeline_mode = #tpu.pipeline_mode<synchronous>, transform_indices = @transform_3, window_bounds = array<i64: 1, 32>}, {pipeline_mode = #tpu.pipeline_mode<synchronous>, transform_indices = @transform_4, window_bounds = array<i64: 1, 32>}, {pipeline_mode = #tpu.pipeline_mode<synchronous>, transform_indices = @transform_5, window_bounds = array<i64: 1, 32>}, {transform_indices = @transform_6, window_bounds = array<i64: 8, 32>}]} {
    %c0 = arith.constant 0 : index
    %c0_0 = arith.constant 0 : index
    %0 = vector.load %arg1[%c0, %c0_0] : memref<8x32xf32, #tpu.memory_space<vmem>>, vector<8x32xf32>
    %c0_1 = arith.constant 0 : index
    %c0_2 = arith.constant 0 : index
    %1 = vector.load %arg3[%c0_1, %c0_2] : memref<32x32xf32, #tpu.memory_space<vmem>>, vector<32x32xf32>
    %cst = arith.constant dense<0.000000e+00> : vector<8x32xf32>
    %2 = tpu.matmul %0, %1, %cst {dimension_numbers = #tpu.dot_dimension_numbers<[1], [0], [0], [1], [0, 0, 1, 1], [], []>} : vector<8x32xf32>, vector<32x32xf32>, vector<8x32xf32> -> vector<8x32xf32>
    %c0_3 = arith.constant 0 : index
    %c0_4 = arith.constant 0 : index
    %3 = vector.load %arg4[%c0_3, %c0_4] : memref<1x32xf32, #tpu.memory_space<vmem>>, vector<1x32xf32>
    %4 = vector.broadcast %3 : vector<1x32xf32> to vector<8x32xf32>
    %5 = arith.addf %2, %4 : vector<8x32xf32>
    %c0_5 = arith.constant 0 : index
    %c0_6 = arith.constant 0 : index
    %6 = vector.load %arg2[%c0_5, %c0_6] : memref<8x32xf32, #tpu.memory_space<vmem>>, vector<8x32xf32>
    %7 = arith.addf %5, %6 : vector<8x32xf32>
    %cst_7 = arith.constant dense<0.000000e+00> : vector<8xf32>
    %8 = vector.multi_reduction <add>, %7, %cst_7 [1] : vector<8x32xf32> to vector<8xf32>
    %9 = vector.shape_cast %8 : vector<8xf32> to vector<8x1xf32>
    %cst_8 = arith.constant 3.200000e+01 : f32
    %10 = vector.broadcast %cst_8 : f32 to vector<8x1xf32>
    %11 = arith.divf %9, %10 : vector<8x1xf32>
    %12 = vector.broadcast %11 : vector<8x1xf32> to vector<8x32xf32>
    %13 = arith.subf %7, %12 : vector<8x32xf32>
    %14 = arith.mulf %13, %13 : vector<8x32xf32>
    %cst_9 = arith.constant dense<0.000000e+00> : vector<8xf32>
    %15 = vector.multi_reduction <add>, %14, %cst_9 [1] : vector<8x32xf32> to vector<8xf32>
    %16 = vector.shape_cast %15 : vector<8xf32> to vector<8x1xf32>
    %cst_10 = arith.constant 3.200000e+01 : f32
    %17 = vector.broadcast %cst_10 : f32 to vector<8x1xf32>
    %18 = arith.divf %16, %17 : vector<8x1xf32>
    %cst_11 = arith.constant 9.99999996E-13 : f32
    %19 = vector.broadcast %cst_11 : f32 to vector<8x1xf32>
    %20 = arith.addf %18, %19 : vector<8x1xf32>
    %21 = math.rsqrt %20 : vector<8x1xf32>
    %22 = vector.broadcast %21 : vector<8x1xf32> to vector<8x32xf32>
    %23 = arith.mulf %13, %22 : vector<8x32xf32>
    %c0_12 = arith.constant 0 : index
    %c0_13 = arith.constant 0 : index
    %24 = vector.load %arg5[%c0_12, %c0_13] : memref<1x32xf32, #tpu.memory_space<vmem>>, vector<1x32xf32>
    %25 = vector.broadcast %24 : vector<1x32xf32> to vector<8x32xf32>
    %26 = arith.mulf %23, %25 : vector<8x32xf32>
    %c0_14 = arith.constant 0 : index
    %c0_15 = arith.constant 0 : index
    %27 = vector.load %arg6[%c0_14, %c0_15] : memref<1x32xf32, #tpu.memory_space<vmem>>, vector<1x32xf32>
    %28 = vector.broadcast %27 : vector<1x32xf32> to vector<8x32xf32>
    %29 = arith.addf %26, %28 : vector<8x32xf32>
    %c0_16 = arith.constant 0 : index
    %c0_17 = arith.constant 0 : index
    %30 = vector.load %arg7[%c0_16, %c0_17] : memref<8x32xf32, #tpu.memory_space<vmem>>, vector<8x32xf32>
    tpu.vector_store %arg7[%c0_16, %c0_17], %29 {strides = array<i32>} : memref<8x32xf32, #tpu.memory_space<vmem>>, vector<8x32xf32>,
    return
  }
  func.func @transform_0(%arg0: i32) -> (i32, i32) {
    %c0_i32 = arith.constant 0 : i32
    %c0_i32_0 = arith.constant 0 : i32
    return %arg0, %c0_i32 : i32, i32
  }
  func.func @transform_1(%arg0: i32) -> (i32, i32) {
    %c0_i32 = arith.constant 0 : i32
    %c0_i32_0 = arith.constant 0 : i32
    return %arg0, %c0_i32 : i32, i32
  }
  func.func @transform_2(%arg0: i32) -> (i32, i32) {
    %c0_i32 = arith.constant 0 : i32
    %c0_i32_0 = arith.constant 0 : i32
    %c0_i32_1 = arith.constant 0 : i32
    return %c0_i32, %c0_i32_0 : i32, i32
  }
  func.func @transform_3(%arg0: i32) -> (i32, i32) {
    %c0_i32 = arith.constant 0 : i32
    %c0_i32_0 = arith.constant 0 : i32
    %c0_i32_1 = arith.constant 0 : i32
    return %c0_i32, %c0_i32_0 : i32, i32
  }
  func.func @transform_4(%arg0: i32) -> (i32, i32) {
    %c0_i32 = arith.constant 0 : i32
    %c0_i32_0 = arith.constant 0 : i32
    %c0_i32_1 = arith.constant 0 : i32
    return %c0_i32, %c0_i32_0 : i32, i32
  }
  func.func @transform_5(%arg0: i32) -> (i32, i32) {
    %c0_i32 = arith.constant 0 : i32
    %c0_i32_0 = arith.constant 0 : i32
    %c0_i32_1 = arith.constant 0 : i32
    return %c0_i32, %c0_i32_0 : i32, i32
  }
  func.func @transform_6(%arg0: i32) -> (i32, i32) {
    %c0_i32 = arith.constant 0 : i32
    %c0_i32_0 = arith.constant 0 : i32
    return %arg0, %c0_i32 : i32, i32
  }
}

module attributes {stable_mosaic.version = 11 : i64} {
  func.func @_ffn_kernel(%arg0: i32, %arg1: memref<8x32xf32, #tpu.memory_space<vmem>>, %arg2: memref<8x32xf32, #tpu.memory_space<vmem>>, %arg3: memref<32x64xf32, #tpu.memory_space<vmem>>, %arg4: memref<1x64xf32, #tpu.memory_space<vmem>>, %arg5: memref<64x32xf32, #tpu.memory_space<vmem>>, %arg6: memref<1x32xf32, #tpu.memory_space<vmem>>, %arg7: memref<1x32xf32, #tpu.memory_space<vmem>>, %arg8: memref<1x32xf32, #tpu.memory_space<vmem>>, %arg9: memref<8x32xf32, #tpu.memory_space<vmem>>) attributes {dimension_semantics = [#tpu.dimension_semantics<parallel>], iteration_bounds = array<i64: 2>, scalar_prefetch = 0 : i64, scratch_operands = 0 : i64, tpu.core_type = #tpu.core_type<tc>, window_params = [{transform_indices = @transform_0, window_bounds = array<i64: 8, 32>}, {transform_indices = @transform_1, window_bounds = array<i64: 8, 32>}, {pipeline_mode = #tpu.pipeline_mode<synchronous>, transform_indices = @transform_2, window_bounds = array<i64: 32, 64>}, {pipeline_mode = #tpu.pipeline_mode<synchronous>, transform_indices = @transform_3, window_bounds = array<i64: 1, 64>}, {pipeline_mode = #tpu.pipeline_mode<synchronous>, transform_indices = @transform_4, window_bounds = array<i64: 64, 32>}, {pipeline_mode = #tpu.pipeline_mode<synchronous>, transform_indices = @transform_5, window_bounds = array<i64: 1, 32>}, {pipeline_mode = #tpu.pipeline_mode<synchronous>, transform_indices = @transform_6, window_bounds = array<i64: 1, 32>}, {pipeline_mode = #tpu.pipeline_mode<synchronous>, transform_indices = @transform_7, window_bounds = array<i64: 1, 32>}, {transform_indices = @transform_8, window_bounds = array<i64: 8, 32>}]} {
    %c0 = arith.constant 0 : index
    %c0_0 = arith.constant 0 : index
    %0 = vector.load %arg1[%c0, %c0_0] : memref<8x32xf32, #tpu.memory_space<vmem>>, vector<8x32xf32>
    %c0_1 = arith.constant 0 : index
    %c0_2 = arith.constant 0 : index
    %1 = vector.load %arg3[%c0_1, %c0_2] : memref<32x64xf32, #tpu.memory_space<vmem>>, vector<32x64xf32>
    %cst = arith.constant dense<0.000000e+00> : vector<8x64xf32>
    %2 = tpu.matmul %0, %1, %cst {dimension_numbers = #tpu.dot_dimension_numbers<[1], [0], [0], [1], [0, 0, 1, 1], [], []>} : vector<8x32xf32>, vector<32x64xf32>, vector<8x64xf32> -> vector<8x64xf32>
    %c0_3 = arith.constant 0 : index
    %c0_4 = arith.constant 0 : index
    %3 = vector.load %arg4[%c0_3, %c0_4] : memref<1x64xf32, #tpu.memory_space<vmem>>, vector<1x64xf32>
    %4 = vector.broadcast %3 : vector<1x64xf32> to vector<8x64xf32>
    %5 = arith.addf %2, %4 : vector<8x64xf32>
    %cst_5 = arith.constant 5.000000e-01 : f32
    %6 = vector.broadcast %cst_5 : f32 to vector<8x64xf32>
    %7 = arith.mulf %6, %5 : vector<8x64xf32>
    %cst_6 = arith.constant 4.471500e-02 : f32
    %8 = vector.broadcast %cst_6 : f32 to vector<8x64xf32>
    %9 = arith.mulf %8, %5 : vector<8x64xf32>
    %10 = arith.mulf %9, %5 : vector<8x64xf32>
    %11 = arith.mulf %10, %5 : vector<8x64xf32>
    %12 = arith.addf %5, %11 : vector<8x64xf32>
    %cst_7 = arith.constant 0.797884583 : f32
    %13 = vector.broadcast %cst_7 : f32 to vector<8x64xf32>
    %14 = arith.mulf %13, %12 : vector<8x64xf32>
    %15 = math.tanh %14 : vector<8x64xf32>
    %cst_8 = arith.constant 1.000000e+00 : f32
    %16 = vector.broadcast %cst_8 : f32 to vector<8x64xf32>
    %17 = arith.addf %16, %15 : vector<8x64xf32>
    %18 = arith.mulf %7, %17 : vector<8x64xf32>
    %c0_9 = arith.constant 0 : index
    %c0_10 = arith.constant 0 : index
    %19 = vector.load %arg5[%c0_9, %c0_10] : memref<64x32xf32, #tpu.memory_space<vmem>>, vector<64x32xf32>
    %cst_11 = arith.constant dense<0.000000e+00> : vector<8x32xf32>
    %20 = tpu.matmul %18, %19, %cst_11 {dimension_numbers = #tpu.dot_dimension_numbers<[1], [0], [0], [1], [0, 0, 1, 1], [], []>} : vector<8x64xf32>, vector<64x32xf32>, vector<8x32xf32> -> vector<8x32xf32>
    %c0_12 = arith.constant 0 : index
    %c0_13 = arith.constant 0 : index
    %21 = vector.load %arg6[%c0_12, %c0_13] : memref<1x32xf32, #tpu.memory_space<vmem>>, vector<1x32xf32>
    %22 = vector.broadcast %21 : vector<1x32xf32> to vector<8x32xf32>
    %23 = arith.addf %20, %22 : vector<8x32xf32>
    %c0_14 = arith.constant 0 : index
    %c0_15 = arith.constant 0 : index
    %24 = vector.load %arg2[%c0_14, %c0_15] : memref<8x32xf32, #tpu.memory_space<vmem>>, vector<8x32xf32>
    %25 = arith.addf %23, %24 : vector<8x32xf32>
    %cst_16 = arith.constant dense<0.000000e+00> : vector<8xf32>
    %26 = vector.multi_reduction <add>, %25, %cst_16 [1] : vector<8x32xf32> to vector<8xf32>
    %27 = vector.shape_cast %26 : vector<8xf32> to vector<8x1xf32>
    %cst_17 = arith.constant 3.200000e+01 : f32
    %28 = vector.broadcast %cst_17 : f32 to vector<8x1xf32>
    %29 = arith.divf %27, %28 : vector<8x1xf32>
    %30 = vector.broadcast %29 : vector<8x1xf32> to vector<8x32xf32>
    %31 = arith.subf %25, %30 : vector<8x32xf32>
    %32 = arith.mulf %31, %31 : vector<8x32xf32>
    %cst_18 = arith.constant dense<0.000000e+00> : vector<8xf32>
    %33 = vector.multi_reduction <add>, %32, %cst_18 [1] : vector<8x32xf32> to vector<8xf32>
    %34 = vector.shape_cast %33 : vector<8xf32> to vector<8x1xf32>
    %cst_19 = arith.constant 3.200000e+01 : f32
    %35 = vector.broadcast %cst_19 : f32 to vector<8x1xf32>
    %36 = arith.divf %34, %35 : vector<8x1xf32>
    %cst_20 = arith.constant 9.99999996E-13 : f32
    %37 = vector.broadcast %cst_20 : f32 to vector<8x1xf32>
    %38 = arith.addf %36, %37 : vector<8x1xf32>
    %39 = math.rsqrt %38 : vector<8x1xf32>
    %40 = vector.broadcast %39 : vector<8x1xf32> to vector<8x32xf32>
    %41 = arith.mulf %31, %40 : vector<8x32xf32>
    %c0_21 = arith.constant 0 : index
    %c0_22 = arith.constant 0 : index
    %42 = vector.load %arg7[%c0_21, %c0_22] : memref<1x32xf32, #tpu.memory_space<vmem>>, vector<1x32xf32>
    %43 = vector.broadcast %42 : vector<1x32xf32> to vector<8x32xf32>
    %44 = arith.mulf %41, %43 : vector<8x32xf32>
    %c0_23 = arith.constant 0 : index
    %c0_24 = arith.constant 0 : index
    %45 = vector.load %arg8[%c0_23, %c0_24] : memref<1x32xf32, #tpu.memory_space<vmem>>, vector<1x32xf32>
    %46 = vector.broadcast %45 : vector<1x32xf32> to vector<8x32xf32>
    %47 = arith.addf %44, %46 : vector<8x32xf32>
    %c0_25 = arith.constant 0 : index
    %c0_26 = arith.constant 0 : index
    %48 = vector.load %arg9[%c0_25, %c0_26] : memref<8x32xf32, #tpu.memory_space<vmem>>, vector<8x32xf32>
    tpu.vector_store %arg9[%c0_25, %c0_26], %47 {strides = array<i32>} : memref<8x32xf32, #tpu.memory_space<vmem>>, vector<8x32xf32>,
    return
  }
  func.func @transform_0(%arg0: i32) -> (i32, i32) {
    %c0_i32 = arith.constant 0 : i32
    %c0_i32_0 = arith.constant 0 : i32
    return %arg0, %c0_i32 : i32, i32
  }
  func.func @transform_1(%arg0: i32) -> (i32, i32) {
    %c0_i32 = arith.constant 0 : i32
    %c0_i32_0 = arith.constant 0 : i32
    return %arg0, %c0_i32 : i32, i32
  }
  func.func @transform_2(%arg0: i32) -> (i32, i32) {
    %c0_i32 = arith.constant 0 : i32
    %c0_i32_0 = arith.constant 0 : i32
    %c0_i32_1 = arith.constant 0 : i32
    return %c0_i32, %c0_i32_0 : i32, i32
  }
  func.func @transform_3(%arg0: i32) -> (i32, i32) {
    %c0_i32 = arith.constant 0 : i32
    %c0_i32_0 = arith.constant 0 : i32
    %c0_i32_1 = arith.constant 0 : i32
    return %c0_i32, %c0_i32_0 : i32, i32
  }
  func.func @transform_4(%arg0: i32) -> (i32, i32) {
    %c0_i32 = arith.constant 0 : i32
    %c0_i32_0 = arith.constant 0 : i32
    %c0_i32_1 = arith.constant 0 : i32
    return %c0_i32, %c0_i32_0 : i32, i32
  }
  func.func @transform_5(%arg0: i32) -> (i32, i32) {
    %c0_i32 = arith.constant 0 : i32
    %c0_i32_0 = arith.constant 0 : i32
    %c0_i32_1 = arith.constant 0 : i32
    return %c0_i32, %c0_i32_0 : i32, i32
  }
  func.func @transform_6(%arg0: i32) -> (i32, i32) {
    %c0_i32 = arith.constant 0 : i32
    %c0_i32_0 = arith.constant 0 : i32
    %c0_i32_1 = arith.constant 0 : i32
    return %c0_i32, %c0_i32_0 : i32, i32
  }
  func.func @transform_7(%arg0: i32) -> (i32, i32) {
    %c0_i32 = arith.constant 0 : i32
    %c0_i32_0 = arith.constant 0 : i32
    %c0_i32_1 = arith.constant 0 : i32
    return %c0_i32, %c0_i32_0 : i32, i32
  }
  func.func @transform_8(%arg0: i32) -> (i32, i32) {
    %c0_i32 = arith.constant 0 : i32
    %c0_i32_0 = arith.constant 0 : i32
    return %arg0, %c0_i32 : i32, i32
  }
}

</mosaic_0001>

<llo_original>
// kernel: _lambda_.9
$region0: #{_lambda_.9}
  #allocation0 [shape = 'u32[]', space=smem, size = 0x4, offset = 0x4, fixed_abs, tag = 'smem constant byte address 0x4 - core index']
  #allocation1 [shape = 'u32[144,128]{1,0:T(1,128)}', space=vmem, size = 0x12000, scoped, tag = 'internal scratch']
  %s0 = inlined_call_operand.vmem [shape: f32[32,32], index: 0, kind: input, shape index: {}]
  %s1 = inlined_call_operand.vmem [shape: f32[32,64], index: 1, kind: input, shape index: {}]
  %s2 = inlined_call_operand.vmem [shape: f32[1,64], index: 2, kind: input, shape index: {}]
  %s3 = inlined_call_operand.vmem [shape: f32[32,64], index: 3, kind: output, shape index: {}]
  %s4 = sld [smem:[#allocation0]]
  $region45: #{_lambda_.9} parent=0
    _
  %s6 = ssub.s32 1, %s4
  %s7 = scalar_select 0, %s6, %s4
  loop: start=0, step=1, limit=4
  $region2: #{_lambda_.9} parent=0 // loop_pre_header
    _
  $region3: #{_lambda_.9} parent=0 // loop_header
    %s9 = sphi 0, %s13
    %p10 = scmp.ge.s32.totalorder %s9, 4
    %s19 = sphi 0, %s21
    %s22 = sphi 0, %s19
    %s23 = sphi 0, %s22
    %s39 = sphi 0, %s23
    %s43 = sphi 0, %s43
    %s45 = sphi 0, %s43
    %s46 = sphi 0, %s45
    %s60 = sphi 0, %s46
    %s64 = sphi 0, %s64
    %s66 = sphi 0, %s64
    %s67 = sphi 0, %s66
    %s81 = sphi 0, %s67
    %s87 = sphi 0, %s89
    %s90 = sphi 0, %s87
    %s91 = sphi 0, %s90
    %s107 = sphi 0, %s91
  $region4: #{_lambda_.9} parent=0 // loop_header_branch
    %12 = sbr.rel (%p10) target = $region8
  $region5: #{_lambda_.9} parent=0 // loop_body
    %s14 = ssub.s32 %s9, 1
    %s15 = ssub.s32 %s9, 2
    %s16 = sadd.s32 %s9, 1
    %s17 = ssub.s32 %s9, %s16
    %p18 = scmp.eq.s32.totalorder %s17, 0
    %s20 = sadd.s32 %s19, 1
    %s21 = scalar_select %p18, %s19, %s20
    %p24 = pneg %p18
    %p25 = scmp.eq.s32.totalorder %s9, 1
    %p26 = por %p24, %p25
    %p27 = scmp.ne.s32.totalorder %s19, %s22
    %p28 = scmp.eq.s32.totalorder %s9, 0
    %p29 = por %p27, %p28
    %p30 = scmp.ne.s32.totalorder %s19, %s22
    %p31 = scmp.eq.s32.totalorder %s14, 1
    %p32 = por %p30, %p31
    %p33 = scmp.ne.s32.totalorder %s22, %s23
    %p34 = scmp.eq.s32.totalorder %s14, 0
    %p35 = por %p33, %p34
    %p36 = scmp.ne.s32.totalorder %s22, %s23
    %p37 = scmp.eq.s32.totalorder %s15, 1
    %p38 = por %p36, %p37
    %p40 = scmp.ne.s32.totalorder %s23, %s39
    %p41 = scmp.eq.s32.totalorder %s15, 0
    %p42 = por %p40, %p41
    %s44 = sadd.s32 %s43, 1
    %p47 = scmp.eq.s32.totalorder %s9, 1
    %p48 = scmp.ne.s32.totalorder %s43, %s45
    %p49 = scmp.eq.s32.totalorder %s9, 0
    %p50 = por %p48, %p49
    %p51 = scmp.ne.s32.totalorder %s43, %s45
    %p52 = scmp.eq.s32.totalorder %s14, 1
    %p53 = por %p51, %p52
    %p54 = scmp.ne.s32.totalorder %s45, %s46
    %p55 = scmp.eq.s32.totalorder %s14, 0
    %p56 = por %p54, %p55
    %p57 = scmp.ne.s32.totalorder %s45, %s46
    %p58 = scmp.eq.s32.totalorder %s15, 1
    %p59 = por %p57, %p58
    %p61 = scmp.ne.s32.totalorder %s46, %s60
    %p62 = scmp.eq.s32.totalorder %s15, 0
    %p63 = por %p61, %p62
    %s65 = sadd.s32 %s64, 1
    %p68 = scmp.eq.s32.totalorder %s9, 1
    %p69 = scmp.ne.s32.totalorder %s64, %s66
    %p70 = scmp.eq.s32.totalorder %s9, 0
    %p71 = por %p69, %p70
    %p72 = scmp.ne.s32.totalorder %s64, %s66
    %p73 = scmp.eq.s32.totalorder %s14, 1
    %p74 = por %p72, %p73
    %p75 = scmp.ne.s32.totalorder %s66, %s67
    %p76 = scmp.eq.s32.totalorder %s14, 0
    %p77 = por %p75, %p76
    %p78 = scmp.ne.s32.totalorder %s66, %s67
    %p79 = scmp.eq.s32.totalorder %s15, 1
    %p80 = por %p78, %p79
    %p82 = scmp.ne.s32.totalorder %s67, %s81
    %p83 = scmp.eq.s32.totalorder %s15, 0
    %p84 = por %p82, %p83
    %s85 = ssub.s32 %s9, %s16
    %p86 = scmp.eq.s32.totalorder %s85, 0
    %s88 = sadd.s32 %s87, 1
    %s89 = scalar_select %p86, %s87, %s88
    %p92 = pneg %p86
    %p93 = scmp.eq.s32.totalorder %s9, 1
    %p94 = por %p92, %p93
    %p95 = scmp.ne.s32.totalorder %s87, %s90
    %p96 = scmp.eq.s32.totalorder %s9, 0
    %p97 = por %p95, %p96
    %p98 = scmp.ne.s32.totalorder %s87, %s90
    %p99 = scmp.eq.s32.totalorder %s14, 1
    %p100 = por %p98, %p99
    %p101 = scmp.ne.s32.totalorder %s90, %s91
    %p102 = scmp.eq.s32.totalorder %s14, 0
    %p103 = por %p101, %p102
    %p104 = scmp.ne.s32.totalorder %s90, %s91
    %p105 = scmp.eq.s32.totalorder %s15, 1
    %p106 = por %p104, %p105
    %p108 = scmp.ne.s32.totalorder %s91, %s107
    %p109 = scmp.eq.s32.totalorder %s15, 0
    %p110 = por %p108, %p109
    %p111 = scmp.le.s32.totalorder 1, %s9
    %p112 = scmp.lt.s32.totalorder %s9, 3
    %p113 = pnand %p111, %p112
    %p114 = pneg %p113
    // Predicated region
    $region9: #{_lambda_.9} parent=5 // pred_check
      _
    $region10: #{_lambda_.9} parent=5 // pred_check_branch
      %116 = sbr.rel (%p113) target = $region12
    $region11: #{_lambda_.9} parent=5 // pred_region
      %s117 = ssub.s32 %s9, 1
      // Predicated region
      $region13: #{_lambda_.9} parent=11 // pred_check
        %p118 = pneg %p56
      $region14: #{_lambda_.9} parent=11 // pred_check_branch
        %120 = sbr.rel (%p118) target = $region16
      $region15: #{_lambda_.9} parent=11 // pred_region
        _
      $region16: #{_lambda_.9} parent=11 // pred_fallthru
        _
      // Predicated region
      $region17: #{_lambda_.9} parent=11 // pred_check
        %p121 = pneg %p77
      $region18: #{_lambda_.9} parent=11 // pred_check_branch
        %123 = sbr.rel (%p121) target = $region20
      $region19: #{_lambda_.9} parent=11 // pred_region
        _
      $region20: #{_lambda_.9} parent=11 // pred_fallthru
        _
    $region12: #{_lambda_.9} parent=5 // pred_fallthru
      _
    %p124 = scmp.lt.s32.totalorder %s9, 2
    // Predicated region
    $region21: #{_lambda_.9} parent=5 // pred_check
      %p125 = pneg %p124
    $region22: #{_lambda_.9} parent=5 // pred_check_branch
      %127 = sbr.rel (%p125) target = $region24
    $region23: #{_lambda_.9} parent=5 // pred_region
      // Predicated region
      $region25: #{_lambda_.9} parent=23 // pred_check
        %p128 = pneg %p29
      $region26: #{_lambda_.9} parent=23 // pred_check_branch
        %130 = sbr.rel (%p128) target = $region28
      $region27: #{_lambda_.9} parent=23 // pred_region
        %s131 = smul.u32 2, %s9
        %p132 = scmp.lt.s32.totalorder %s131, 3
        %s133 = scalar_select %p132, %s131, 3
        %s134 = smul.addr %s133, 8
        %s135 = scalar_lea.vmem %s0, %s134
        %s136 = smul.u32 2, %s9
      $region28: #{_lambda_.9} parent=23 // pred_fallthru
        _
    $region24: #{_lambda_.9} parent=5 // pred_fallthru
      _
    %p137 = scmp.le.s32.totalorder 1, %s9
    %p138 = scmp.lt.s32.totalorder %s9, 3
    %p139 = pnand %p137, %p138
    %p140 = pneg %p139
    // Predicated region
    $region29: #{_lambda_.9} parent=5 // pred_check
      _
    $region30: #{_lambda_.9} parent=5 // pred_check_branch
      %142 = sbr.rel (%p139) target = $region32
    $region31: #{_lambda_.9} parent=5 // pred_region
      %s143 = ssub.s32 %s9, 1
      %s144 = smul.u32 2, %s14
      %p145 = scmp.lt.s32.totalorder %s144, 3
      %s146 = scalar_select %p145, %s144, 3
      %s147 = smul.addr %s146, 8
      %s148 = scalar_lea.vmem %s0, %s147
      %p149 = pneg %p35
      %p150 = pneg %p32
      %p151 = pneg %p56
      %p152 = pneg %p53
      %p153 = pneg %p77
      %p154 = pneg %p74
      %p155 = pneg %p103
      %p156 = pneg %p100
      %s157 = smul.u32 2, %s14
      %p158 = scmp.lt.s32.totalorder %s157, 3
      %s159 = scalar_select %p158, %s157, 3
      %s160 = smul.addr %s159, 8
      %s161 = scalar_lea.vmem %s3, %s160
      %s162 = smul.u32 2, %s14
      %p163 = scmp.lt.s32.totalorder %s162, 3
      %s164 = scalar_select %p163, %s162, 3
      %s165 = smul.addr %s164, 8
      %s166 = scalar_lea.vmem %s0, %s165
      %s167 = smul.u32 2, %s14
      %s168 = smul.u32 2, %s14
      %p169 = scmp.lt.s32.totalorder %s168, 3
      %s170 = scalar_select %p169, %s168, 3
      %s171 = smul.addr %s170, 8
      %s172 = scalar_lea.vmem %s3, %s171
      %s173 = smul.u32 2, %s14
      %v174 = vld [vmem:[%s166] sm:$0xff]
      %v175 = vld [vmem:[%s166 + $0x8] sm:$0xff]
      %v176 = vld [vmem:[%s1] sm:$0xff]
      %v177 = vld [vmem:[%s1 + $0x8] sm:$0xff]
      %v178 = vld [vmem:[%s1 + $0x10] sm:$0xff]
      %v179 = vld [vmem:[%s1 + $0x18] sm:$0xff]
      %v180 = vld [vmem:[%s2] sm:$0x1]
      %v182 = vlaneseq
      %v183 = vshrl.u32 %v182, 7
      %v184 = vsub.s32 0, %v183
      %v185 = vrot.slane %v180, %v184
      %vm187 = vcmask 261120
      %v189 = vsel %vm187, %v174, 0
      %v192 = vsel %vm187, %v175, 0
      %194 = vmatprep.subr.mxu0 0.0
      %195 = vmatpush1.msra.mxu0 0.0
      %196 = vmatprep.subr.mxu0 0.0
      %197 = vmatpush1.msra.mxu0 0.0
      %198 = vmatprep.subr.mxu0 0.0
      %199 = vmatpush1.msra.mxu0 0.0
      %200 = vmatprep.subr.mxu0 0.0
      %201 = vmatpush1.msra.mxu0 0.0
      %202 = vmatprep.subr.mxu0 0.0
      %203 = vmatpush1.msra.mxu0 0.0
      %204 = vmatprep.subr.mxu0 0.0
      %205 = vmatpush1.msra.mxu0 0.0
      %206 = vmatprep.subr.mxu0 0.0
      %207 = vmatpush1.msra.mxu0 0.0
      %208 = vmatprep.subr.mxu0 0.0
      %209 = vmatpush1.msra.mxu0 0.0
      %210 = vmatprep.subr.mxu0 0.0
      %211 = vmatpush1.msra.mxu0 0.0
      %212 = vmatprep.subr.mxu0 0.0
      %213 = vmatpush1.msra.mxu0 0.0
      %214 = vmatprep.subr.mxu0 0.0
      %215 = vmatpush1.msra.mxu0 0.0
      %216 = vmatprep.subr.mxu0 0.0
      %217 = vmatpush1.msra.mxu0 0.0
      %218 = vmatprep.subr.mxu0 0.0
      %219 = vmatpush1.msra.mxu0 %v179
      %220 = vmatprep.subr.mxu0 0.0
      %221 = vmatpush1.msra.mxu0 %v178
      %222 = vmatprep.subr.mxu0 0.0
      %223 = vmatpush1.msra.mxu0 %v177
      %224 = vmatprep.subr.mxu0 0.0
      %225 = vmatpush1.msra.mxu0 %v176
      %226 = vmatprep.subr.mxu0 0.0
      %227 = vmatpush2.msra.mxu0 0.0
      %228 = vmatprep.subr.mxu0 0.0
      %229 = vmatpush2.msra.mxu0 0.0
      %230 = vmatprep.subr.mxu0 0.0
      %231 = vmatpush2.msra.mxu0 0.0
      %232 = vmatprep.subr.mxu0 0.0
      %233 = vmatpush2.msra.mxu0 0.0
      %234 = vmatprep.subr.mxu0 0.0
      %235 = vmatpush2.msra.mxu0 0.0
      %236 = vmatprep.subr.mxu0 0.0
      %237 = vmatpush2.msra.mxu0 0.0
      %238 = vmatprep.subr.mxu0 0.0
      %239 = vmatpush2.msra.mxu0 0.0
      %240 = vmatprep.subr.mxu0 0.0
      %241 = vmatpush2.msra.mxu0 0.0
      %242 = vmatprep.subr.mxu0 0.0
      %243 = vmatpush2.msra.mxu0 0.0
      %244 = vmatprep.subr.mxu0 0.0
      %245 = vmatpush2.msra.mxu0 0.0
      %246 = vmatprep.subr.mxu0 0.0
      %247 = vmatpush2.msra.mxu0 0.0
      %248 = vmatprep.subr.mxu0 0.0
      %249 = vmatpush2.msra.mxu0 0.0
      %250 = vmatprep.subr.mxu0 0.0
      %251 = vmatpush2.msra.mxu0 0.0
      %252 = vmatprep.subr.mxu0 0.0
      %253 = vmatpush2.msra.mxu0 0.0
      %254 = vmatprep.subr.mxu0 0.0
      %255 = vmatpush2.msra.mxu0 0.0
      %256 = vmatprep.subr.mxu0 0.0
      %257 = vmatpush2.msra.mxu0 0.0
      %258 = vmatprep.mubr.f32.mxu0 0.0
      %259 = vmatmul.mubr.f32.gmra.mxu0 %v189
      %v260 = vpop.f32.mrf.mxu0
      %v261 = vadd.f32 %v185, %v260
      %v262 = vpop.f32.mrf.mxu0
      %263 = vmatprep.mubr.f32.mxu0 0.0
      %264 = vmatmul.mubr.f32.gmra.mxu0 %v192
      %v265 = vpop.f32.mrf.mxu0
      %v266 = vadd.f32 %v185, %v265
      %v267 = vpop.f32.mrf.mxu0
      %268 = vdwg.mxu0
      %vm269 = vcmask 523264
      %270 = vst.msk [vmem:[%s172] sm:$0xff] %vm269, %v261
      %271 = vst.msk [vmem:[%s172 + $0x8] sm:$0xff] %vm269, %v266
      %s272 = smul.u32 2, %s14
      %p273 = scmp.lt.s32.totalorder %s272, 3
      %s274 = scalar_select %p273, %s272, 3
      %s275 = smul.addr %s274, 8
      %s276 = scalar_lea.vmem %s3, %s275
      // Predicated region
      $region33: #{_lambda_.9} parent=31 // pred_check
        %p277 = pneg %p100
      $region34: #{_lambda_.9} parent=31 // pred_check_branch
        %279 = sbr.rel (%p277) target = $region36
      $region35: #{_lambda_.9} parent=31 // pred_region
        %s280 = smul.u32 2, %s14
      $region36: #{_lambda_.9} parent=31 // pred_fallthru
        _
    $region32: #{_lambda_.9} parent=5 // pred_fallthru
      _
    %p281 = scmp.le.s32.totalorder 2, %s9
    // Predicated region
    $region37: #{_lambda_.9} parent=5 // pred_check
      %p282 = pneg %p281
    $region38: #{_lambda_.9} parent=5 // pred_check_branch
      %284 = sbr.rel (%p282) target = $region40
    $region39: #{_lambda_.9} parent=5 // pred_region
      %s285 = ssub.s32 %s9, 2
      // Predicated region
      $region41: #{_lambda_.9} parent=39 // pred_check
        %p286 = pneg %p106
      $region42: #{_lambda_.9} parent=39 // pred_check_branch
        %288 = sbr.rel (%p286) target = $region44
      $region43: #{_lambda_.9} parent=39 // pred_region
        %s289 = smul.u32 2, %s15
        %p290 = scmp.lt.s32.totalorder %s289, 3
        %s291 = scalar_select %p290, %s289, 3
        %s292 = smul.addr %s291, 8
        %s293 = scalar_lea.vmem %s3, %s292
      $region44: #{_lambda_.9} parent=39 // pred_fallthru
        _
    $region40: #{_lambda_.9} parent=5 // pred_fallthru
      _
  $region6: #{_lambda_.9} parent=0 // loop_footer
    %s13 = sadd.s32 1, %s9
  $region7: #{_lambda_.9} parent=0 // loop_footer_branch
    %8 = sbr.rel target = $region3
  $region8: #{_lambda_.9} parent=0 // loop_exit
    _

// kernel: _lambda_.8
$region0: #{_lambda_.8}
  #allocation0 [shape = 'u32[]', space=smem, size = 0x4, offset = 0x4, fixed_abs, tag = 'smem constant byte address 0x4 - core index']
  #allocation1 [shape = 'u32[144,128]{1,0:T(1,128)}', space=vmem, size = 0x12000, scoped, tag = 'internal scratch']
  %s0 = inlined_call_operand.vmem [shape: f32[16,32], index: 0, kind: input, shape index: {}]
  %s1 = inlined_call_operand.hbm [shape: f32[32,32], index: 1, kind: input, shape index: {}]
  %s2 = inlined_call_operand.vmem [shape: f32[1,32], index: 2, kind: input, shape index: {}]
  %s3 = inlined_call_operand.vmem [shape: f32[16,32], index: 3, kind: output, shape index: {}]
  %s4 = sld [smem:[#allocation0]]
  $region49: #{_lambda_.8} parent=0
    _
  %s6 = ssub.s32 1, %s4
  %s7 = scalar_select 0, %s6, %s4
  $region1: #{_lambda_.8} parent=0
    #allocation2 [shape = 'u8[16384]{0}', space=vmem, size = 0x4000, scoped, tag = 'input window, operand 1, single buffered']
    #allocation3 [shape = 's32[2]{0}', space=sflag, size = 0x8, scoped, tag = 'scoped memory for _lambda_.8']
    %8 = vsyncpa [#allocation3], 0
    loop: start=0, step=1, limit=4
    $region2: #{_lambda_.8} parent=1 // loop_pre_header
      _
    $region3: #{_lambda_.8} parent=1 // loop_header
      %s10 = sphi 0, %s14
      %p11 = scmp.ge.s32.totalorder %s10, 4
      %s20 = sphi 0, %s22
      %s23 = sphi 0, %s20
      %s24 = sphi 0, %s23
      %s40 = sphi 0, %s24
      %s44 = sphi 0, %s44
      %s46 = sphi 0, %s44
      %s47 = sphi 0, %s46
      %s61 = sphi 0, %s47
      %s65 = sphi 0, %s65
      %s67 = sphi 0, %s65
      %s68 = sphi 0, %s67
      %s82 = sphi 0, %s68
      %s88 = sphi 0, %s90
      %s91 = sphi 0, %s88
      %s92 = sphi 0, %s91
      %s108 = sphi 0, %s92
    $region4: #{_lambda_.8} parent=1 // loop_header_branch
      %13 = sbr.rel (%p11) target = $region8
    $region5: #{_lambda_.8} parent=1 // loop_body
      %s15 = ssub.s32 %s10, 1
      %s16 = ssub.s32 %s10, 2
      %s17 = sadd.s32 %s10, 1
      %s18 = ssub.s32 %s10, %s17
      %p19 = scmp.eq.s32.totalorder %s18, 0
      %s21 = sadd.s32 %s20, 1
      %s22 = scalar_select %p19, %s20, %s21
      %p25 = pneg %p19
      %p26 = scmp.eq.s32.totalorder %s10, 1
      %p27 = por %p25, %p26
      %p28 = scmp.ne.s32.totalorder %s20, %s23
      %p29 = scmp.eq.s32.totalorder %s10, 0
      %p30 = por %p28, %p29
      %p31 = scmp.ne.s32.totalorder %s20, %s23
      %p32 = scmp.eq.s32.totalorder %s15, 1
      %p33 = por %p31, %p32
      %p34 = scmp.ne.s32.totalorder %s23, %s24
      %p35 = scmp.eq.s32.totalorder %s15, 0
      %p36 = por %p34, %p35
      %p37 = scmp.ne.s32.totalorder %s23, %s24
      %p38 = scmp.eq.s32.totalorder %s16, 1
      %p39 = por %p37, %p38
      %p41 = scmp.ne.s32.totalorder %s24, %s40
      %p42 = scmp.eq.s32.totalorder %s16, 0
      %p43 = por %p41, %p42
      %s45 = sadd.s32 %s44, 1
      %p48 = scmp.eq.s32.totalorder %s10, 1
      %p49 = scmp.ne.s32.totalorder %s44, %s46
      %p50 = scmp.eq.s32.totalorder %s10, 0
      %p51 = por %p49, %p50
      %p52 = scmp.ne.s32.totalorder %s44, %s46
      %p53 = scmp.eq.s32.totalorder %s15, 1
      %p54 = por %p52, %p53
      %p55 = scmp.ne.s32.totalorder %s46, %s47
      %p56 = scmp.eq.s32.totalorder %s15, 0
      %p57 = por %p55, %p56
      %p58 = scmp.ne.s32.totalorder %s46, %s47
      %p59 = scmp.eq.s32.totalorder %s16, 1
      %p60 = por %p58, %p59
      %p62 = scmp.ne.s32.totalorder %s47, %s61
      %p63 = scmp.eq.s32.totalorder %s16, 0
      %p64 = por %p62, %p63
      %s66 = sadd.s32 %s65, 1
      %p69 = scmp.eq.s32.totalorder %s10, 1
      %p70 = scmp.ne.s32.totalorder %s65, %s67
      %p71 = scmp.eq.s32.totalorder %s10, 0
      %p72 = por %p70, %p71
      %p73 = scmp.ne.s32.totalorder %s65, %s67
      %p74 = scmp.eq.s32.totalorder %s15, 1
      %p75 = por %p73, %p74
      %p76 = scmp.ne.s32.totalorder %s67, %s68
      %p77 = scmp.eq.s32.totalorder %s15, 0
      %p78 = por %p76, %p77
      %p79 = scmp.ne.s32.totalorder %s67, %s68
      %p80 = scmp.eq.s32.totalorder %s16, 1
      %p81 = por %p79, %p80
      %p83 = scmp.ne.s32.totalorder %s68, %s82
      %p84 = scmp.eq.s32.totalorder %s16, 0
      %p85 = por %p83, %p84
      %s86 = ssub.s32 %s10, %s17
      %p87 = scmp.eq.s32.totalorder %s86, 0
      %s89 = sadd.s32 %s88, 1
      %s90 = scalar_select %p87, %s88, %s89
      %p93 = pneg %p87
      %p94 = scmp.eq.s32.totalorder %s10, 1
      %p95 = por %p93, %p94
      %p96 = scmp.ne.s32.totalorder %s88, %s91
      %p97 = scmp.eq.s32.totalorder %s10, 0
      %p98 = por %p96, %p97
      %p99 = scmp.ne.s32.totalorder %s88, %s91
      %p100 = scmp.eq.s32.totalorder %s15, 1
      %p101 = por %p99, %p100
      %p102 = scmp.ne.s32.totalorder %s91, %s92
      %p103 = scmp.eq.s32.totalorder %s15, 0
      %p104 = por %p102, %p103
      %p105 = scmp.ne.s32.totalorder %s91, %s92
      %p106 = scmp.eq.s32.totalorder %s16, 1
      %p107 = por %p105, %p106
      %p109 = scmp.ne.s32.totalorder %s92, %s108
      %p110 = scmp.eq.s32.totalorder %s16, 0
      %p111 = por %p109, %p110
      %p112 = scmp.le.s32.totalorder 1, %s10
      %p113 = scmp.lt.s32.totalorder %s10, 3
      %p114 = pnand %p112, %p113
      %p115 = pneg %p114
      // Predicated region
      $region9: #{_lambda_.8} parent=5 // pred_check
        _
      $region10: #{_lambda_.8} parent=5 // pred_check_branch
        %117 = sbr.rel (%p114) target = $region12
      $region11: #{_lambda_.8} parent=5 // pred_region
        %s118 = ssub.s32 %s10, 1
        // Predicated region
        $region13: #{_lambda_.8} parent=11 // pred_check
          %p119 = pneg %p57
        $region14: #{_lambda_.8} parent=11 // pred_check_branch
          %121 = sbr.rel (%p119) target = $region16
        $region15: #{_lambda_.8} parent=11 // pred_region
          %s123 = ssub.s32 512, 512
          %124 = vsyncadd [#allocation3], %s123
          %s125 = sshll.u32 [#allocation2], 4
          %s126 = int_to_ptr.vmem [resolvable:$true] %s125
          %131 = dma.hbm_to_vmem [thread:$0]  %s1, 512, %s126, [#allocation3], 128, 128, 8
        $region16: #{_lambda_.8} parent=11 // pred_fallthru
          _
        // Predicated region
        $region17: #{_lambda_.8} parent=11 // pred_check
          %p132 = pneg %p78
        $region18: #{_lambda_.8} parent=11 // pred_check_branch
          %134 = sbr.rel (%p132) target = $region20
        $region19: #{_lambda_.8} parent=11 // pred_region
          _
        $region20: #{_lambda_.8} parent=11 // pred_fallthru
          _
      $region12: #{_lambda_.8} parent=5 // pred_fallthru
        _
      %p135 = scmp.lt.s32.totalorder %s10, 2
      // Predicated region
      $region21: #{_lambda_.8} parent=5 // pred_check
        %p136 = pneg %p135
      $region22: #{_lambda_.8} parent=5 // pred_check_branch
        %138 = sbr.rel (%p136) target = $region24
      $region23: #{_lambda_.8} parent=5 // pred_region
        // Predicated region
        $region25: #{_lambda_.8} parent=23 // pred_check
          %p139 = pneg %p30
        $region26: #{_lambda_.8} parent=23 // pred_check_branch
          %141 = sbr.rel (%p139) target = $region28
        $region27: #{_lambda_.8} parent=23 // pred_region
          %p142 = scmp.lt.s32.totalorder %s10, 1
          %s143 = scalar_select %p142, %s10, 1
          %s144 = smul.addr %s143, 8
          %s145 = scalar_lea.vmem %s0, %s144
        $region28: #{_lambda_.8} parent=23 // pred_fallthru
          _
      $region24: #{_lambda_.8} parent=5 // pred_fallthru
        _
      %p146 = scmp.le.s32.totalorder 1, %s10
      %p147 = scmp.lt.s32.totalorder %s10, 3
      %p148 = pnand %p146, %p147
      %p149 = pneg %p148
      // Predicated region
      $region29: #{_lambda_.8} parent=5 // pred_check
        _
      $region30: #{_lambda_.8} parent=5 // pred_check_branch
        %151 = sbr.rel (%p148) target = $region32
      $region31: #{_lambda_.8} parent=5 // pred_region
        %s152 = ssub.s32 %s10, 1
        // Predicated region
        $region33: #{_lambda_.8} parent=31 // pred_check
          %p153 = pneg %p57
        $region34: #{_lambda_.8} parent=31 // pred_check_branch
          %155 = sbr.rel (%p153) target = $region36
        $region35: #{_lambda_.8} parent=31 // pred_region
          %156 = dma.done [#allocation3], 512
        $region36: #{_lambda_.8} parent=31 // pred_fallthru
          _
        %p157 = scmp.lt.s32.totalorder %s15, 1
        %s158 = scalar_select %p157, %s15, 1
        %s159 = smul.addr %s158, 8
        %s160 = scalar_lea.vmem %s0, %s159
        %p161 = pneg %p36
        %p162 = pneg %p33
        %p163 = pneg %p57
        %p164 = pneg %p54
        %p165 = pneg %p78
        %p166 = pneg %p75
        %p167 = pneg %p104
        %p168 = pneg %p101
        %p169 = scmp.lt.s32.totalorder %s15, 1
        %s170 = scalar_select %p169, %s15, 1
        %s171 = smul.addr %s170, 8
        %s172 = scalar_lea.vmem %s3, %s171
        %p173 = scmp.lt.s32.totalorder %s15, 1
        %s174 = scalar_select %p173, %s15, 1
        %s175 = smul.addr %s174, 8
        %s176 = scalar_lea.vmem %s0, %s175
        %p177 = scmp.lt.s32.totalorder %s15, 1
        %s178 = scalar_select %p177, %s15, 1
        %s179 = smul.addr %s178, 8
        %s180 = scalar_lea.vmem %s3, %s179
        %v181 = vld [vmem:[%s176] sm:$0xff]
        %v182 = vld [vmem:[#allocation2] sm:$0xff]
        %v183 = vld [vmem:[#allocation2 + $0x8] sm:$0xff]
        %v184 = vld [vmem:[#allocation2 + $0x10] sm:$0xff]
        %v185 = vld [vmem:[#allocation2 + $0x18] sm:$0xff]
        %v186 = vld [vmem:[%s2] sm:$0x1]
        %v188 = vlaneseq
        %v189 = vshrl.u32 %v188, 7
        %v190 = vsub.s32 0, %v189
        %v191 = vrot.slane %v186, %v190
        %vm193 = vcmask 261120
        %v195 = vsel %vm193, %v181, 0
        %197 = vmatprep.subr.mxu0 0.0
        %198 = vmatpush1.msra.mxu0 0.0
        %199 = vmatprep.subr.mxu0 0.0
        %200 = vmatpush1.msra.mxu0 0.0
        %201 = vmatprep.subr.mxu0 0.0
        %202 = vmatpush1.msra.mxu0 0.0
        %203 = vmatprep.subr.mxu0 0.0
        %204 = vmatpush1.msra.mxu0 0.0
        %205 = vmatprep.subr.mxu0 0.0
        %206 = vmatpush1.msra.mxu0 0.0
        %207 = vmatprep.subr.mxu0 0.0
        %208 = vmatpush1.msra.mxu0 0.0
        %209 = vmatprep.subr.mxu0 0.0
        %210 = vmatpush1.msra.mxu0 0.0
        %211 = vmatprep.subr.mxu0 0.0
        %212 = vmatpush1.msra.mxu0 0.0
        %213 = vmatprep.subr.mxu0 0.0
        %214 = vmatpush1.msra.mxu0 0.0
        %215 = vmatprep.subr.mxu0 0.0
        %216 = vmatpush1.msra.mxu0 0.0
        %217 = vmatprep.subr.mxu0 0.0
        %218 = vmatpush1.msra.mxu0 0.0
        %219 = vmatprep.subr.mxu0 0.0
        %220 = vmatpush1.msra.mxu0 0.0
        %221 = vmatprep.subr.mxu0 0.0
        %222 = vmatpush1.msra.mxu0 %v185
        %223 = vmatprep.subr.mxu0 0.0
        %224 = vmatpush1.msra.mxu0 %v184
        %225 = vmatprep.subr.mxu0 0.0
        %226 = vmatpush1.msra.mxu0 %v183
        %227 = vmatprep.subr.mxu0 0.0
        %228 = vmatpush1.msra.mxu0 %v182
        %229 = vmatprep.subr.mxu0 0.0
        %230 = vmatpush2.msra.mxu0 0.0
        %231 = vmatprep.subr.mxu0 0.0
        %232 = vmatpush2.msra.mxu0 0.0
        %233 = vmatprep.subr.mxu0 0.0
        %234 = vmatpush2.msra.mxu0 0.0
        %235 = vmatprep.subr.mxu0 0.0
        %236 = vmatpush2.msra.mxu0 0.0
        %237 = vmatprep.subr.mxu0 0.0
        %238 = vmatpush2.msra.mxu0 0.0
        %239 = vmatprep.subr.mxu0 0.0
        %240 = vmatpush2.msra.mxu0 0.0
        %241 = vmatprep.subr.mxu0 0.0
        %242 = vmatpush2.msra.mxu0 0.0
        %243 = vmatprep.subr.mxu0 0.0
        %244 = vmatpush2.msra.mxu0 0.0
        %245 = vmatprep.subr.mxu0 0.0
        %246 = vmatpush2.msra.mxu0 0.0
        %247 = vmatprep.subr.mxu0 0.0
        %248 = vmatpush2.msra.mxu0 0.0
        %249 = vmatprep.subr.mxu0 0.0
        %250 = vmatpush2.msra.mxu0 0.0
        %251 = vmatprep.subr.mxu0 0.0
        %252 = vmatpush2.msra.mxu0 0.0
        %253 = vmatprep.subr.mxu0 0.0
        %254 = vmatpush2.msra.mxu0 0.0
        %255 = vmatprep.subr.mxu0 0.0
        %256 = vmatpush2.msra.mxu0 0.0
        %257 = vmatprep.subr.mxu0 0.0
        %258 = vmatpush2.msra.mxu0 0.0
        %259 = vmatprep.subr.mxu0 0.0
        %260 = vmatpush2.msra.mxu0 0.0
        %261 = vmatprep.mubr.f32.mxu0 0.0
        %262 = vmatmul.mubr.f32.gmra.mxu0 %v195
        %v263 = vpop.f32.mrf.mxu0
        %v264 = vadd.f32 %v191, %v263
        %v265 = vpop.f32.mrf.mxu0
        %266 = vdwg.mxu0
        %267 = vst.msk [vmem:[%s180] sm:$0xff] %vm193, %v264
        %p268 = scmp.lt.s32.totalorder %s15, 1
        %s269 = scalar_select %p268, %s15, 1
        %s270 = smul.addr %s269, 8
        %s271 = scalar_lea.vmem %s3, %s270
        // Predicated region
        $region37: #{_lambda_.8} parent=31 // pred_check
          %p272 = pneg %p101
        $region38: #{_lambda_.8} parent=31 // pred_check_branch
          %274 = sbr.rel (%p272) target = $region40
        $region39: #{_lambda_.8} parent=31 // pred_region
          _
        $region40: #{_lambda_.8} parent=31 // pred_fallthru
          _
      $region32: #{_lambda_.8} parent=5 // pred_fallthru
        _
      %p275 = scmp.le.s32.totalorder 2, %s10
      // Predicated region
      $region41: #{_lambda_.8} parent=5 // pred_check
        %p276 = pneg %p275
      $region42: #{_lambda_.8} parent=5 // pred_check_branch
        %278 = sbr.rel (%p276) target = $region44
      $region43: #{_lambda_.8} parent=5 // pred_region
        %s279 = ssub.s32 %s10, 2
        // Predicated region
        $region45: #{_lambda_.8} parent=43 // pred_check
          %p280 = pneg %p107
        $region46: #{_lambda_.8} parent=43 // pred_check_branch
          %282 = sbr.rel (%p280) target = $region48
        $region47: #{_lambda_.8} parent=43 // pred_region
          %p283 = scmp.lt.s32.totalorder %s16, 1
          %s284 = scalar_select %p283, %s16, 1
          %s285 = smul.addr %s284, 8
          %s286 = scalar_lea.vmem %s3, %s285
        $region48: #{_lambda_.8} parent=43 // pred_fallthru
          _
      $region44: #{_lambda_.8} parent=5 // pred_fallthru
        _
    $region6: #{_lambda_.8} parent=1 // loop_footer
      %s14 = sadd.s32 1, %s10
    $region7: #{_lambda_.8} parent=1 // loop_footer_branch
      %9 = sbr.rel target = $region3
    $region8: #{_lambda_.8} parent=1 // loop_exit
      _
    %287 = vsyncpa [#allocation3], 1
    %s288 = scalar_lea.sflag [#allocation3], 1
    %289 = vsyncpa %s288, 1

// kernel: _lambda_.11
$region0: #{_lambda_.11}
  #allocation0 [shape = 'u32[]', space=smem, size = 0x4, offset = 0x4, fixed_abs, tag = 'smem constant byte address 0x4 - core index']
  #allocation1 [shape = 'u32[144,128]{1,0:T(1,128)}', space=vmem, size = 0x12000, scoped, tag = 'internal scratch']
  %s0 = inlined_call_operand.vmem [shape: f32[16,32], index: 0, kind: input, shape index: {}]
  %s1 = inlined_call_operand.vmem [shape: f32[16,32], index: 1, kind: input, shape index: {}]
  %s2 = inlined_call_operand.vmem [shape: f32[32,32], index: 2, kind: input, shape index: {}]
  %s3 = inlined_call_operand.vmem [shape: f32[1,32], index: 3, kind: input, shape index: {}]
  %s4 = inlined_call_operand.vmem [shape: f32[1,32], index: 4, kind: input, shape index: {}]
  %s5 = inlined_call_operand.vmem [shape: f32[1,32], index: 5, kind: input, shape index: {}]
  %s6 = inlined_call_operand.vmem [shape: f32[16,32], index: 6, kind: output, shape index: {}]
  %s7 = sld [smem:[#allocation0]]
  $region57: #{_lambda_.11} parent=0
    _
  %s9 = ssub.s32 1, %s7
  %s10 = scalar_select 0, %s9, %s7
  loop: start=0, step=1, limit=4
  $region2: #{_lambda_.11} parent=0 // loop_pre_header
    _
  $region3: #{_lambda_.11} parent=0 // loop_header
    %s12 = sphi 0, %s16
    %p13 = scmp.ge.s32.totalorder %s12, 4
    %s22 = sphi 0, %s24
    %s25 = sphi 0, %s22
    %s26 = sphi 0, %s25
    %s42 = sphi 0, %s26
    %s48 = sphi 0, %s50
    %s51 = sphi 0, %s48
    %s52 = sphi 0, %s51
    %s68 = sphi 0, %s52
    %s72 = sphi 0, %s72
    %s74 = sphi 0, %s72
    %s75 = sphi 0, %s74
    %s89 = sphi 0, %s75
    %s93 = sphi 0, %s93
    %s95 = sphi 0, %s93
    %s96 = sphi 0, %s95
    %s110 = sphi 0, %s96
    %s114 = sphi 0, %s114
    %s116 = sphi 0, %s114
    %s117 = sphi 0, %s116
    %s131 = sphi 0, %s117
    %s135 = sphi 0, %s135
    %s137 = sphi 0, %s135
    %s138 = sphi 0, %s137
    %s152 = sphi 0, %s138
    %s158 = sphi 0, %s160
    %s161 = sphi 0, %s158
    %s162 = sphi 0, %s161
    %s178 = sphi 0, %s162
  $region4: #{_lambda_.11} parent=0 // loop_header_branch
    %15 = sbr.rel (%p13) target = $region8
  $region5: #{_lambda_.11} parent=0 // loop_body
    %s17 = ssub.s32 %s12, 1
    %s18 = ssub.s32 %s12, 2
    %s19 = sadd.s32 %s12, 1
    %s20 = ssub.s32 %s12, %s19
    %p21 = scmp.eq.s32.totalorder %s20, 0
    %s23 = sadd.s32 %s22, 1
    %s24 = scalar_select %p21, %s22, %s23
    %p27 = pneg %p21
    %p28 = scmp.eq.s32.totalorder %s12, 1
    %p29 = por %p27, %p28
    %p30 = scmp.ne.s32.totalorder %s22, %s25
    %p31 = scmp.eq.s32.totalorder %s12, 0
    %p32 = por %p30, %p31
    %p33 = scmp.ne.s32.totalorder %s22, %s25
    %p34 = scmp.eq.s32.totalorder %s17, 1
    %p35 = por %p33, %p34
    %p36 = scmp.ne.s32.totalorder %s25, %s26
    %p37 = scmp.eq.s32.totalorder %s17, 0
    %p38 = por %p36, %p37
    %p39 = scmp.ne.s32.totalorder %s25, %s26
    %p40 = scmp.eq.s32.totalorder %s18, 1
    %p41 = por %p39, %p40
    %p43 = scmp.ne.s32.totalorder %s26, %s42
    %p44 = scmp.eq.s32.totalorder %s18, 0
    %p45 = por %p43, %p44
    %s46 = ssub.s32 %s12, %s19
    %p47 = scmp.eq.s32.totalorder %s46, 0
    %s49 = sadd.s32 %s48, 1
    %s50 = scalar_select %p47, %s48, %s49
    %p53 = pneg %p47
    %p54 = scmp.eq.s32.totalorder %s12, 1
    %p55 = por %p53, %p54
    %p56 = scmp.ne.s32.totalorder %s48, %s51
    %p57 = scmp.eq.s32.totalorder %s12, 0
    %p58 = por %p56, %p57
    %p59 = scmp.ne.s32.totalorder %s48, %s51
    %p60 = scmp.eq.s32.totalorder %s17, 1
    %p61 = por %p59, %p60
    %p62 = scmp.ne.s32.totalorder %s51, %s52
    %p63 = scmp.eq.s32.totalorder %s17, 0
    %p64 = por %p62, %p63
    %p65 = scmp.ne.s32.totalorder %s51, %s52
    %p66 = scmp.eq.s32.totalorder %s18, 1
    %p67 = por %p65, %p66
    %p69 = scmp.ne.s32.totalorder %s52, %s68
    %p70 = scmp.eq.s32.totalorder %s18, 0
    %p71 = por %p69, %p70
    %s73 = sadd.s32 %s72, 1
    %p76 = scmp.eq.s32.totalorder %s12, 1
    %p77 = scmp.ne.s32.totalorder %s72, %s74
    %p78 = scmp.eq.s32.totalorder %s12, 0
    %p79 = por %p77, %p78
    %p80 = scmp.ne.s32.totalorder %s72, %s74
    %p81 = scmp.eq.s32.totalorder %s17, 1
    %p82 = por %p80, %p81
    %p83 = scmp.ne.s32.totalorder %s74, %s75
    %p84 = scmp.eq.s32.totalorder %s17, 0
    %p85 = por %p83, %p84
    %p86 = scmp.ne.s32.totalorder %s74, %s75
    %p87 = scmp.eq.s32.totalorder %s18, 1
    %p88 = por %p86, %p87
    %p90 = scmp.ne.s32.totalorder %s75, %s89
    %p91 = scmp.eq.s32.totalorder %s18, 0
    %p92 = por %p90, %p91
    %s94 = sadd.s32 %s93, 1
    %p97 = scmp.eq.s32.totalorder %s12, 1
    %p98 = scmp.ne.s32.totalorder %s93, %s95
    %p99 = scmp.eq.s32.totalorder %s12, 0
    %p100 = por %p98, %p99
    %p101 = scmp.ne.s32.totalorder %s93, %s95
    %p102 = scmp.eq.s32.totalorder %s17, 1
    %p103 = por %p101, %p102
    %p104 = scmp.ne.s32.totalorder %s95, %s96
    %p105 = scmp.eq.s32.totalorder %s17, 0
    %p106 = por %p104, %p105
    %p107 = scmp.ne.s32.totalorder %s95, %s96
    %p108 = scmp.eq.s32.totalorder %s18, 1
    %p109 = por %p107, %p108
    %p111 = scmp.ne.s32.totalorder %s96, %s110
    %p112 = scmp.eq.s32.totalorder %s18, 0
    %p113 = por %p111, %p112
    %s115 = sadd.s32 %s114, 1
    %p118 = scmp.eq.s32.totalorder %s12, 1
    %p119 = scmp.ne.s32.totalorder %s114, %s116
    %p120 = scmp.eq.s32.totalorder %s12, 0
    %p121 = por %p119, %p120
    %p122 = scmp.ne.s32.totalorder %s114, %s116
    %p123 = scmp.eq.s32.totalorder %s17, 1
    %p124 = por %p122, %p123
    %p125 = scmp.ne.s32.totalorder %s116, %s117
    %p126 = scmp.eq.s32.totalorder %s17, 0
    %p127 = por %p125, %p126
    %p128 = scmp.ne.s32.totalorder %s116, %s117
    %p129 = scmp.eq.s32.totalorder %s18, 1
    %p130 = por %p128, %p129
    %p132 = scmp.ne.s32.totalorder %s117, %s131
    %p133 = scmp.eq.s32.totalorder %s18, 0
    %p134 = por %p132, %p133
    %s136 = sadd.s32 %s135, 1
    %p139 = scmp.eq.s32.totalorder %s12, 1
    %p140 = scmp.ne.s32.totalorder %s135, %s137
    %p141 = scmp.eq.s32.totalorder %s12, 0
    %p142 = por %p140, %p141
    %p143 = scmp.ne.s32.totalorder %s135, %s137
    %p144 = scmp.eq.s32.totalorder %s17, 1
    %p145 = por %p143, %p144
    %p146 = scmp.ne.s32.totalorder %s137, %s138
    %p147 = scmp.eq.s32.totalorder %s17, 0
    %p148 = por %p146, %p147
    %p149 = scmp.ne.s32.totalorder %s137, %s138
    %p150 = scmp.eq.s32.totalorder %s18, 1
    %p151 = por %p149, %p150
    %p153 = scmp.ne.s32.totalorder %s138, %s152
    %p154 = scmp.eq.s32.totalorder %s18, 0
    %p155 = por %p153, %p154
    %s156 = ssub.s32 %s12, %s19
    %p157 = scmp.eq.s32.totalorder %s156, 0
    %s159 = sadd.s32 %s158, 1
    %s160 = scalar_select %p157, %s158, %s159
    %p163 = pneg %p157
    %p164 = scmp.eq.s32.totalorder %s12, 1
    %p165 = por %p163, %p164
    %p166 = scmp.ne.s32.totalorder %s158, %s161
    %p167 = scmp.eq.s32.totalorder %s12, 0
    %p168 = por %p166, %p167
    %p169 = scmp.ne.s32.totalorder %s158, %s161
    %p170 = scmp.eq.s32.totalorder %s17, 1
    %p171 = por %p169, %p170
    %p172 = scmp.ne.s32.totalorder %s161, %s162
    %p173 = scmp.eq.s32.totalorder %s17, 0
    %p174 = por %p172, %p173
    %p175 = scmp.ne.s32.totalorder %s161, %s162
    %p176 = scmp.eq.s32.totalorder %s18, 1
    %p177 = por %p175, %p176
    %p179 = scmp.ne.s32.totalorder %s162, %s178
    %p180 = scmp.eq.s32.totalorder %s18, 0
    %p181 = por %p179, %p180
    %p182 = scmp.le.s32.totalorder 1, %s12
    %p183 = scmp.lt.s32.totalorder %s12, 3
    %p184 = pnand %p182, %p183
    %p185 = pneg %p184
    // Predicated region
    $region9: #{_lambda_.11} parent=5 // pred_check
      _
    $region10: #{_lambda_.11} parent=5 // pred_check_branch
      %187 = sbr.rel (%p184) target = $region12
    $region11: #{_lambda_.11} parent=5 // pred_region
      %s188 = ssub.s32 %s12, 1
      // Predicated region
      $region13: #{_lambda_.11} parent=11 // pred_check
        %p189 = pneg %p85
      $region14: #{_lambda_.11} parent=11 // pred_check_branch
        %191 = sbr.rel (%p189) target = $region16
      $region15: #{_lambda_.11} parent=11 // pred_region
        _
      $region16: #{_lambda_.11} parent=11 // pred_fallthru
        _
      // Predicated region
      $region17: #{_lambda_.11} parent=11 // pred_check
        %p192 = pneg %p106
      $region18: #{_lambda_.11} parent=11 // pred_check_branch
        %194 = sbr.rel (%p192) target = $region20
      $region19: #{_lambda_.11} parent=11 // pred_region
        _
      $region20: #{_lambda_.11} parent=11 // pred_fallthru
        _
      // Predicated region
      $region21: #{_lambda_.11} parent=11 // pred_check
        %p195 = pneg %p127
      $region22: #{_lambda_.11} parent=11 // pred_check_branch
        %197 = sbr.rel (%p195) target = $region24
      $region23: #{_lambda_.11} parent=11 // pred_region
        _
      $region24: #{_lambda_.11} parent=11 // pred_fallthru
        _
      // Predicated region
      $region25: #{_lambda_.11} parent=11 // pred_check
        %p198 = pneg %p148
      $region26: #{_lambda_.11} parent=11 // pred_check_branch
        %200 = sbr.rel (%p198) target = $region28
      $region27: #{_lambda_.11} parent=11 // pred_region
        _
      $region28: #{_lambda_.11} parent=11 // pred_fallthru
        _
    $region12: #{_lambda_.11} parent=5 // pred_fallthru
      _
    %p201 = scmp.lt.s32.totalorder %s12, 2
    // Predicated region
    $region29: #{_lambda_.11} parent=5 // pred_check
      %p202 = pneg %p201
    $region30: #{_lambda_.11} parent=5 // pred_check_branch
      %204 = sbr.rel (%p202) target = $region32
    $region31: #{_lambda_.11} parent=5 // pred_region
      // Predicated region
      $region33: #{_lambda_.11} parent=31 // pred_check
        %p205 = pneg %p32
      $region34: #{_lambda_.11} parent=31 // pred_check_branch
        %207 = sbr.rel (%p205) target = $region36
      $region35: #{_lambda_.11} parent=31 // pred_region
        %p208 = scmp.lt.s32.totalorder %s12, 1
        %s209 = scalar_select %p208, %s12, 1
        %s210 = smul.addr %s209, 8
        %s211 = scalar_lea.vmem %s0, %s210
      $region36: #{_lambda_.11} parent=31 // pred_fallthru
        _
      // Predicated region
      $region37: #{_lambda_.11} parent=31 // pred_check
        %p212 = pneg %p58
      $region38: #{_lambda_.11} parent=31 // pred_check_branch
        %214 = sbr.rel (%p212) target = $region40
      $region39: #{_lambda_.11} parent=31 // pred_region
        %p215 = scmp.lt.s32.totalorder %s12, 1
        %s216 = scalar_select %p215, %s12, 1
        %s217 = smul.addr %s216, 8
        %s218 = scalar_lea.vmem %s1, %s217
      $region40: #{_lambda_.11} parent=31 // pred_fallthru
        _
    $region32: #{_lambda_.11} parent=5 // pred_fallthru
      _
    %p219 = scmp.le.s32.totalorder 1, %s12
    %p220 = scmp.lt.s32.totalorder %s12, 3
    %p221 = pnand %p219, %p220
    %p222 = pneg %p221
    // Predicated region
    $region41: #{_lambda_.11} parent=5 // pred_check
      _
    $region42: #{_lambda_.11} parent=5 // pred_check_branch
      %224 = sbr.rel (%p221) target = $region44
    $region43: #{_lambda_.11} parent=5 // pred_region
      %s225 = ssub.s32 %s12, 1
      %p226 = scmp.lt.s32.totalorder %s17, 1
      %s227 = scalar_select %p226, %s17, 1
      %s228 = smul.addr %s227, 8
      %s229 = scalar_lea.vmem %s0, %s228
      %p230 = pneg %p38
      %p231 = pneg %p35
      %p232 = scmp.lt.s32.totalorder %s17, 1
      %s233 = scalar_select %p232, %s17, 1
      %s234 = smul.addr %s233, 8
      %s235 = scalar_lea.vmem %s1, %s234
      %p236 = pneg %p64
      %p237 = pneg %p61
      %p238 = pneg %p85
      %p239 = pneg %p82
      %p240 = pneg %p106
      %p241 = pneg %p103
      %p242 = pneg %p127
      %p243 = pneg %p124
      %p244 = pneg %p148
      %p245 = pneg %p145
      %p246 = pneg %p174
      %p247 = pneg %p171
      %p248 = scmp.lt.s32.totalorder %s17, 1
      %s249 = scalar_select %p248, %s17, 1
      %s250 = smul.addr %s249, 8
      %s251 = scalar_lea.vmem %s6, %s250
      %p252 = scmp.lt.s32.totalorder %s17, 1
      %s253 = scalar_select %p252, %s17, 1
      %s254 = smul.addr %s253, 8
      %s255 = scalar_lea.vmem %s0, %s254
      %p256 = scmp.lt.s32.totalorder %s17, 1
      %s257 = scalar_select %p256, %s17, 1
      %s258 = smul.addr %s257, 8
      %s259 = scalar_lea.vmem %s1, %s258
      %p260 = scmp.lt.s32.totalorder %s17, 1
      %s261 = scalar_select %p260, %s17, 1
      %s262 = smul.addr %s261, 8
      %s263 = scalar_lea.vmem %s6, %s262
      %v264 = vld [vmem:[%s255] sm:$0xff]
      %v265 = vld [vmem:[%s2] sm:$0xff]
      %v266 = vld [vmem:[%s2 + $0x8] sm:$0xff]
      %v267 = vld [vmem:[%s2 + $0x10] sm:$0xff]
      %v268 = vld [vmem:[%s2 + $0x18] sm:$0xff]
      %v269 = vld [vmem:[%s3] sm:$0x1]
      %v271 = vlaneseq
      %v272 = vshrl.u32 %v271, 7
      %v273 = vsub.s32 0, %v272
      %v274 = vrot.slane %v269, %v273
      %vm276 = vcmask 261120
      %v278 = vsel %vm276, %v264, 0
      %280 = vmatprep.subr.mxu0 0.0
      %281 = vmatpush1.msra.mxu0 0.0
      %282 = vmatprep.subr.mxu0 0.0
      %283 = vmatpush1.msra.mxu0 0.0
      %284 = vmatprep.subr.mxu0 0.0
      %285 = vmatpush1.msra.mxu0 0.0
      %286 = vmatprep.subr.mxu0 0.0
      %287 = vmatpush1.msra.mxu0 0.0
      %288 = vmatprep.subr.mxu0 0.0
      %289 = vmatpush1.msra.mxu0 0.0
      %290 = vmatprep.subr.mxu0 0.0
      %291 = vmatpush1.msra.mxu0 0.0
      %292 = vmatprep.subr.mxu0 0.0
      %293 = vmatpush1.msra.mxu0 0.0
      %294 = vmatprep.subr.mxu0 0.0
      %295 = vmatpush1.msra.mxu0 0.0
      %296 = vmatprep.subr.mxu0 0.0
      %297 = vmatpush1.msra.mxu0 0.0
      %298 = vmatprep.subr.mxu0 0.0
      %299 = vmatpush1.msra.mxu0 0.0
      %300 = vmatprep.subr.mxu0 0.0
      %301 = vmatpush1.msra.mxu0 0.0
      %302 = vmatprep.subr.mxu0 0.0
      %303 = vmatpush1.msra.mxu0 0.0
      %304 = vmatprep.subr.mxu0 0.0
      %305 = vmatpush1.msra.mxu0 %v268
      %306 = vmatprep.subr.mxu0 0.0
      %307 = vmatpush1.msra.mxu0 %v267
      %308 = vmatprep.subr.mxu0 0.0
      %309 = vmatpush1.msra.mxu0 %v266
      %310 = vmatprep.subr.mxu0 0.0
      %311 = vmatpush1.msra.mxu0 %v265
      %312 = vmatprep.subr.mxu0 0.0
      %313 = vmatpush2.msra.mxu0 0.0
      %314 = vmatprep.subr.mxu0 0.0
      %315 = vmatpush2.msra.mxu0 0.0
      %316 = vmatprep.subr.mxu0 0.0
      %317 = vmatpush2.msra.mxu0 0.0
      %318 = vmatprep.subr.mxu0 0.0
      %319 = vmatpush2.msra.mxu0 0.0
      %320 = vmatprep.subr.mxu0 0.0
      %321 = vmatpush2.msra.mxu0 0.0
      %322 = vmatprep.subr.mxu0 0.0
      %323 = vmatpush2.msra.mxu0 0.0
      %324 = vmatprep.subr.mxu0 0.0
      %325 = vmatpush2.msra.mxu0 0.0
      %326 = vmatprep.subr.mxu0 0.0
      %327 = vmatpush2.msra.mxu0 0.0
      %328 = vmatprep.subr.mxu0 0.0
      %329 = vmatpush2.msra.mxu0 0.0
      %330 = vmatprep.subr.mxu0 0.0
      %331 = vmatpush2.msra.mxu0 0.0
      %332 = vmatprep.subr.mxu0 0.0
      %333 = vmatpush2.msra.mxu0 0.0
      %334 = vmatprep.subr.mxu0 0.0
      %335 = vmatpush2.msra.mxu0 0.0
      %336 = vmatprep.subr.mxu0 0.0
      %337 = vmatpush2.msra.mxu0 0.0
      %338 = vmatprep.subr.mxu0 0.0
      %339 = vmatpush2.msra.mxu0 0.0
      %340 = vmatprep.subr.mxu0 0.0
      %341 = vmatpush2.msra.mxu0 0.0
      %342 = vmatprep.subr.mxu0 0.0
      %343 = vmatpush2.msra.mxu0 0.0
      %344 = vmatprep.mubr.f32.mxu0 0.0
      %345 = vmatmul.mubr.f32.gmra.mxu0 %v278
      %v346 = vpop.f32.mrf.mxu0
      %v347 = vadd.f32 %v274, %v346
      %v348 = vpop.f32.mrf.mxu0
      %349 = vdwg.mxu0
      %v350 = vld [vmem:[%s259] sm:$0xff]
      %v351 = vadd.f32 %v347, %v350
      %v352 = vsel %vm276, %v351, 0.0
      %353 = vadd.xlane.f32.xlu0 %v352
      %v354 = vpop.xlane.xlu0 %353
      %v355 = vrcp.pop 32.0
      %v356 = vmul.f32 %v354, %v355
      %v357 = vsub.f32 %v351, %v356
      %v358 = vmul.f32 %v357, %v357
      %v359 = vsel %vm276, %v358, 0.0
      %360 = vadd.xlane.f32.xlu0 %v359
      %v361 = vpop.xlane.xlu0 %360
      %v362 = vmul.f32 %v361, %v355
      %v363 = vadd.f32 %v362, 1e-12
      %v364 = vrsqrt.pop %v363
      %v365 = vmul.f32 %v357, %v364
      %v366 = vld [vmem:[%s4] sm:$0x1]
      %v368 = vlaneseq
      %v369 = vshrl.u32 %v368, 7
      %v370 = vsub.s32 0, %v369
      %v371 = vrot.slane %v366, %v370
      %v373 = vmul.f32 %v365, %v371
      %v374 = vld [vmem:[%s5] sm:$0x1]
      %v376 = vlaneseq
      %v377 = vshrl.u32 %v376, 7
      %v378 = vsub.s32 0, %v377
      %v379 = vrot.slane %v374, %v378
      %v381 = vadd.f32 %v373, %v379
      %382 = vst.msk [vmem:[%s263] sm:$0xff] %vm276, %v381
      %p383 = scmp.lt.s32.totalorder %s17, 1
      %s384 = scalar_select %p383, %s17, 1
      %s385 = smul.addr %s384, 8
      %s386 = scalar_lea.vmem %s6, %s385
      // Predicated region
      $region45: #{_lambda_.11} parent=43 // pred_check
        %p387 = pneg %p171
      $region46: #{_lambda_.11} parent=43 // pred_check_branch
        %389 = sbr.rel (%p387) target = $region48
      $region47: #{_lambda_.11} parent=43 // pred_region
        _
      $region48: #{_lambda_.11} parent=43 // pred_fallthru
        _
    $region44: #{_lambda_.11} parent=5 // pred_fallthru
      _
    %p390 = scmp.le.s32.totalorder 2, %s12
    // Predicated region
    $region49: #{_lambda_.11} parent=5 // pred_check
      %p391 = pneg %p390
    $region50: #{_lambda_.11} parent=5 // pred_check_branch
      %393 = sbr.rel (%p391) target = $region52
    $region51: #{_lambda_.11} parent=5 // pred_region
      %s394 = ssub.s32 %s12, 2
      // Predicated region
      $region53: #{_lambda_.11} parent=51 // pred_check
        %p395 = pneg %p177
      $region54: #{_lambda_.11} parent=51 // pred_check_branch
        %397 = sbr.rel (%p395) target = $region56
      $region55: #{_lambda_.11} parent=51 // pred_region
        %p398 = scmp.lt.s32.totalorder %s18, 1
        %s399 = scalar_select %p398, %s18, 1
        %s400 = smul.addr %s399, 8
        %s401 = scalar_lea.vmem %s6, %s400
      $region56: #{_lambda_.11} parent=51 // pred_fallthru
        _
    $region52: #{_lambda_.11} parent=5 // pred_fallthru
      _
  $region6: #{_lambda_.11} parent=0 // loop_footer
    %s16 = sadd.s32 1, %s12
  $region7: #{_lambda_.11} parent=0 // loop_footer_branch
    %11 = sbr.rel target = $region3
  $region8: #{_lambda_.11} parent=0 // loop_exit
    _

// kernel: _lambda_.10
$region0: #{_lambda_.10}
  #allocation0 [shape = 'u32[]', space=smem, size = 0x4, offset = 0x4, fixed_abs, tag = 'smem constant byte address 0x4 - core index']
  #allocation1 [shape = 'u32[144,128]{1,0:T(1,128)}', space=vmem, size = 0x12000, scoped, tag = 'internal scratch']
  %s0 = inlined_call_operand.vmem [shape: f32[2,8,32], index: 0, kind: input, shape index: {}]
  %s1 = inlined_call_operand.vmem [shape: f32[2,16,64], index: 1, kind: input, shape index: {}]
  %s2 = inlined_call_operand.vmem [shape: f32[2,8,32], index: 2, kind: output, shape index: {}]
  %s3 = sld [smem:[#allocation0]]
  $region41: #{_lambda_.10} parent=0
    _
  %s5 = ssub.s32 1, %s3
  %s6 = scalar_select 0, %s5, %s3
  loop: start=0, step=1, limit=4
  $region2: #{_lambda_.10} parent=0 // loop_pre_header
    _
  $region3: #{_lambda_.10} parent=0 // loop_header
    %s8 = sphi 0, %s12
    %p9 = scmp.ge.s32.totalorder %s8, 4
    %s18 = sphi 0, %s20
    %s21 = sphi 0, %s18
    %s22 = sphi 0, %s21
    %s38 = sphi 0, %s22
    %s44 = sphi 0, %s46
    %s47 = sphi 0, %s44
    %s48 = sphi 0, %s47
    %s64 = sphi 0, %s48
    %s70 = sphi 0, %s72
    %s73 = sphi 0, %s70
    %s74 = sphi 0, %s73
    %s90 = sphi 0, %s74
  $region4: #{_lambda_.10} parent=0 // loop_header_branch
    %11 = sbr.rel (%p9) target = $region8
  $region5: #{_lambda_.10} parent=0 // loop_body
    %s13 = ssub.s32 %s8, 1
    %s14 = ssub.s32 %s8, 2
    %s15 = sadd.s32 %s8, 1
    %s16 = ssub.s32 %s8, %s15
    %p17 = scmp.eq.s32.totalorder %s16, 0
    %s19 = sadd.s32 %s18, 1
    %s20 = scalar_select %p17, %s18, %s19
    %p23 = pneg %p17
    %p24 = scmp.eq.s32.totalorder %s8, 1
    %p25 = por %p23, %p24
    %p26 = scmp.ne.s32.totalorder %s18, %s21
    %p27 = scmp.eq.s32.totalorder %s8, 0
    %p28 = por %p26, %p27
    %p29 = scmp.ne.s32.totalorder %s18, %s21
    %p30 = scmp.eq.s32.totalorder %s13, 1
    %p31 = por %p29, %p30
    %p32 = scmp.ne.s32.totalorder %s21, %s22
    %p33 = scmp.eq.s32.totalorder %s13, 0
    %p34 = por %p32, %p33
    %p35 = scmp.ne.s32.totalorder %s21, %s22
    %p36 = scmp.eq.s32.totalorder %s14, 1
    %p37 = por %p35, %p36
    %p39 = scmp.ne.s32.totalorder %s22, %s38
    %p40 = scmp.eq.s32.totalorder %s14, 0
    %p41 = por %p39, %p40
    %s42 = ssub.s32 %s8, %s15
    %p43 = scmp.eq.s32.totalorder %s42, 0
    %s45 = sadd.s32 %s44, 1
    %s46 = scalar_select %p43, %s44, %s45
    %p49 = pneg %p43
    %p50 = scmp.eq.s32.totalorder %s8, 1
    %p51 = por %p49, %p50
    %p52 = scmp.ne.s32.totalorder %s44, %s47
    %p53 = scmp.eq.s32.totalorder %s8, 0
    %p54 = por %p52, %p53
    %p55 = scmp.ne.s32.totalorder %s44, %s47
    %p56 = scmp.eq.s32.totalorder %s13, 1
    %p57 = por %p55, %p56
    %p58 = scmp.ne.s32.totalorder %s47, %s48
    %p59 = scmp.eq.s32.totalorder %s13, 0
    %p60 = por %p58, %p59
    %p61 = scmp.ne.s32.totalorder %s47, %s48
    %p62 = scmp.eq.s32.totalorder %s14, 1
    %p63 = por %p61, %p62
    %p65 = scmp.ne.s32.totalorder %s48, %s64
    %p66 = scmp.eq.s32.totalorder %s14, 0
    %p67 = por %p65, %p66
    %s68 = ssub.s32 %s8, %s15
    %p69 = scmp.eq.s32.totalorder %s68, 0
    %s71 = sadd.s32 %s70, 1
    %s72 = scalar_select %p69, %s70, %s71
    %p75 = pneg %p69
    %p76 = scmp.eq.s32.totalorder %s8, 1
    %p77 = por %p75, %p76
    %p78 = scmp.ne.s32.totalorder %s70, %s73
    %p79 = scmp.eq.s32.totalorder %s8, 0
    %p80 = por %p78, %p79
    %p81 = scmp.ne.s32.totalorder %s70, %s73
    %p82 = scmp.eq.s32.totalorder %s13, 1
    %p83 = por %p81, %p82
    %p84 = scmp.ne.s32.totalorder %s73, %s74
    %p85 = scmp.eq.s32.totalorder %s13, 0
    %p86 = por %p84, %p85
    %p87 = scmp.ne.s32.totalorder %s73, %s74
    %p88 = scmp.eq.s32.totalorder %s14, 1
    %p89 = por %p87, %p88
    %p91 = scmp.ne.s32.totalorder %s74, %s90
    %p92 = scmp.eq.s32.totalorder %s14, 0
    %p93 = por %p91, %p92
    %p94 = scmp.le.s32.totalorder 1, %s8
    %p95 = scmp.lt.s32.totalorder %s8, 3
    %p96 = pnand %p94, %p95
    %p97 = pneg %p96
    // Predicated region
    $region9: #{_lambda_.10} parent=5 // pred_check
      _
    $region10: #{_lambda_.10} parent=5 // pred_check_branch
      %99 = sbr.rel (%p96) target = $region12
    $region11: #{_lambda_.10} parent=5 // pred_region
      %s100 = ssub.s32 %s8, 1
    $region12: #{_lambda_.10} parent=5 // pred_fallthru
      _
    %p101 = scmp.lt.s32.totalorder %s8, 2
    // Predicated region
    $region13: #{_lambda_.10} parent=5 // pred_check
      %p102 = pneg %p101
    $region14: #{_lambda_.10} parent=5 // pred_check_branch
      %104 = sbr.rel (%p102) target = $region16
    $region15: #{_lambda_.10} parent=5 // pred_region
      // Predicated region
      $region17: #{_lambda_.10} parent=15 // pred_check
        %p105 = pneg %p28
      $region18: #{_lambda_.10} parent=15 // pred_check_branch
        %107 = sbr.rel (%p105) target = $region20
      $region19: #{_lambda_.10} parent=15 // pred_region
        %p108 = scmp.lt.s32.totalorder %s8, 1
        %s109 = scalar_select %p108, %s8, 1
        %s110 = smul.addr %s109, 8
        %s111 = scalar_lea.vmem %s0, %s110
      $region20: #{_lambda_.10} parent=15 // pred_fallthru
        _
      // Predicated region
      $region21: #{_lambda_.10} parent=15 // pred_check
        %p112 = pneg %p54
      $region22: #{_lambda_.10} parent=15 // pred_check_branch
        %114 = sbr.rel (%p112) target = $region24
      $region23: #{_lambda_.10} parent=15 // pred_region
        %p115 = scmp.lt.s32.totalorder %s8, 1
        %s116 = scalar_select %p115, %s8, 1
        %s117 = smul.addr %s116, 2
        %s118 = smul.addr %s117, 8
        %s119 = scalar_lea.vmem %s1, %s118
      $region24: #{_lambda_.10} parent=15 // pred_fallthru
        _
    $region16: #{_lambda_.10} parent=5 // pred_fallthru
      _
    %p120 = scmp.le.s32.totalorder 1, %s8
    %p121 = scmp.lt.s32.totalorder %s8, 3
    %p122 = pnand %p120, %p121
    %p123 = pneg %p122
    // Predicated region
    $region25: #{_lambda_.10} parent=5 // pred_check
      _
    $region26: #{_lambda_.10} parent=5 // pred_check_branch
      %125 = sbr.rel (%p122) target = $region28
    $region27: #{_lambda_.10} parent=5 // pred_region
      %s126 = ssub.s32 %s8, 1
      %p127 = scmp.lt.s32.totalorder %s13, 1
      %s128 = scalar_select %p127, %s13, 1
      %s129 = smul.addr %s128, 8
      %s130 = scalar_lea.vmem %s0, %s129
      %p131 = pneg %p34
      %p132 = pneg %p31
      %p133 = scmp.lt.s32.totalorder %s13, 1
      %s134 = scalar_select %p133, %s13, 1
      %s135 = smul.addr %s134, 2
      %s136 = smul.addr %s135, 8
      %s137 = scalar_lea.vmem %s1, %s136
      %p138 = pneg %p60
      %p139 = pneg %p57
      %p140 = pneg %p86
      %p141 = pneg %p83
      %p142 = scmp.lt.s32.totalorder %s13, 1
      %s143 = scalar_select %p142, %s13, 1
      %s144 = smul.addr %s143, 8
      %s145 = scalar_lea.vmem %s2, %s144
      %p146 = scmp.lt.s32.totalorder %s13, 1
      %s147 = scalar_select %p146, %s13, 1
      %s148 = smul.addr %s147, 8
      %s149 = scalar_lea.vmem %s0, %s148
      %p150 = scmp.lt.s32.totalorder %s13, 1
      %s151 = scalar_select %p150, %s13, 1
      %s152 = smul.addr %s151, 2
      %s153 = smul.addr %s152, 8
      %s154 = scalar_lea.vmem %s1, %s153
      %p155 = scmp.lt.s32.totalorder %s13, 1
      %s156 = scalar_select %p155, %s13, 1
      %s157 = smul.addr %s156, 8
      %s158 = scalar_lea.vmem %s2, %s157
      %v159 = vld [vmem:[%s149] sm:$0xff]
      %v160 = vld [vmem:[%s154] sm:$0xff]
      %v161 = vld [vmem:[%s154 + $0x8] sm:$0xff]
      %vm162 = vcmask 64512
      %v164 = vsel %vm162, %v159, 0
      %v167 = vsel %vm162, %v160, 0
      %v170 = vsel %vm162, %v161, 0
      %172 = vmatprep.subr.mxu0 0.0
      %173 = vmatpush1.xpose.msra.mxu0 0.0
      %174 = vmatprep.subr.mxu0 0.0
      %175 = vmatpush1.xpose.msra.mxu0 0.0
      %176 = vmatprep.subr.mxu0 0.0
      %177 = vmatpush1.xpose.msra.mxu0 0.0
      %178 = vmatprep.subr.mxu0 0.0
      %179 = vmatpush1.xpose.msra.mxu0 0.0
      %180 = vmatprep.subr.mxu0 0.0
      %181 = vmatpush1.xpose.msra.mxu0 0.0
      %182 = vmatprep.subr.mxu0 0.0
      %183 = vmatpush1.xpose.msra.mxu0 0.0
      %184 = vmatprep.subr.mxu0 0.0
      %185 = vmatpush1.xpose.msra.mxu0 0.0
      %186 = vmatprep.subr.mxu0 0.0
      %187 = vmatpush1.xpose.msra.mxu0 0.0
      %188 = vmatprep.subr.mxu0 0.0
      %189 = vmatpush1.xpose.msra.mxu0 0.0
      %190 = vmatprep.subr.mxu0 0.0
      %191 = vmatpush1.xpose.msra.mxu0 0.0
      %192 = vmatprep.subr.mxu0 0.0
      %193 = vmatpush1.xpose.msra.mxu0 0.0
      %194 = vmatprep.subr.mxu0 0.0
      %195 = vmatpush1.xpose.msra.mxu0 0.0
      %196 = vmatprep.subr.mxu0 0.0
      %197 = vmatpush1.xpose.msra.mxu0 0.0
      %198 = vmatprep.subr.mxu0 0.0
      %199 = vmatpush1.xpose.msra.mxu0 0.0
      %200 = vmatprep.subr.mxu0 0.0
      %201 = vmatpush1.xpose.msra.mxu0 %v170
      %202 = vmatprep.subr.mxu0 0.0
      %203 = vmatpush1.xpose.msra.mxu0 %v167
      %204 = vmatprep.subr.mxu0 0.0
      %205 = vmatpush2.xpose.msra.mxu0 0.0
      %206 = vmatprep.subr.mxu0 0.0
      %207 = vmatpush2.xpose.msra.mxu0 0.0
      %208 = vmatprep.subr.mxu0 0.0
      %209 = vmatpush2.xpose.msra.mxu0 0.0
      %210 = vmatprep.subr.mxu0 0.0
      %211 = vmatpush2.xpose.msra.mxu0 0.0
      %212 = vmatprep.subr.mxu0 0.0
      %213 = vmatpush2.xpose.msra.mxu0 0.0
      %214 = vmatprep.subr.mxu0 0.0
      %215 = vmatpush2.xpose.msra.mxu0 0.0
      %216 = vmatprep.subr.mxu0 0.0
      %217 = vmatpush2.xpose.msra.mxu0 0.0
      %218 = vmatprep.subr.mxu0 0.0
      %219 = vmatpush2.xpose.msra.mxu0 0.0
      %220 = vmatprep.subr.mxu0 0.0
      %221 = vmatpush2.xpose.msra.mxu0 0.0
      %222 = vmatprep.subr.mxu0 0.0
      %223 = vmatpush2.xpose.msra.mxu0 0.0
      %224 = vmatprep.subr.mxu0 0.0
      %225 = vmatpush2.xpose.msra.mxu0 0.0
      %226 = vmatprep.subr.mxu0 0.0
      %227 = vmatpush2.xpose.msra.mxu0 0.0
      %228 = vmatprep.subr.mxu0 0.0
      %229 = vmatpush2.xpose.msra.mxu0 0.0
      %230 = vmatprep.subr.mxu0 0.0
      %231 = vmatpush2.xpose.msra.mxu0 0.0
      %232 = vmatprep.subr.mxu0 0.0
      %233 = vmatpush2.xpose.msra.mxu0 0.0
      %234 = vmatprep.subr.mxu0 0.0
      %235 = vmatpush2.xpose.msra.mxu0 0.0
      %236 = vmatprep.mubr.f32.mxu0 0.0
      %237 = vmatmul.mubr.f32.gmra.mxu0 %v164
      %v238 = vpop.f32.mrf.mxu0
      %v239 = vadd.f32 0.0, %v238
      %v240 = vpop.f32.mrf.mxu0
      %241 = vdwg.mxu0
      %vm242 = vcmask 130048
      %v243 = vsel %vm242, %v239, -inf
      %244 = vmax.xlane.f32.xlu0 %v243
      %v245 = vpop.xlane.xlu0 %244
      %v246 = vsub.f32 %v239, %v245
      %v247 = vmul.f32 %v246, 1.442695
      %v248 = vpow.pop %v247
      %v249 = vsel %vm242, %v248, 0.0
      %250 = vadd.xlane.f32.xlu0 %v249
      %v251 = vpop.xlane.xlu0 %250
      %252 = vrot.lane.b32.xlu0 %v160, 96
      %v253 = vpop.permute.xlu0 %252
      %254 = vrot.lane.b32.xlu0 %v161, 96
      %v255 = vpop.permute.xlu0 %254
      %v259 = vsel %vm242, %v248, 0
      %261 = vmatprep.subr.mxu0 0.0
      %262 = vmatpush1.msra.mxu0 0.0
      %263 = vmatprep.subr.mxu0 0.0
      %264 = vmatpush1.msra.mxu0 0.0
      %265 = vmatprep.subr.mxu0 0.0
      %266 = vmatpush1.msra.mxu0 0.0
      %267 = vmatprep.subr.mxu0 0.0
      %268 = vmatpush1.msra.mxu0 0.0
      %269 = vmatprep.subr.mxu0 0.0
      %270 = vmatpush1.msra.mxu0 0.0
      %271 = vmatprep.subr.mxu0 0.0
      %272 = vmatpush1.msra.mxu0 0.0
      %273 = vmatprep.subr.mxu0 0.0
      %274 = vmatpush1.msra.mxu0 0.0
      %275 = vmatprep.subr.mxu0 0.0
      %276 = vmatpush1.msra.mxu0 0.0
      %277 = vmatprep.subr.mxu0 0.0
      %278 = vmatpush1.msra.mxu0 0.0
      %279 = vmatprep.subr.mxu0 0.0
      %280 = vmatpush1.msra.mxu0 0.0
      %281 = vmatprep.subr.mxu0 0.0
      %282 = vmatpush1.msra.mxu0 0.0
      %283 = vmatprep.subr.mxu0 0.0
      %284 = vmatpush1.msra.mxu0 0.0
      %285 = vmatprep.subr.mxu0 0.0
      %286 = vmatpush1.msra.mxu0 0.0
      %287 = vmatprep.subr.mxu0 0.0
      %288 = vmatpush1.msra.mxu0 0.0
      %289 = vmatprep.subr.mxu0 0.0
      %290 = vmatpush1.msra.mxu0 %v255
      %291 = vmatprep.subr.mxu0 0.0
      %292 = vmatpush1.msra.mxu0 %v253
      %293 = vmatprep.subr.mxu0 0.0
      %294 = vmatpush2.msra.mxu0 0.0
      %295 = vmatprep.subr.mxu0 0.0
      %296 = vmatpush2.msra.mxu0 0.0
      %297 = vmatprep.subr.mxu0 0.0
      %298 = vmatpush2.msra.mxu0 0.0
      %299 = vmatprep.subr.mxu0 0.0
      %300 = vmatpush2.msra.mxu0 0.0
      %301 = vmatprep.subr.mxu0 0.0
      %302 = vmatpush2.msra.mxu0 0.0
      %303 = vmatprep.subr.mxu0 0.0
      %304 = vmatpush2.msra.mxu0 0.0
      %305 = vmatprep.subr.mxu0 0.0
      %306 = vmatpush2.msra.mxu0 0.0
      %307 = vmatprep.subr.mxu0 0.0
      %308 = vmatpush2.msra.mxu0 0.0
      %309 = vmatprep.subr.mxu0 0.0
      %310 = vmatpush2.msra.mxu0 0.0
      %311 = vmatprep.subr.mxu0 0.0
      %312 = vmatpush2.msra.mxu0 0.0
      %313 = vmatprep.subr.mxu0 0.0
      %314 = vmatpush2.msra.mxu0 0.0
      %315 = vmatprep.subr.mxu0 0.0
      %316 = vmatpush2.msra.mxu0 0.0
      %317 = vmatprep.subr.mxu0 0.0
      %318 = vmatpush2.msra.mxu0 0.0
      %319 = vmatprep.subr.mxu0 0.0
      %320 = vmatpush2.msra.mxu0 0.0
      %321 = vmatprep.subr.mxu0 0.0
      %322 = vmatpush2.msra.mxu0 0.0
      %323 = vmatprep.subr.mxu0 0.0
      %324 = vmatpush2.msra.mxu0 0.0
      %325 = vmatprep.mubr.f32.mxu0 0.0
      %326 = vmatmul.mubr.f32.gmra.mxu0 %v259
      %v327 = vpop.f32.mrf.mxu0
      %v328 = vadd.f32 0.0, %v327
      %v329 = vpop.f32.mrf.mxu0
      %330 = vdwg.mxu0
      %v331 = vrcp.pop %v251
      %v332 = vmul.f32 %v328, %v331
      %333 = vrot.lane.b32.xlu0 %v159, 120
      %v334 = vpop.permute.xlu0 %333
      %335 = vrot.lane.b32.xlu0 %v160, 120
      %v336 = vpop.permute.xlu0 %335
      %337 = vrot.lane.b32.xlu0 %v161, 120
      %v338 = vpop.permute.xlu0 %337
      %v339 = vsel %vm162, %v334, 0
      %v341 = vsel %vm162, %v336, 0
      %v343 = vsel %vm162, %v338, 0
      %345 = vmatprep.subr.mxu0 0.0
      %346 = vmatpush1.xpose.msra.mxu0 0.0
      %347 = vmatprep.subr.mxu0 0.0
      %348 = vmatpush1.xpose.msra.mxu0 0.0
      %349 = vmatprep.subr.mxu0 0.0
      %350 = vmatpush1.xpose.msra.mxu0 0.0
      %351 = vmatprep.subr.mxu0 0.0
      %352 = vmatpush1.xpose.msra.mxu0 0.0
      %353 = vmatprep.subr.mxu0 0.0
      %354 = vmatpush1.xpose.msra.mxu0 0.0
      %355 = vmatprep.subr.mxu0 0.0
      %356 = vmatpush1.xpose.msra.mxu0 0.0
      %357 = vmatprep.subr.mxu0 0.0
      %358 = vmatpush1.xpose.msra.mxu0 0.0
      %359 = vmatprep.subr.mxu0 0.0
      %360 = vmatpush1.xpose.msra.mxu0 0.0
      %361 = vmatprep.subr.mxu0 0.0
      %362 = vmatpush1.xpose.msra.mxu0 0.0
      %363 = vmatprep.subr.mxu0 0.0
      %364 = vmatpush1.xpose.msra.mxu0 0.0
      %365 = vmatprep.subr.mxu0 0.0
      %366 = vmatpush1.xpose.msra.mxu0 0.0
      %367 = vmatprep.subr.mxu0 0.0
      %368 = vmatpush1.xpose.msra.mxu0 0.0
      %369 = vmatprep.subr.mxu0 0.0
      %370 = vmatpush1.xpose.msra.mxu0 0.0
      %371 = vmatprep.subr.mxu0 0.0
      %372 = vmatpush1.xpose.msra.mxu0 0.0
      %373 = vmatprep.subr.mxu0 0.0
      %374 = vmatpush1.xpose.msra.mxu0 %v343
      %375 = vmatprep.subr.mxu0 0.0
      %376 = vmatpush1.xpose.msra.mxu0 %v341
      %377 = vmatprep.subr.mxu0 0.0
      %378 = vmatpush2.xpose.msra.mxu0 0.0
      %379 = vmatprep.subr.mxu0 0.0
      %380 = vmatpush2.xpose.msra.mxu0 0.0
      %381 = vmatprep.subr.mxu0 0.0
      %382 = vmatpush2.xpose.msra.mxu0 0.0
      %383 = vmatprep.subr.mxu0 0.0
      %384 = vmatpush2.xpose.msra.mxu0 0.0
      %385 = vmatprep.subr.mxu0 0.0
      %386 = vmatpush2.xpose.msra.mxu0 0.0
      %387 = vmatprep.subr.mxu0 0.0
      %388 = vmatpush2.xpose.msra.mxu0 0.0
      %389 = vmatprep.subr.mxu0 0.0
      %390 = vmatpush2.xpose.msra.mxu0 0.0
      %391 = vmatprep.subr.mxu0 0.0
      %392 = vmatpush2.xpose.msra.mxu0 0.0
      %393 = vmatprep.subr.mxu0 0.0
      %394 = vmatpush2.xpose.msra.mxu0 0.0
      %395 = vmatprep.subr.mxu0 0.0
      %396 = vmatpush2.xpose.msra.mxu0 0.0
      %397 = vmatprep.subr.mxu0 0.0
      %398 = vmatpush2.xpose.msra.mxu0 0.0
      %399 = vmatprep.subr.mxu0 0.0
      %400 = vmatpush2.xpose.msra.mxu0 0.0
      %401 = vmatprep.subr.mxu0 0.0
      %402 = vmatpush2.xpose.msra.mxu0 0.0
      %403 = vmatprep.subr.mxu0 0.0
      %404 = vmatpush2.xpose.msra.mxu0 0.0
      %405 = vmatprep.subr.mxu0 0.0
      %406 = vmatpush2.xpose.msra.mxu0 0.0
      %407 = vmatprep.subr.mxu0 0.0
      %408 = vmatpush2.xpose.msra.mxu0 0.0
      %409 = vmatprep.mubr.f32.mxu0 0.0
      %410 = vmatmul.mubr.f32.gmra.mxu0 %v339
      %v411 = vpop.f32.mrf.mxu0
      %v412 = vadd.f32 0.0, %v411
      %v413 = vpop.f32.mrf.mxu0
      %414 = vdwg.mxu0
      %v415 = vsel %vm242, %v412, -inf
      %416 = vmax.xlane.f32.xlu0 %v415
      %v417 = vpop.xlane.xlu0 %416
      %v418 = vsub.f32 %v412, %v417
      %v419 = vmul.f32 %v418, 1.442695
      %v420 = vpow.pop %v419
      %v421 = vsel %vm242, %v420, 0.0
      %422 = vadd.xlane.f32.xlu0 %v421
      %v423 = vpop.xlane.xlu0 %422
      %424 = vrot.lane.b32.xlu0 %v160, 88
      %v425 = vpop.permute.xlu0 %424
      %426 = vrot.lane.b32.xlu0 %v161, 88
      %v427 = vpop.permute.xlu0 %426
      %v431 = vsel %vm242, %v420, 0
      %433 = vmatprep.subr.mxu0 0.0
      %434 = vmatpush1.msra.mxu0 0.0
      %435 = vmatprep.subr.mxu0 0.0
      %436 = vmatpush1.msra.mxu0 0.0
      %437 = vmatprep.subr.mxu0 0.0
      %438 = vmatpush1.msra.mxu0 0.0
      %439 = vmatprep.subr.mxu0 0.0
      %440 = vmatpush1.msra.mxu0 0.0
      %441 = vmatprep.subr.mxu0 0.0
      %442 = vmatpush1.msra.mxu0 0.0
      %443 = vmatprep.subr.mxu0 0.0
      %444 = vmatpush1.msra.mxu0 0.0
      %445 = vmatprep.subr.mxu0 0.0
      %446 = vmatpush1.msra.mxu0 0.0
      %447 = vmatprep.subr.mxu0 0.0
      %448 = vmatpush1.msra.mxu0 0.0
      %449 = vmatprep.subr.mxu0 0.0
      %450 = vmatpush1.msra.mxu0 0.0
      %451 = vmatprep.subr.mxu0 0.0
      %452 = vmatpush1.msra.mxu0 0.0
      %453 = vmatprep.subr.mxu0 0.0
      %454 = vmatpush1.msra.mxu0 0.0
      %455 = vmatprep.subr.mxu0 0.0
      %456 = vmatpush1.msra.mxu0 0.0
      %457 = vmatprep.subr.mxu0 0.0
      %458 = vmatpush1.msra.mxu0 0.0
      %459 = vmatprep.subr.mxu0 0.0
      %460 = vmatpush1.msra.mxu0 0.0
      %461 = vmatprep.subr.mxu0 0.0
      %462 = vmatpush1.msra.mxu0 %v427
      %463 = vmatprep.subr.mxu0 0.0
      %464 = vmatpush1.msra.mxu0 %v425
      %465 = vmatprep.subr.mxu0 0.0
      %466 = vmatpush2.msra.mxu0 0.0
      %467 = vmatprep.subr.mxu0 0.0
      %468 = vmatpush2.msra.mxu0 0.0
      %469 = vmatprep.subr.mxu0 0.0
      %470 = vmatpush2.msra.mxu0 0.0
      %471 = vmatprep.subr.mxu0 0.0
      %472 = vmatpush2.msra.mxu0 0.0
      %473 = vmatprep.subr.mxu0 0.0
      %474 = vmatpush2.msra.mxu0 0.0
      %475 = vmatprep.subr.mxu0 0.0
      %476 = vmatpush2.msra.mxu0 0.0
      %477 = vmatprep.subr.mxu0 0.0
      %478 = vmatpush2.msra.mxu0 0.0
      %479 = vmatprep.subr.mxu0 0.0
      %480 = vmatpush2.msra.mxu0 0.0
      %481 = vmatprep.subr.mxu0 0.0
      %482 = vmatpush2.msra.mxu0 0.0
      %483 = vmatprep.subr.mxu0 0.0
      %484 = vmatpush2.msra.mxu0 0.0
      %485 = vmatprep.subr.mxu0 0.0
      %486 = vmatpush2.msra.mxu0 0.0
      %487 = vmatprep.subr.mxu0 0.0
      %488 = vmatpush2.msra.mxu0 0.0
      %489 = vmatprep.subr.mxu0 0.0
      %490 = vmatpush2.msra.mxu0 0.0
      %491 = vmatprep.subr.mxu0 0.0
      %492 = vmatpush2.msra.mxu0 0.0
      %493 = vmatprep.subr.mxu0 0.0
      %494 = vmatpush2.msra.mxu0 0.0
      %495 = vmatprep.subr.mxu0 0.0
      %496 = vmatpush2.msra.mxu0 0.0
      %497 = vmatprep.mubr.f32.mxu0 0.0
      %498 = vmatmul.mubr.f32.gmra.mxu0 %v431
      %v499 = vpop.f32.mrf.mxu0
      %v500 = vadd.f32 0.0, %v499
      %v501 = vpop.f32.mrf.mxu0
      %502 = vdwg.mxu0
      %v503 = vrcp.pop %v423
      %v504 = vmul.f32 %v500, %v503
      %505 = vrot.lane.b32.xlu0 %v159, 112
      %v506 = vpop.permute.xlu0 %505
      %507 = vrot.lane.b32.xlu0 %v160, 112
      %v508 = vpop.permute.xlu0 %507
      %509 = vrot.lane.b32.xlu0 %v161, 112
      %v510 = vpop.permute.xlu0 %509
      %v511 = vsel %vm162, %v506, 0
      %v513 = vsel %vm162, %v508, 0
      %v515 = vsel %vm162, %v510, 0
      %517 = vmatprep.subr.mxu0 0.0
      %518 = vmatpush1.xpose.msra.mxu0 0.0
      %519 = vmatprep.subr.mxu0 0.0
      %520 = vmatpush1.xpose.msra.mxu0 0.0
      %521 = vmatprep.subr.mxu0 0.0
      %522 = vmatpush1.xpose.msra.mxu0 0.0
      %523 = vmatprep.subr.mxu0 0.0
      %524 = vmatpush1.xpose.msra.mxu0 0.0
      %525 = vmatprep.subr.mxu0 0.0
      %526 = vmatpush1.xpose.msra.mxu0 0.0
      %527 = vmatprep.subr.mxu0 0.0
      %528 = vmatpush1.xpose.msra.mxu0 0.0
      %529 = vmatprep.subr.mxu0 0.0
      %530 = vmatpush1.xpose.msra.mxu0 0.0
      %531 = vmatprep.subr.mxu0 0.0
      %532 = vmatpush1.xpose.msra.mxu0 0.0
      %533 = vmatprep.subr.mxu0 0.0
      %534 = vmatpush1.xpose.msra.mxu0 0.0
      %535 = vmatprep.subr.mxu0 0.0
      %536 = vmatpush1.xpose.msra.mxu0 0.0
      %537 = vmatprep.subr.mxu0 0.0
      %538 = vmatpush1.xpose.msra.mxu0 0.0
      %539 = vmatprep.subr.mxu0 0.0
      %540 = vmatpush1.xpose.msra.mxu0 0.0
      %541 = vmatprep.subr.mxu0 0.0
      %542 = vmatpush1.xpose.msra.mxu0 0.0
      %543 = vmatprep.subr.mxu0 0.0
      %544 = vmatpush1.xpose.msra.mxu0 0.0
      %545 = vmatprep.subr.mxu0 0.0
      %546 = vmatpush1.xpose.msra.mxu0 %v515
      %547 = vmatprep.subr.mxu0 0.0
      %548 = vmatpush1.xpose.msra.mxu0 %v513
      %549 = vmatprep.subr.mxu0 0.0
      %550 = vmatpush2.xpose.msra.mxu0 0.0
      %551 = vmatprep.subr.mxu0 0.0
      %552 = vmatpush2.xpose.msra.mxu0 0.0
      %553 = vmatprep.subr.mxu0 0.0
      %554 = vmatpush2.xpose.msra.mxu0 0.0
      %555 = vmatprep.subr.mxu0 0.0
      %556 = vmatpush2.xpose.msra.mxu0 0.0
      %557 = vmatprep.subr.mxu0 0.0
      %558 = vmatpush2.xpose.msra.mxu0 0.0
      %559 = vmatprep.subr.mxu0 0.0
      %560 = vmatpush2.xpose.msra.mxu0 0.0
      %561 = vmatprep.subr.mxu0 0.0
      %562 = vmatpush2.xpose.msra.mxu0 0.0
      %563 = vmatprep.subr.mxu0 0.0
      %564 = vmatpush2.xpose.msra.mxu0 0.0
      %565 = vmatprep.subr.mxu0 0.0
      %566 = vmatpush2.xpose.msra.mxu0 0.0
      %567 = vmatprep.subr.mxu0 0.0
      %568 = vmatpush2.xpose.msra.mxu0 0.0
      %569 = vmatprep.subr.mxu0 0.0
      %570 = vmatpush2.xpose.msra.mxu0 0.0
      %571 = vmatprep.subr.mxu0 0.0
      %572 = vmatpush2.xpose.msra.mxu0 0.0
      %573 = vmatprep.subr.mxu0 0.0
      %574 = vmatpush2.xpose.msra.mxu0 0.0
      %575 = vmatprep.subr.mxu0 0.0
      %576 = vmatpush2.xpose.msra.mxu0 0.0
      %577 = vmatprep.subr.mxu0 0.0
      %578 = vmatpush2.xpose.msra.mxu0 0.0
      %579 = vmatprep.subr.mxu0 0.0
      %580 = vmatpush2.xpose.msra.mxu0 0.0
      %581 = vmatprep.mubr.f32.mxu0 0.0
      %582 = vmatmul.mubr.f32.gmra.mxu0 %v511
      %v583 = vpop.f32.mrf.mxu0
      %v584 = vadd.f32 0.0, %v583
      %v585 = vpop.f32.mrf.mxu0
      %586 = vdwg.mxu0
      %v587 = vsel %vm242, %v584, -inf
      %588 = vmax.xlane.f32.xlu0 %v587
      %v589 = vpop.xlane.xlu0 %588
      %v590 = vsub.f32 %v584, %v589
      %v591 = vmul.f32 %v590, 1.442695
      %v592 = vpow.pop %v591
      %v593 = vsel %vm242, %v592, 0.0
      %594 = vadd.xlane.f32.xlu0 %v593
      %v595 = vpop.xlane.xlu0 %594
      %596 = vrot.lane.b32.xlu0 %v160, 80
      %v597 = vpop.permute.xlu0 %596
      %598 = vrot.lane.b32.xlu0 %v161, 80
      %v599 = vpop.permute.xlu0 %598
      %v603 = vsel %vm242, %v592, 0
      %605 = vmatprep.subr.mxu0 0.0
      %606 = vmatpush1.msra.mxu0 0.0
      %607 = vmatprep.subr.mxu0 0.0
      %608 = vmatpush1.msra.mxu0 0.0
      %609 = vmatprep.subr.mxu0 0.0
      %610 = vmatpush1.msra.mxu0 0.0
      %611 = vmatprep.subr.mxu0 0.0
      %612 = vmatpush1.msra.mxu0 0.0
      %613 = vmatprep.subr.mxu0 0.0
      %614 = vmatpush1.msra.mxu0 0.0
      %615 = vmatprep.subr.mxu0 0.0
      %616 = vmatpush1.msra.mxu0 0.0
      %617 = vmatprep.subr.mxu0 0.0
      %618 = vmatpush1.msra.mxu0 0.0
      %619 = vmatprep.subr.mxu0 0.0
      %620 = vmatpush1.msra.mxu0 0.0
      %621 = vmatprep.subr.mxu0 0.0
      %622 = vmatpush1.msra.mxu0 0.0
      %623 = vmatprep.subr.mxu0 0.0
      %624 = vmatpush1.msra.mxu0 0.0
      %625 = vmatprep.subr.mxu0 0.0
      %626 = vmatpush1.msra.mxu0 0.0
      %627 = vmatprep.subr.mxu0 0.0
      %628 = vmatpush1.msra.mxu0 0.0
      %629 = vmatprep.subr.mxu0 0.0
      %630 = vmatpush1.msra.mxu0 0.0
      %631 = vmatprep.subr.mxu0 0.0
      %632 = vmatpush1.msra.mxu0 0.0
      %633 = vmatprep.subr.mxu0 0.0
      %634 = vmatpush1.msra.mxu0 %v599
      %635 = vmatprep.subr.mxu0 0.0
      %636 = vmatpush1.msra.mxu0 %v597
      %637 = vmatprep.subr.mxu0 0.0
      %638 = vmatpush2.msra.mxu0 0.0
      %639 = vmatprep.subr.mxu0 0.0
      %640 = vmatpush2.msra.mxu0 0.0
      %641 = vmatprep.subr.mxu0 0.0
      %642 = vmatpush2.msra.mxu0 0.0
      %643 = vmatprep.subr.mxu0 0.0
      %644 = vmatpush2.msra.mxu0 0.0
      %645 = vmatprep.subr.mxu0 0.0
      %646 = vmatpush2.msra.mxu0 0.0
      %647 = vmatprep.subr.mxu0 0.0
      %648 = vmatpush2.msra.mxu0 0.0
      %649 = vmatprep.subr.mxu0 0.0
      %650 = vmatpush2.msra.mxu0 0.0
      %651 = vmatprep.subr.mxu0 0.0
      %652 = vmatpush2.msra.mxu0 0.0
      %653 = vmatprep.subr.mxu0 0.0
      %654 = vmatpush2.msra.mxu0 0.0
      %655 = vmatprep.subr.mxu0 0.0
      %656 = vmatpush2.msra.mxu0 0.0
      %657 = vmatprep.subr.mxu0 0.0
      %658 = vmatpush2.msra.mxu0 0.0
      %659 = vmatprep.subr.mxu0 0.0
      %660 = vmatpush2.msra.mxu0 0.0
      %661 = vmatprep.subr.mxu0 0.0
      %662 = vmatpush2.msra.mxu0 0.0
      %663 = vmatprep.subr.mxu0 0.0
      %664 = vmatpush2.msra.mxu0 0.0
      %665 = vmatprep.subr.mxu0 0.0
      %666 = vmatpush2.msra.mxu0 0.0
      %667 = vmatprep.subr.mxu0 0.0
      %668 = vmatpush2.msra.mxu0 0.0
      %669 = vmatprep.mubr.f32.mxu0 0.0
      %670 = vmatmul.mubr.f32.gmra.mxu0 %v603
      %v671 = vpop.f32.mrf.mxu0
      %v672 = vadd.f32 0.0, %v671
      %v673 = vpop.f32.mrf.mxu0
      %674 = vdwg.mxu0
      %v675 = vrcp.pop %v595
      %v676 = vmul.f32 %v672, %v675
      %677 = vrot.lane.b32.xlu0 %v159, 104
      %v678 = vpop.permute.xlu0 %677
      %679 = vrot.lane.b32.xlu0 %v160, 104
      %v680 = vpop.permute.xlu0 %679
      %681 = vrot.lane.b32.xlu0 %v161, 104
      %v682 = vpop.permute.xlu0 %681
      %v683 = vsel %vm162, %v678, 0
      %v685 = vsel %vm162, %v680, 0
      %v687 = vsel %vm162, %v682, 0
      %689 = vmatprep.subr.mxu0 0.0
      %690 = vmatpush1.xpose.msra.mxu0 0.0
      %691 = vmatprep.subr.mxu0 0.0
      %692 = vmatpush1.xpose.msra.mxu0 0.0
      %693 = vmatprep.subr.mxu0 0.0
      %694 = vmatpush1.xpose.msra.mxu0 0.0
      %695 = vmatprep.subr.mxu0 0.0
      %696 = vmatpush1.xpose.msra.mxu0 0.0
      %697 = vmatprep.subr.mxu0 0.0
      %698 = vmatpush1.xpose.msra.mxu0 0.0
      %699 = vmatprep.subr.mxu0 0.0
      %700 = vmatpush1.xpose.msra.mxu0 0.0
      %701 = vmatprep.subr.mxu0 0.0
      %702 = vmatpush1.xpose.msra.mxu0 0.0
      %703 = vmatprep.subr.mxu0 0.0
      %704 = vmatpush1.xpose.msra.mxu0 0.0
      %705 = vmatprep.subr.mxu0 0.0
      %706 = vmatpush1.xpose.msra.mxu0 0.0
      %707 = vmatprep.subr.mxu0 0.0
      %708 = vmatpush1.xpose.msra.mxu0 0.0
      %709 = vmatprep.subr.mxu0 0.0
      %710 = vmatpush1.xpose.msra.mxu0 0.0
      %711 = vmatprep.subr.mxu0 0.0
      %712 = vmatpush1.xpose.msra.mxu0 0.0
      %713 = vmatprep.subr.mxu0 0.0
      %714 = vmatpush1.xpose.msra.mxu0 0.0
      %715 = vmatprep.subr.mxu0 0.0
      %716 = vmatpush1.xpose.msra.mxu0 0.0
      %717 = vmatprep.subr.mxu0 0.0
      %718 = vmatpush1.xpose.msra.mxu0 %v687
      %719 = vmatprep.subr.mxu0 0.0
      %720 = vmatpush1.xpose.msra.mxu0 %v685
      %721 = vmatprep.subr.mxu0 0.0
      %722 = vmatpush2.xpose.msra.mxu0 0.0
      %723 = vmatprep.subr.mxu0 0.0
      %724 = vmatpush2.xpose.msra.mxu0 0.0
      %725 = vmatprep.subr.mxu0 0.0
      %726 = vmatpush2.xpose.msra.mxu0 0.0
      %727 = vmatprep.subr.mxu0 0.0
      %728 = vmatpush2.xpose.msra.mxu0 0.0
      %729 = vmatprep.subr.mxu0 0.0
      %730 = vmatpush2.xpose.msra.mxu0 0.0
      %731 = vmatprep.subr.mxu0 0.0
      %732 = vmatpush2.xpose.msra.mxu0 0.0
      %733 = vmatprep.subr.mxu0 0.0
      %734 = vmatpush2.xpose.msra.mxu0 0.0
      %735 = vmatprep.subr.mxu0 0.0
      %736 = vmatpush2.xpose.msra.mxu0 0.0
      %737 = vmatprep.subr.mxu0 0.0
      %738 = vmatpush2.xpose.msra.mxu0 0.0
      %739 = vmatprep.subr.mxu0 0.0
      %740 = vmatpush2.xpose.msra.mxu0 0.0
      %741 = vmatprep.subr.mxu0 0.0
      %742 = vmatpush2.xpose.msra.mxu0 0.0
      %743 = vmatprep.subr.mxu0 0.0
      %744 = vmatpush2.xpose.msra.mxu0 0.0
      %745 = vmatprep.subr.mxu0 0.0
      %746 = vmatpush2.xpose.msra.mxu0 0.0
      %747 = vmatprep.subr.mxu0 0.0
      %748 = vmatpush2.xpose.msra.mxu0 0.0
      %749 = vmatprep.subr.mxu0 0.0
      %750 = vmatpush2.xpose.msra.mxu0 0.0
      %751 = vmatprep.subr.mxu0 0.0
      %752 = vmatpush2.xpose.msra.mxu0 0.0
      %753 = vmatprep.mubr.f32.mxu0 0.0
      %754 = vmatmul.mubr.f32.gmra.mxu0 %v683
      %v755 = vpop.f32.mrf.mxu0
      %v756 = vadd.f32 0.0, %v755
      %v757 = vpop.f32.mrf.mxu0
      %758 = vdwg.mxu0
      %v759 = vsel %vm242, %v756, -inf
      %760 = vmax.xlane.f32.xlu0 %v759
      %v761 = vpop.xlane.xlu0 %760
      %v762 = vsub.f32 %v756, %v761
      %v763 = vmul.f32 %v762, 1.442695
      %v764 = vpow.pop %v763
      %v765 = vsel %vm242, %v764, 0.0
      %766 = vadd.xlane.f32.xlu0 %v765
      %v767 = vpop.xlane.xlu0 %766
      %768 = vrot.lane.b32.xlu0 %v160, 72
      %v769 = vpop.permute.xlu0 %768
      %770 = vrot.lane.b32.xlu0 %v161, 72
      %v771 = vpop.permute.xlu0 %770
      %v775 = vsel %vm242, %v764, 0
      %777 = vmatprep.subr.mxu0 0.0
      %778 = vmatpush1.msra.mxu0 0.0
      %779 = vmatprep.subr.mxu0 0.0
      %780 = vmatpush1.msra.mxu0 0.0
      %781 = vmatprep.subr.mxu0 0.0
      %782 = vmatpush1.msra.mxu0 0.0
      %783 = vmatprep.subr.mxu0 0.0
      %784 = vmatpush1.msra.mxu0 0.0
      %785 = vmatprep.subr.mxu0 0.0
      %786 = vmatpush1.msra.mxu0 0.0
      %787 = vmatprep.subr.mxu0 0.0
      %788 = vmatpush1.msra.mxu0 0.0
      %789 = vmatprep.subr.mxu0 0.0
      %790 = vmatpush1.msra.mxu0 0.0
      %791 = vmatprep.subr.mxu0 0.0
      %792 = vmatpush1.msra.mxu0 0.0
      %793 = vmatprep.subr.mxu0 0.0
      %794 = vmatpush1.msra.mxu0 0.0
      %795 = vmatprep.subr.mxu0 0.0
      %796 = vmatpush1.msra.mxu0 0.0
      %797 = vmatprep.subr.mxu0 0.0
      %798 = vmatpush1.msra.mxu0 0.0
      %799 = vmatprep.subr.mxu0 0.0
      %800 = vmatpush1.msra.mxu0 0.0
      %801 = vmatprep.subr.mxu0 0.0
      %802 = vmatpush1.msra.mxu0 0.0
      %803 = vmatprep.subr.mxu0 0.0
      %804 = vmatpush1.msra.mxu0 0.0
      %805 = vmatprep.subr.mxu0 0.0
      %806 = vmatpush1.msra.mxu0 %v771
      %807 = vmatprep.subr.mxu0 0.0
      %808 = vmatpush1.msra.mxu0 %v769
      %809 = vmatprep.subr.mxu0 0.0
      %810 = vmatpush2.msra.mxu0 0.0
      %811 = vmatprep.subr.mxu0 0.0
      %812 = vmatpush2.msra.mxu0 0.0
      %813 = vmatprep.subr.mxu0 0.0
      %814 = vmatpush2.msra.mxu0 0.0
      %815 = vmatprep.subr.mxu0 0.0
      %816 = vmatpush2.msra.mxu0 0.0
      %817 = vmatprep.subr.mxu0 0.0
      %818 = vmatpush2.msra.mxu0 0.0
      %819 = vmatprep.subr.mxu0 0.0
      %820 = vmatpush2.msra.mxu0 0.0
      %821 = vmatprep.subr.mxu0 0.0
      %822 = vmatpush2.msra.mxu0 0.0
      %823 = vmatprep.subr.mxu0 0.0
      %824 = vmatpush2.msra.mxu0 0.0
      %825 = vmatprep.subr.mxu0 0.0
      %826 = vmatpush2.msra.mxu0 0.0
      %827 = vmatprep.subr.mxu0 0.0
      %828 = vmatpush2.msra.mxu0 0.0
      %829 = vmatprep.subr.mxu0 0.0
      %830 = vmatpush2.msra.mxu0 0.0
      %831 = vmatprep.subr.mxu0 0.0
      %832 = vmatpush2.msra.mxu0 0.0
      %833 = vmatprep.subr.mxu0 0.0
      %834 = vmatpush2.msra.mxu0 0.0
      %835 = vmatprep.subr.mxu0 0.0
      %836 = vmatpush2.msra.mxu0 0.0
      %837 = vmatprep.subr.mxu0 0.0
      %838 = vmatpush2.msra.mxu0 0.0
      %839 = vmatprep.subr.mxu0 0.0
      %840 = vmatpush2.msra.mxu0 0.0
      %841 = vmatprep.mubr.f32.mxu0 0.0
      %842 = vmatmul.mubr.f32.gmra.mxu0 %v775
      %v843 = vpop.f32.mrf.mxu0
      %v844 = vadd.f32 0.0, %v843
      %v845 = vpop.f32.mrf.mxu0
      %846 = vdwg.mxu0
      %v847 = vrcp.pop %v767
      %v848 = vmul.f32 %v844, %v847
      %850 = vrot.lane.b32.xlu0 %v504, 8
      %v851 = vpop.permute.xlu0 %850
      %854 = vrot.lane.b32.xlu0 %v676, 16
      %v855 = vpop.permute.xlu0 %854
      %858 = vrot.lane.b32.xlu0 %v848, 24
      %v859 = vpop.permute.xlu0 %858
      %v861 = vsel %vm162, %v332, %v851
      %v862 = vsel %vm242, %v861, %v855
      %vm863 = vcmask 195584
      %v864 = vsel %vm863, %v862, %v859
      %vm865 = vcmask 261120
      %866 = vst.msk [vmem:[%s158] sm:$0xff] %vm865, %v864
      %p867 = scmp.lt.s32.totalorder %s13, 1
      %s868 = scalar_select %p867, %s13, 1
      %s869 = smul.addr %s868, 8
      %s870 = scalar_lea.vmem %s2, %s869
      // Predicated region
      $region29: #{_lambda_.10} parent=27 // pred_check
        %p871 = pneg %p83
      $region30: #{_lambda_.10} parent=27 // pred_check_branch
        %873 = sbr.rel (%p871) target = $region32
      $region31: #{_lambda_.10} parent=27 // pred_region
        _
      $region32: #{_lambda_.10} parent=27 // pred_fallthru
        _
    $region28: #{_lambda_.10} parent=5 // pred_fallthru
      _
    %p874 = scmp.le.s32.totalorder 2, %s8
    // Predicated region
    $region33: #{_lambda_.10} parent=5 // pred_check
      %p875 = pneg %p874
    $region34: #{_lambda_.10} parent=5 // pred_check_branch
      %877 = sbr.rel (%p875) target = $region36
    $region35: #{_lambda_.10} parent=5 // pred_region
      %s878 = ssub.s32 %s8, 2
      // Predicated region
      $region37: #{_lambda_.10} parent=35 // pred_check
        %p879 = pneg %p89
      $region38: #{_lambda_.10} parent=35 // pred_check_branch
        %881 = sbr.rel (%p879) target = $region40
      $region39: #{_lambda_.10} parent=35 // pred_region
        %p882 = scmp.lt.s32.totalorder %s14, 1
        %s883 = scalar_select %p882, %s14, 1
        %s884 = smul.addr %s883, 8
        %s885 = scalar_lea.vmem %s2, %s884
      $region40: #{_lambda_.10} parent=35 // pred_fallthru
        _
    $region36: #{_lambda_.10} parent=5 // pred_fallthru
      _
  $region6: #{_lambda_.10} parent=0 // loop_footer
    %s12 = sadd.s32 1, %s8
  $region7: #{_lambda_.10} parent=0 // loop_footer_branch
    %7 = sbr.rel target = $region3
  $region8: #{_lambda_.10} parent=0 // loop_exit
    _

// kernel: _lambda_.12
$region0: #{_lambda_.12}
  #allocation0 [shape = 'u32[]', space=smem, size = 0x4, offset = 0x4, fixed_abs, tag = 'smem constant byte address 0x4 - core index']
  #allocation1 [shape = 'u32[144,128]{1,0:T(1,128)}', space=vmem, size = 0x12000, scoped, tag = 'internal scratch']
  %s0 = inlined_call_operand.vmem [shape: f32[16,32], index: 0, kind: input, shape index: {}]
  %s1 = inlined_call_operand.vmem [shape: f32[32,96], index: 1, kind: input, shape index: {}]
  %s2 = inlined_call_operand.vmem [shape: f32[1,96], index: 2, kind: input, shape index: {}]
  %s3 = inlined_call_operand.vmem [shape: f32[16,96], index: 3, kind: output, shape index: {}]
  %s4 = sld [smem:[#allocation0]]
  $region45: #{_lambda_.12} parent=0
    _
  %s6 = ssub.s32 1, %s4
  %s7 = scalar_select 0, %s6, %s4
  loop: start=0, step=1, limit=4
  $region2: #{_lambda_.12} parent=0 // loop_pre_header
    _
  $region3: #{_lambda_.12} parent=0 // loop_header
    %s9 = sphi 0, %s13
    %p10 = scmp.ge.s32.totalorder %s9, 4
    %s19 = sphi 0, %s21
    %s22 = sphi 0, %s19
    %s23 = sphi 0, %s22
    %s39 = sphi 0, %s23
    %s43 = sphi 0, %s43
    %s45 = sphi 0, %s43
    %s46 = sphi 0, %s45
    %s60 = sphi 0, %s46
    %s64 = sphi 0, %s64
    %s66 = sphi 0, %s64
    %s67 = sphi 0, %s66
    %s81 = sphi 0, %s67
    %s87 = sphi 0, %s89
    %s90 = sphi 0, %s87
    %s91 = sphi 0, %s90
    %s107 = sphi 0, %s91
  $region4: #{_lambda_.12} parent=0 // loop_header_branch
    %12 = sbr.rel (%p10) target = $region8
  $region5: #{_lambda_.12} parent=0 // loop_body
    %s14 = ssub.s32 %s9, 1
    %s15 = ssub.s32 %s9, 2
    %s16 = sadd.s32 %s9, 1
    %s17 = ssub.s32 %s9, %s16
    %p18 = scmp.eq.s32.totalorder %s17, 0
    %s20 = sadd.s32 %s19, 1
    %s21 = scalar_select %p18, %s19, %s20
    %p24 = pneg %p18
    %p25 = scmp.eq.s32.totalorder %s9, 1
    %p26 = por %p24, %p25
    %p27 = scmp.ne.s32.totalorder %s19, %s22
    %p28 = scmp.eq.s32.totalorder %s9, 0
    %p29 = por %p27, %p28
    %p30 = scmp.ne.s32.totalorder %s19, %s22
    %p31 = scmp.eq.s32.totalorder %s14, 1
    %p32 = por %p30, %p31
    %p33 = scmp.ne.s32.totalorder %s22, %s23
    %p34 = scmp.eq.s32.totalorder %s14, 0
    %p35 = por %p33, %p34
    %p36 = scmp.ne.s32.totalorder %s22, %s23
    %p37 = scmp.eq.s32.totalorder %s15, 1
    %p38 = por %p36, %p37
    %p40 = scmp.ne.s32.totalorder %s23, %s39
    %p41 = scmp.eq.s32.totalorder %s15, 0
    %p42 = por %p40, %p41
    %s44 = sadd.s32 %s43, 1
    %p47 = scmp.eq.s32.totalorder %s9, 1
    %p48 = scmp.ne.s32.totalorder %s43, %s45
    %p49 = scmp.eq.s32.totalorder %s9, 0
    %p50 = por %p48, %p49
    %p51 = scmp.ne.s32.totalorder %s43, %s45
    %p52 = scmp.eq.s32.totalorder %s14, 1
    %p53 = por %p51, %p52
    %p54 = scmp.ne.s32.totalorder %s45, %s46
    %p55 = scmp.eq.s32.totalorder %s14, 0
    %p56 = por %p54, %p55
    %p57 = scmp.ne.s32.totalorder %s45, %s46
    %p58 = scmp.eq.s32.totalorder %s15, 1
    %p59 = por %p57, %p58
    %p61 = scmp.ne.s32.totalorder %s46, %s60
    %p62 = scmp.eq.s32.totalorder %s15, 0
    %p63 = por %p61, %p62
    %s65 = sadd.s32 %s64, 1
    %p68 = scmp.eq.s32.totalorder %s9, 1
    %p69 = scmp.ne.s32.totalorder %s64, %s66
    %p70 = scmp.eq.s32.totalorder %s9, 0
    %p71 = por %p69, %p70
    %p72 = scmp.ne.s32.totalorder %s64, %s66
    %p73 = scmp.eq.s32.totalorder %s14, 1
    %p74 = por %p72, %p73
    %p75 = scmp.ne.s32.totalorder %s66, %s67
    %p76 = scmp.eq.s32.totalorder %s14, 0
    %p77 = por %p75, %p76
    %p78 = scmp.ne.s32.totalorder %s66, %s67
    %p79 = scmp.eq.s32.totalorder %s15, 1
    %p80 = por %p78, %p79
    %p82 = scmp.ne.s32.totalorder %s67, %s81
    %p83 = scmp.eq.s32.totalorder %s15, 0
    %p84 = por %p82, %p83
    %s85 = ssub.s32 %s9, %s16
    %p86 = scmp.eq.s32.totalorder %s85, 0
    %s88 = sadd.s32 %s87, 1
    %s89 = scalar_select %p86, %s87, %s88
    %p92 = pneg %p86
    %p93 = scmp.eq.s32.totalorder %s9, 1
    %p94 = por %p92, %p93
    %p95 = scmp.ne.s32.totalorder %s87, %s90
    %p96 = scmp.eq.s32.totalorder %s9, 0
    %p97 = por %p95, %p96
    %p98 = scmp.ne.s32.totalorder %s87, %s90
    %p99 = scmp.eq.s32.totalorder %s14, 1
    %p100 = por %p98, %p99
    %p101 = scmp.ne.s32.totalorder %s90, %s91
    %p102 = scmp.eq.s32.totalorder %s14, 0
    %p103 = por %p101, %p102
    %p104 = scmp.ne.s32.totalorder %s90, %s91
    %p105 = scmp.eq.s32.totalorder %s15, 1
    %p106 = por %p104, %p105
    %p108 = scmp.ne.s32.totalorder %s91, %s107
    %p109 = scmp.eq.s32.totalorder %s15, 0
    %p110 = por %p108, %p109
    %p111 = scmp.le.s32.totalorder 1, %s9
    %p112 = scmp.lt.s32.totalorder %s9, 3
    %p113 = pnand %p111, %p112
    %p114 = pneg %p113
    // Predicated region
    $region9: #{_lambda_.12} parent=5 // pred_check
      _
    $region10: #{_lambda_.12} parent=5 // pred_check_branch
      %116 = sbr.rel (%p113) target = $region12
    $region11: #{_lambda_.12} parent=5 // pred_region
      %s117 = ssub.s32 %s9, 1
      // Predicated region
      $region13: #{_lambda_.12} parent=11 // pred_check
        %p118 = pneg %p56
      $region14: #{_lambda_.12} parent=11 // pred_check_branch
        %120 = sbr.rel (%p118) target = $region16
      $region15: #{_lambda_.12} parent=11 // pred_region
        _
      $region16: #{_lambda_.12} parent=11 // pred_fallthru
        _
      // Predicated region
      $region17: #{_lambda_.12} parent=11 // pred_check
        %p121 = pneg %p77
      $region18: #{_lambda_.12} parent=11 // pred_check_branch
        %123 = sbr.rel (%p121) target = $region20
      $region19: #{_lambda_.12} parent=11 // pred_region
        _
      $region20: #{_lambda_.12} parent=11 // pred_fallthru
        _
    $region12: #{_lambda_.12} parent=5 // pred_fallthru
      _
    %p124 = scmp.lt.s32.totalorder %s9, 2
    // Predicated region
    $region21: #{_lambda_.12} parent=5 // pred_check
      %p125 = pneg %p124
    $region22: #{_lambda_.12} parent=5 // pred_check_branch
      %127 = sbr.rel (%p125) target = $region24
    $region23: #{_lambda_.12} parent=5 // pred_region
      // Predicated region
      $region25: #{_lambda_.12} parent=23 // pred_check
        %p128 = pneg %p29
      $region26: #{_lambda_.12} parent=23 // pred_check_branch
        %130 = sbr.rel (%p128) target = $region28
      $region27: #{_lambda_.12} parent=23 // pred_region
        %p131 = scmp.lt.s32.totalorder %s9, 1
        %s132 = scalar_select %p131, %s9, 1
        %s133 = smul.addr %s132, 8
        %s134 = scalar_lea.vmem %s0, %s133
      $region28: #{_lambda_.12} parent=23 // pred_fallthru
        _
    $region24: #{_lambda_.12} parent=5 // pred_fallthru
      _
    %p135 = scmp.le.s32.totalorder 1, %s9
    %p136 = scmp.lt.s32.totalorder %s9, 3
    %p137 = pnand %p135, %p136
    %p138 = pneg %p137
    // Predicated region
    $region29: #{_lambda_.12} parent=5 // pred_check
      _
    $region30: #{_lambda_.12} parent=5 // pred_check_branch
      %140 = sbr.rel (%p137) target = $region32
    $region31: #{_lambda_.12} parent=5 // pred_region
      %s141 = ssub.s32 %s9, 1
      %p142 = scmp.lt.s32.totalorder %s14, 1
      %s143 = scalar_select %p142, %s14, 1
      %s144 = smul.addr %s143, 8
      %s145 = scalar_lea.vmem %s0, %s144
      %p146 = pneg %p35
      %p147 = pneg %p32
      %p148 = pneg %p56
      %p149 = pneg %p53
      %p150 = pneg %p77
      %p151 = pneg %p74
      %p152 = pneg %p103
      %p153 = pneg %p100
      %p154 = scmp.lt.s32.totalorder %s14, 1
      %s155 = scalar_select %p154, %s14, 1
      %s156 = smul.addr %s155, 8
      %s157 = scalar_lea.vmem %s3, %s156
      %p158 = scmp.lt.s32.totalorder %s14, 1
      %s159 = scalar_select %p158, %s14, 1
      %s160 = smul.addr %s159, 8
      %s161 = scalar_lea.vmem %s0, %s160
      %p162 = scmp.lt.s32.totalorder %s14, 1
      %s163 = scalar_select %p162, %s14, 1
      %s164 = smul.addr %s163, 8
      %s165 = scalar_lea.vmem %s3, %s164
      %v166 = vld [vmem:[%s161] sm:$0xff]
      %v167 = vld [vmem:[%s1] sm:$0xff]
      %v168 = vld [vmem:[%s1 + $0x8] sm:$0xff]
      %v169 = vld [vmem:[%s1 + $0x10] sm:$0xff]
      %v170 = vld [vmem:[%s1 + $0x18] sm:$0xff]
      %v171 = vld [vmem:[%s2] sm:$0x1]
      %v173 = vlaneseq
      %v174 = vshrl.u32 %v173, 7
      %v175 = vsub.s32 0, %v174
      %v176 = vrot.slane %v171, %v175
      %vm178 = vcmask 261120
      %v180 = vsel %vm178, %v166, 0
      %182 = vmatprep.subr.mxu0 0.0
      %183 = vmatpush1.msra.mxu0 0.0
      %184 = vmatprep.subr.mxu0 0.0
      %185 = vmatpush1.msra.mxu0 0.0
      %186 = vmatprep.subr.mxu0 0.0
      %187 = vmatpush1.msra.mxu0 0.0
      %188 = vmatprep.subr.mxu0 0.0
      %189 = vmatpush1.msra.mxu0 0.0
      %190 = vmatprep.subr.mxu0 0.0
      %191 = vmatpush1.msra.mxu0 0.0
      %192 = vmatprep.subr.mxu0 0.0
      %193 = vmatpush1.msra.mxu0 0.0
      %194 = vmatprep.subr.mxu0 0.0
      %195 = vmatpush1.msra.mxu0 0.0
      %196 = vmatprep.subr.mxu0 0.0
      %197 = vmatpush1.msra.mxu0 0.0
      %198 = vmatprep.subr.mxu0 0.0
      %199 = vmatpush1.msra.mxu0 0.0
      %200 = vmatprep.subr.mxu0 0.0
      %201 = vmatpush1.msra.mxu0 0.0
      %202 = vmatprep.subr.mxu0 0.0
      %203 = vmatpush1.msra.mxu0 0.0
      %204 = vmatprep.subr.mxu0 0.0
      %205 = vmatpush1.msra.mxu0 0.0
      %206 = vmatprep.subr.mxu0 0.0
      %207 = vmatpush1.msra.mxu0 %v170
      %208 = vmatprep.subr.mxu0 0.0
      %209 = vmatpush1.msra.mxu0 %v169
      %210 = vmatprep.subr.mxu0 0.0
      %211 = vmatpush1.msra.mxu0 %v168
      %212 = vmatprep.subr.mxu0 0.0
      %213 = vmatpush1.msra.mxu0 %v167
      %214 = vmatprep.subr.mxu0 0.0
      %215 = vmatpush2.msra.mxu0 0.0
      %216 = vmatprep.subr.mxu0 0.0
      %217 = vmatpush2.msra.mxu0 0.0
      %218 = vmatprep.subr.mxu0 0.0
      %219 = vmatpush2.msra.mxu0 0.0
      %220 = vmatprep.subr.mxu0 0.0
      %221 = vmatpush2.msra.mxu0 0.0
      %222 = vmatprep.subr.mxu0 0.0
      %223 = vmatpush2.msra.mxu0 0.0
      %224 = vmatprep.subr.mxu0 0.0
      %225 = vmatpush2.msra.mxu0 0.0
      %226 = vmatprep.subr.mxu0 0.0
      %227 = vmatpush2.msra.mxu0 0.0
      %228 = vmatprep.subr.mxu0 0.0
      %229 = vmatpush2.msra.mxu0 0.0
      %230 = vmatprep.subr.mxu0 0.0
      %231 = vmatpush2.msra.mxu0 0.0
      %232 = vmatprep.subr.mxu0 0.0
      %233 = vmatpush2.msra.mxu0 0.0
      %234 = vmatprep.subr.mxu0 0.0
      %235 = vmatpush2.msra.mxu0 0.0
      %236 = vmatprep.subr.mxu0 0.0
      %237 = vmatpush2.msra.mxu0 0.0
      %238 = vmatprep.subr.mxu0 0.0
      %239 = vmatpush2.msra.mxu0 0.0
      %240 = vmatprep.subr.mxu0 0.0
      %241 = vmatpush2.msra.mxu0 0.0
      %242 = vmatprep.subr.mxu0 0.0
      %243 = vmatpush2.msra.mxu0 0.0
      %244 = vmatprep.subr.mxu0 0.0
      %245 = vmatpush2.msra.mxu0 0.0
      %246 = vmatprep.mubr.f32.mxu0 0.0
      %247 = vmatmul.mubr.f32.gmra.mxu0 %v180
      %v248 = vpop.f32.mrf.mxu0
      %v249 = vadd.f32 %v176, %v248
      %v250 = vpop.f32.mrf.mxu0
      %251 = vdwg.mxu0
      %vm252 = vcmask 785408
      %253 = vst.msk [vmem:[%s165] sm:$0xff] %vm252, %v249
      %p254 = scmp.lt.s32.totalorder %s14, 1
      %s255 = scalar_select %p254, %s14, 1
      %s256 = smul.addr %s255, 8
      %s257 = scalar_lea.vmem %s3, %s256
      // Predicated region
      $region33: #{_lambda_.12} parent=31 // pred_check
        %p258 = pneg %p100
      $region34: #{_lambda_.12} parent=31 // pred_check_branch
        %260 = sbr.rel (%p258) target = $region36
      $region35: #{_lambda_.12} parent=31 // pred_region
        _
      $region36: #{_lambda_.12} parent=31 // pred_fallthru
        _
    $region32: #{_lambda_.12} parent=5 // pred_fallthru
      _
    %p261 = scmp.le.s32.totalorder 2, %s9
    // Predicated region
    $region37: #{_lambda_.12} parent=5 // pred_check
      %p262 = pneg %p261
    $region38: #{_lambda_.12} parent=5 // pred_check_branch
      %264 = sbr.rel (%p262) target = $region40
    $region39: #{_lambda_.12} parent=5 // pred_region
      %s265 = ssub.s32 %s9, 2
      // Predicated region
      $region41: #{_lambda_.12} parent=39 // pred_check
        %p266 = pneg %p106
      $region42: #{_lambda_.12} parent=39 // pred_check_branch
        %268 = sbr.rel (%p266) target = $region44
      $region43: #{_lambda_.12} parent=39 // pred_region
        %p269 = scmp.lt.s32.totalorder %s15, 1
        %s270 = scalar_select %p269, %s15, 1
        %s271 = smul.addr %s270, 8
        %s272 = scalar_lea.vmem %s3, %s271
      $region44: #{_lambda_.12} parent=39 // pred_fallthru
        _
    $region40: #{_lambda_.12} parent=5 // pred_fallthru
      _
  $region6: #{_lambda_.12} parent=0 // loop_footer
    %s13 = sadd.s32 1, %s9
  $region7: #{_lambda_.12} parent=0 // loop_footer_branch
    %8 = sbr.rel target = $region3
  $region8: #{_lambda_.12} parent=0 // loop_exit
    _

// kernel: _lambda_.14
$region0: #{_lambda_.14}
  #allocation0 [shape = 'u32[]', space=smem, size = 0x4, offset = 0x4, fixed_abs, tag = 'smem constant byte address 0x4 - core index']
  #allocation1 [shape = 'u32[144,128]{1,0:T(1,128)}', space=vmem, size = 0x12000, scoped, tag = 'internal scratch']
  %s0 = inlined_call_operand.vmem [shape: f32[16,32], index: 0, kind: input, shape index: {}]
  %s1 = inlined_call_operand.vmem [shape: f32[16,32], index: 1, kind: input, shape index: {}, may-alias: {1,6}]
  %s2 = inlined_call_operand.vmem [shape: f32[32,32], index: 2, kind: input, shape index: {}]
  %s3 = inlined_call_operand.vmem [shape: f32[1,32], index: 3, kind: input, shape index: {}]
  %s4 = inlined_call_operand.vmem [shape: f32[1,32], index: 4, kind: input, shape index: {}]
  %s5 = inlined_call_operand.vmem [shape: f32[1,32], index: 5, kind: input, shape index: {}]
  %s6 = inlined_call_operand.vmem [shape: f32[16,32], index: 6, kind: output, shape index: {}, may-alias: {1,6}]
  %s7 = sld [smem:[#allocation0]]
  $region57: #{_lambda_.14} parent=0
    _
  %s9 = ssub.s32 1, %s7
  %s10 = scalar_select 0, %s9, %s7
  loop: start=0, step=1, limit=4
  $region2: #{_lambda_.14} parent=0 // loop_pre_header
    _
  $region3: #{_lambda_.14} parent=0 // loop_header
    %s12 = sphi 0, %s16
    %p13 = scmp.ge.s32.totalorder %s12, 4
    %s22 = sphi 0, %s24
    %s25 = sphi 0, %s22
    %s26 = sphi 0, %s25
    %s42 = sphi 0, %s26
    %s48 = sphi 0, %s50
    %s51 = sphi 0, %s48
    %s52 = sphi 0, %s51
    %s68 = sphi 0, %s52
    %s72 = sphi 0, %s72
    %s74 = sphi 0, %s72
    %s75 = sphi 0, %s74
    %s89 = sphi 0, %s75
    %s93 = sphi 0, %s93
    %s95 = sphi 0, %s93
    %s96 = sphi 0, %s95
    %s110 = sphi 0, %s96
    %s114 = sphi 0, %s114
    %s116 = sphi 0, %s114
    %s117 = sphi 0, %s116
    %s131 = sphi 0, %s117
    %s135 = sphi 0, %s135
    %s137 = sphi 0, %s135
    %s138 = sphi 0, %s137
    %s152 = sphi 0, %s138
    %s158 = sphi 0, %s160
    %s161 = sphi 0, %s158
    %s162 = sphi 0, %s161
    %s178 = sphi 0, %s162
  $region4: #{_lambda_.14} parent=0 // loop_header_branch
    %15 = sbr.rel (%p13) target = $region8
  $region5: #{_lambda_.14} parent=0 // loop_body
    %s17 = ssub.s32 %s12, 1
    %s18 = ssub.s32 %s12, 2
    %s19 = sadd.s32 %s12, 1
    %s20 = ssub.s32 %s12, %s19
    %p21 = scmp.eq.s32.totalorder %s20, 0
    %s23 = sadd.s32 %s22, 1
    %s24 = scalar_select %p21, %s22, %s23
    %p27 = pneg %p21
    %p28 = scmp.eq.s32.totalorder %s12, 1
    %p29 = por %p27, %p28
    %p30 = scmp.ne.s32.totalorder %s22, %s25
    %p31 = scmp.eq.s32.totalorder %s12, 0
    %p32 = por %p30, %p31
    %p33 = scmp.ne.s32.totalorder %s22, %s25
    %p34 = scmp.eq.s32.totalorder %s17, 1
    %p35 = por %p33, %p34
    %p36 = scmp.ne.s32.totalorder %s25, %s26
    %p37 = scmp.eq.s32.totalorder %s17, 0
    %p38 = por %p36, %p37
    %p39 = scmp.ne.s32.totalorder %s25, %s26
    %p40 = scmp.eq.s32.totalorder %s18, 1
    %p41 = por %p39, %p40
    %p43 = scmp.ne.s32.totalorder %s26, %s42
    %p44 = scmp.eq.s32.totalorder %s18, 0
    %p45 = por %p43, %p44
    %s46 = ssub.s32 %s12, %s19
    %p47 = scmp.eq.s32.totalorder %s46, 0
    %s49 = sadd.s32 %s48, 1
    %s50 = scalar_select %p47, %s48, %s49
    %p53 = pneg %p47
    %p54 = scmp.eq.s32.totalorder %s12, 1
    %p55 = por %p53, %p54
    %p56 = scmp.ne.s32.totalorder %s48, %s51
    %p57 = scmp.eq.s32.totalorder %s12, 0
    %p58 = por %p56, %p57
    %p59 = scmp.ne.s32.totalorder %s48, %s51
    %p60 = scmp.eq.s32.totalorder %s17, 1
    %p61 = por %p59, %p60
    %p62 = scmp.ne.s32.totalorder %s51, %s52
    %p63 = scmp.eq.s32.totalorder %s17, 0
    %p64 = por %p62, %p63
    %p65 = scmp.ne.s32.totalorder %s51, %s52
    %p66 = scmp.eq.s32.totalorder %s18, 1
    %p67 = por %p65, %p66
    %p69 = scmp.ne.s32.totalorder %s52, %s68
    %p70 = scmp.eq.s32.totalorder %s18, 0
    %p71 = por %p69, %p70
    %s73 = sadd.s32 %s72, 1
    %p76 = scmp.eq.s32.totalorder %s12, 1
    %p77 = scmp.ne.s32.totalorder %s72, %s74
    %p78 = scmp.eq.s32.totalorder %s12, 0
    %p79 = por %p77, %p78
    %p80 = scmp.ne.s32.totalorder %s72, %s74
    %p81 = scmp.eq.s32.totalorder %s17, 1
    %p82 = por %p80, %p81
    %p83 = scmp.ne.s32.totalorder %s74, %s75
    %p84 = scmp.eq.s32.totalorder %s17, 0
    %p85 = por %p83, %p84
    %p86 = scmp.ne.s32.totalorder %s74, %s75
    %p87 = scmp.eq.s32.totalorder %s18, 1
    %p88 = por %p86, %p87
    %p90 = scmp.ne.s32.totalorder %s75, %s89
    %p91 = scmp.eq.s32.totalorder %s18, 0
    %p92 = por %p90, %p91
    %s94 = sadd.s32 %s93, 1
    %p97 = scmp.eq.s32.totalorder %s12, 1
    %p98 = scmp.ne.s32.totalorder %s93, %s95
    %p99 = scmp.eq.s32.totalorder %s12, 0
    %p100 = por %p98, %p99
    %p101 = scmp.ne.s32.totalorder %s93, %s95
    %p102 = scmp.eq.s32.totalorder %s17, 1
    %p103 = por %p101, %p102
    %p104 = scmp.ne.s32.totalorder %s95, %s96
    %p105 = scmp.eq.s32.totalorder %s17, 0
    %p106 = por %p104, %p105
    %p107 = scmp.ne.s32.totalorder %s95, %s96
    %p108 = scmp.eq.s32.totalorder %s18, 1
    %p109 = por %p107, %p108
    %p111 = scmp.ne.s32.totalorder %s96, %s110
    %p112 = scmp.eq.s32.totalorder %s18, 0
    %p113 = por %p111, %p112
    %s115 = sadd.s32 %s114, 1
    %p118 = scmp.eq.s32.totalorder %s12, 1
    %p119 = scmp.ne.s32.totalorder %s114, %s116
    %p120 = scmp.eq.s32.totalorder %s12, 0
    %p121 = por %p119, %p120
    %p122 = scmp.ne.s32.totalorder %s114, %s116
    %p123 = scmp.eq.s32.totalorder %s17, 1
    %p124 = por %p122, %p123
    %p125 = scmp.ne.s32.totalorder %s116, %s117
    %p126 = scmp.eq.s32.totalorder %s17, 0
    %p127 = por %p125, %p126
    %p128 = scmp.ne.s32.totalorder %s116, %s117
    %p129 = scmp.eq.s32.totalorder %s18, 1
    %p130 = por %p128, %p129
    %p132 = scmp.ne.s32.totalorder %s117, %s131
    %p133 = scmp.eq.s32.totalorder %s18, 0
    %p134 = por %p132, %p133
    %s136 = sadd.s32 %s135, 1
    %p139 = scmp.eq.s32.totalorder %s12, 1
    %p140 = scmp.ne.s32.totalorder %s135, %s137
    %p141 = scmp.eq.s32.totalorder %s12, 0
    %p142 = por %p140, %p141
    %p143 = scmp.ne.s32.totalorder %s135, %s137
    %p144 = scmp.eq.s32.totalorder %s17, 1
    %p145 = por %p143, %p144
    %p146 = scmp.ne.s32.totalorder %s137, %s138
    %p147 = scmp.eq.s32.totalorder %s17, 0
    %p148 = por %p146, %p147
    %p149 = scmp.ne.s32.totalorder %s137, %s138
    %p150 = scmp.eq.s32.totalorder %s18, 1
    %p151 = por %p149, %p150
    %p153 = scmp.ne.s32.totalorder %s138, %s152
    %p154 = scmp.eq.s32.totalorder %s18, 0
    %p155 = por %p153, %p154
    %s156 = ssub.s32 %s12, %s19
    %p157 = scmp.eq.s32.totalorder %s156, 0
    %s159 = sadd.s32 %s158, 1
    %s160 = scalar_select %p157, %s158, %s159
    %p163 = pneg %p157
    %p164 = scmp.eq.s32.totalorder %s12, 1
    %p165 = por %p163, %p164
    %p166 = scmp.ne.s32.totalorder %s158, %s161
    %p167 = scmp.eq.s32.totalorder %s12, 0
    %p168 = por %p166, %p167
    %p169 = scmp.ne.s32.totalorder %s158, %s161
    %p170 = scmp.eq.s32.totalorder %s17, 1
    %p171 = por %p169, %p170
    %p172 = scmp.ne.s32.totalorder %s161, %s162
    %p173 = scmp.eq.s32.totalorder %s17, 0
    %p174 = por %p172, %p173
    %p175 = scmp.ne.s32.totalorder %s161, %s162
    %p176 = scmp.eq.s32.totalorder %s18, 1
    %p177 = por %p175, %p176
    %p179 = scmp.ne.s32.totalorder %s162, %s178
    %p180 = scmp.eq.s32.totalorder %s18, 0
    %p181 = por %p179, %p180
    %p182 = scmp.le.s32.totalorder 1, %s12
    %p183 = scmp.lt.s32.totalorder %s12, 3
    %p184 = pnand %p182, %p183
    %p185 = pneg %p184
    // Predicated region
    $region9: #{_lambda_.14} parent=5 // pred_check
      _
    $region10: #{_lambda_.14} parent=5 // pred_check_branch
      %187 = sbr.rel (%p184) target = $region12
    $region11: #{_lambda_.14} parent=5 // pred_region
      %s188 = ssub.s32 %s12, 1
      // Predicated region
      $region13: #{_lambda_.14} parent=11 // pred_check
        %p189 = pneg %p85
      $region14: #{_lambda_.14} parent=11 // pred_check_branch
        %191 = sbr.rel (%p189) target = $region16
      $region15: #{_lambda_.14} parent=11 // pred_region
        _
      $region16: #{_lambda_.14} parent=11 // pred_fallthru
        _
      // Predicated region
      $region17: #{_lambda_.14} parent=11 // pred_check
        %p192 = pneg %p106
      $region18: #{_lambda_.14} parent=11 // pred_check_branch
        %194 = sbr.rel (%p192) target = $region20
      $region19: #{_lambda_.14} parent=11 // pred_region
        _
      $region20: #{_lambda_.14} parent=11 // pred_fallthru
        _
      // Predicated region
      $region21: #{_lambda_.14} parent=11 // pred_check
        %p195 = pneg %p127
      $region22: #{_lambda_.14} parent=11 // pred_check_branch
        %197 = sbr.rel (%p195) target = $region24
      $region23: #{_lambda_.14} parent=11 // pred_region
        _
      $region24: #{_lambda_.14} parent=11 // pred_fallthru
        _
      // Predicated region
      $region25: #{_lambda_.14} parent=11 // pred_check
        %p198 = pneg %p148
      $region26: #{_lambda_.14} parent=11 // pred_check_branch
        %200 = sbr.rel (%p198) target = $region28
      $region27: #{_lambda_.14} parent=11 // pred_region
        _
      $region28: #{_lambda_.14} parent=11 // pred_fallthru
        _
    $region12: #{_lambda_.14} parent=5 // pred_fallthru
      _
    %p201 = scmp.lt.s32.totalorder %s12, 2
    // Predicated region
    $region29: #{_lambda_.14} parent=5 // pred_check
      %p202 = pneg %p201
    $region30: #{_lambda_.14} parent=5 // pred_check_branch
      %204 = sbr.rel (%p202) target = $region32
    $region31: #{_lambda_.14} parent=5 // pred_region
      // Predicated region
      $region33: #{_lambda_.14} parent=31 // pred_check
        %p205 = pneg %p32
      $region34: #{_lambda_.14} parent=31 // pred_check_branch
        %207 = sbr.rel (%p205) target = $region36
      $region35: #{_lambda_.14} parent=31 // pred_region
        %p208 = scmp.lt.s32.totalorder %s12, 1
        %s209 = scalar_select %p208, %s12, 1
        %s210 = smul.addr %s209, 8
        %s211 = scalar_lea.vmem %s0, %s210
      $region36: #{_lambda_.14} parent=31 // pred_fallthru
        _
      // Predicated region
      $region37: #{_lambda_.14} parent=31 // pred_check
        %p212 = pneg %p58
      $region38: #{_lambda_.14} parent=31 // pred_check_branch
        %214 = sbr.rel (%p212) target = $region40
      $region39: #{_lambda_.14} parent=31 // pred_region
        %p215 = scmp.lt.s32.totalorder %s12, 1
        %s216 = scalar_select %p215, %s12, 1
        %s217 = smul.addr %s216, 8
        %s218 = scalar_lea.vmem %s1, %s217
      $region40: #{_lambda_.14} parent=31 // pred_fallthru
        _
    $region32: #{_lambda_.14} parent=5 // pred_fallthru
      _
    %p219 = scmp.le.s32.totalorder 1, %s12
    %p220 = scmp.lt.s32.totalorder %s12, 3
    %p221 = pnand %p219, %p220
    %p222 = pneg %p221
    // Predicated region
    $region41: #{_lambda_.14} parent=5 // pred_check
      _
    $region42: #{_lambda_.14} parent=5 // pred_check_branch
      %224 = sbr.rel (%p221) target = $region44
    $region43: #{_lambda_.14} parent=5 // pred_region
      %s225 = ssub.s32 %s12, 1
      %p226 = scmp.lt.s32.totalorder %s17, 1
      %s227 = scalar_select %p226, %s17, 1
      %s228 = smul.addr %s227, 8
      %s229 = scalar_lea.vmem %s0, %s228
      %p230 = pneg %p38
      %p231 = pneg %p35
      %p232 = scmp.lt.s32.totalorder %s17, 1
      %s233 = scalar_select %p232, %s17, 1
      %s234 = smul.addr %s233, 8
      %s235 = scalar_lea.vmem %s1, %s234
      %p236 = pneg %p64
      %p237 = pneg %p61
      %p238 = pneg %p85
      %p239 = pneg %p82
      %p240 = pneg %p106
      %p241 = pneg %p103
      %p242 = pneg %p127
      %p243 = pneg %p124
      %p244 = pneg %p148
      %p245 = pneg %p145
      %p246 = pneg %p174
      %p247 = pneg %p171
      %p248 = scmp.lt.s32.totalorder %s17, 1
      %s249 = scalar_select %p248, %s17, 1
      %s250 = smul.addr %s249, 8
      %s251 = scalar_lea.vmem %s6, %s250
      %p252 = scmp.lt.s32.totalorder %s17, 1
      %s253 = scalar_select %p252, %s17, 1
      %s254 = smul.addr %s253, 8
      %s255 = scalar_lea.vmem %s0, %s254
      %p256 = scmp.lt.s32.totalorder %s17, 1
      %s257 = scalar_select %p256, %s17, 1
      %s258 = smul.addr %s257, 8
      %s259 = scalar_lea.vmem %s1, %s258
      %p260 = scmp.lt.s32.totalorder %s17, 1
      %s261 = scalar_select %p260, %s17, 1
      %s262 = smul.addr %s261, 8
      %s263 = scalar_lea.vmem %s6, %s262
      %v264 = vld [vmem:[%s255] sm:$0xff]
      %v265 = vld [vmem:[%s2] sm:$0xff]
      %v266 = vld [vmem:[%s2 + $0x8] sm:$0xff]
      %v267 = vld [vmem:[%s2 + $0x10] sm:$0xff]
      %v268 = vld [vmem:[%s2 + $0x18] sm:$0xff]
      %v269 = vld [vmem:[%s3] sm:$0x1]
      %v271 = vlaneseq
      %v272 = vshrl.u32 %v271, 7
      %v273 = vsub.s32 0, %v272
      %v274 = vrot.slane %v269, %v273
      %vm276 = vcmask 261120
      %v278 = vsel %vm276, %v264, 0
      %280 = vmatprep.subr.mxu0 0.0
      %281 = vmatpush1.msra.mxu0 0.0
      %282 = vmatprep.subr.mxu0 0.0
      %283 = vmatpush1.msra.mxu0 0.0
      %284 = vmatprep.subr.mxu0 0.0
      %285 = vmatpush1.msra.mxu0 0.0
      %286 = vmatprep.subr.mxu0 0.0
      %287 = vmatpush1.msra.mxu0 0.0
      %288 = vmatprep.subr.mxu0 0.0
      %289 = vmatpush1.msra.mxu0 0.0
      %290 = vmatprep.subr.mxu0 0.0
      %291 = vmatpush1.msra.mxu0 0.0
      %292 = vmatprep.subr.mxu0 0.0
      %293 = vmatpush1.msra.mxu0 0.0
      %294 = vmatprep.subr.mxu0 0.0
      %295 = vmatpush1.msra.mxu0 0.0
      %296 = vmatprep.subr.mxu0 0.0
      %297 = vmatpush1.msra.mxu0 0.0
      %298 = vmatprep.subr.mxu0 0.0
      %299 = vmatpush1.msra.mxu0 0.0
      %300 = vmatprep.subr.mxu0 0.0
      %301 = vmatpush1.msra.mxu0 0.0
      %302 = vmatprep.subr.mxu0 0.0
      %303 = vmatpush1.msra.mxu0 0.0
      %304 = vmatprep.subr.mxu0 0.0
      %305 = vmatpush1.msra.mxu0 %v268
      %306 = vmatprep.subr.mxu0 0.0
      %307 = vmatpush1.msra.mxu0 %v267
      %308 = vmatprep.subr.mxu0 0.0
      %309 = vmatpush1.msra.mxu0 %v266
      %310 = vmatprep.subr.mxu0 0.0
      %311 = vmatpush1.msra.mxu0 %v265
      %312 = vmatprep.subr.mxu0 0.0
      %313 = vmatpush2.msra.mxu0 0.0
      %314 = vmatprep.subr.mxu0 0.0
      %315 = vmatpush2.msra.mxu0 0.0
      %316 = vmatprep.subr.mxu0 0.0
      %317 = vmatpush2.msra.mxu0 0.0
      %318 = vmatprep.subr.mxu0 0.0
      %319 = vmatpush2.msra.mxu0 0.0
      %320 = vmatprep.subr.mxu0 0.0
      %321 = vmatpush2.msra.mxu0 0.0
      %322 = vmatprep.subr.mxu0 0.0
      %323 = vmatpush2.msra.mxu0 0.0
      %324 = vmatprep.subr.mxu0 0.0
      %325 = vmatpush2.msra.mxu0 0.0
      %326 = vmatprep.subr.mxu0 0.0
      %327 = vmatpush2.msra.mxu0 0.0
      %328 = vmatprep.subr.mxu0 0.0
      %329 = vmatpush2.msra.mxu0 0.0
      %330 = vmatprep.subr.mxu0 0.0
      %331 = vmatpush2.msra.mxu0 0.0
      %332 = vmatprep.subr.mxu0 0.0
      %333 = vmatpush2.msra.mxu0 0.0
      %334 = vmatprep.subr.mxu0 0.0
      %335 = vmatpush2.msra.mxu0 0.0
      %336 = vmatprep.subr.mxu0 0.0
      %337 = vmatpush2.msra.mxu0 0.0
      %338 = vmatprep.subr.mxu0 0.0
      %339 = vmatpush2.msra.mxu0 0.0
      %340 = vmatprep.subr.mxu0 0.0
      %341 = vmatpush2.msra.mxu0 0.0
      %342 = vmatprep.subr.mxu0 0.0
      %343 = vmatpush2.msra.mxu0 0.0
      %344 = vmatprep.mubr.f32.mxu0 0.0
      %345 = vmatmul.mubr.f32.gmra.mxu0 %v278
      %v346 = vpop.f32.mrf.mxu0
      %v347 = vadd.f32 %v274, %v346
      %v348 = vpop.f32.mrf.mxu0
      %349 = vdwg.mxu0
      %v350 = vld [vmem:[%s259] sm:$0xff]
      %v351 = vadd.f32 %v347, %v350
      %v352 = vsel %vm276, %v351, 0.0
      %353 = vadd.xlane.f32.xlu0 %v352
      %v354 = vpop.xlane.xlu0 %353
      %v355 = vrcp.pop 32.0
      %v356 = vmul.f32 %v354, %v355
      %v357 = vsub.f32 %v351, %v356
      %v358 = vmul.f32 %v357, %v357
      %v359 = vsel %vm276, %v358, 0.0
      %360 = vadd.xlane.f32.xlu0 %v359
      %v361 = vpop.xlane.xlu0 %360
      %v362 = vmul.f32 %v361, %v355
      %v363 = vadd.f32 %v362, 1e-12
      %v364 = vrsqrt.pop %v363
      %v365 = vmul.f32 %v357, %v364
      %v366 = vld [vmem:[%s4] sm:$0x1]
      %v368 = vlaneseq
      %v369 = vshrl.u32 %v368, 7
      %v370 = vsub.s32 0, %v369
      %v371 = vrot.slane %v366, %v370
      %v373 = vmul.f32 %v365, %v371
      %v374 = vld [vmem:[%s5] sm:$0x1]
      %v376 = vlaneseq
      %v377 = vshrl.u32 %v376, 7
      %v378 = vsub.s32 0, %v377
      %v379 = vrot.slane %v374, %v378
      %v381 = vadd.f32 %v373, %v379
      %382 = vst.msk [vmem:[%s263] sm:$0xff] %vm276, %v381
      %p383 = scmp.lt.s32.totalorder %s17, 1
      %s384 = scalar_select %p383, %s17, 1
      %s385 = smul.addr %s384, 8
      %s386 = scalar_lea.vmem %s6, %s385
      // Predicated region
      $region45: #{_lambda_.14} parent=43 // pred_check
        %p387 = pneg %p171
      $region46: #{_lambda_.14} parent=43 // pred_check_branch
        %389 = sbr.rel (%p387) target = $region48
      $region47: #{_lambda_.14} parent=43 // pred_region
        _
      $region48: #{_lambda_.14} parent=43 // pred_fallthru
        _
    $region44: #{_lambda_.14} parent=5 // pred_fallthru
      _
    %p390 = scmp.le.s32.totalorder 2, %s12
    // Predicated region
    $region49: #{_lambda_.14} parent=5 // pred_check
      %p391 = pneg %p390
    $region50: #{_lambda_.14} parent=5 // pred_check_branch
      %393 = sbr.rel (%p391) target = $region52
    $region51: #{_lambda_.14} parent=5 // pred_region
      %s394 = ssub.s32 %s12, 2
      // Predicated region
      $region53: #{_lambda_.14} parent=51 // pred_check
        %p395 = pneg %p177
      $region54: #{_lambda_.14} parent=51 // pred_check_branch
        %397 = sbr.rel (%p395) target = $region56
      $region55: #{_lambda_.14} parent=51 // pred_region
        %p398 = scmp.lt.s32.totalorder %s18, 1
        %s399 = scalar_select %p398, %s18, 1
        %s400 = smul.addr %s399, 8
        %s401 = scalar_lea.vmem %s6, %s400
      $region56: #{_lambda_.14} parent=51 // pred_fallthru
        _
    $region52: #{_lambda_.14} parent=5 // pred_fallthru
      _
  $region6: #{_lambda_.14} parent=0 // loop_footer
    %s16 = sadd.s32 1, %s12
  $region7: #{_lambda_.14} parent=0 // loop_footer_branch
    %11 = sbr.rel target = $region3
  $region8: #{_lambda_.14} parent=0 // loop_exit
    _

// kernel: _lambda_.13
$region0: #{_lambda_.13}
  #allocation0 [shape = 'u32[]', space=smem, size = 0x4, offset = 0x4, fixed_abs, tag = 'smem constant byte address 0x4 - core index']
  #allocation1 [shape = 'u32[144,128]{1,0:T(1,128)}', space=vmem, size = 0x12000, scoped, tag = 'internal scratch']
  %s0 = inlined_call_operand.vmem [shape: f32[2,8,96], index: 0, kind: input, shape index: {}]
  %s1 = inlined_call_operand.vmem [shape: f32[2,8,32], index: 1, kind: output, shape index: {}]
  %s2 = sld [smem:[#allocation0]]
  $region37: #{_lambda_.13} parent=0
    _
  %s4 = ssub.s32 1, %s2
  %s5 = scalar_select 0, %s4, %s2
  loop: start=0, step=1, limit=4
  $region2: #{_lambda_.13} parent=0 // loop_pre_header
    _
  $region3: #{_lambda_.13} parent=0 // loop_header
    %s7 = sphi 0, %s11
    %p8 = scmp.ge.s32.totalorder %s7, 4
    %s17 = sphi 0, %s19
    %s20 = sphi 0, %s17
    %s21 = sphi 0, %s20
    %s37 = sphi 0, %s21
    %s43 = sphi 0, %s45
    %s46 = sphi 0, %s43
    %s47 = sphi 0, %s46
    %s63 = sphi 0, %s47
  $region4: #{_lambda_.13} parent=0 // loop_header_branch
    %10 = sbr.rel (%p8) target = $region8
  $region5: #{_lambda_.13} parent=0 // loop_body
    %s12 = ssub.s32 %s7, 1
    %s13 = ssub.s32 %s7, 2
    %s14 = sadd.s32 %s7, 1
    %s15 = ssub.s32 %s7, %s14
    %p16 = scmp.eq.s32.totalorder %s15, 0
    %s18 = sadd.s32 %s17, 1
    %s19 = scalar_select %p16, %s17, %s18
    %p22 = pneg %p16
    %p23 = scmp.eq.s32.totalorder %s7, 1
    %p24 = por %p22, %p23
    %p25 = scmp.ne.s32.totalorder %s17, %s20
    %p26 = scmp.eq.s32.totalorder %s7, 0
    %p27 = por %p25, %p26
    %p28 = scmp.ne.s32.totalorder %s17, %s20
    %p29 = scmp.eq.s32.totalorder %s12, 1
    %p30 = por %p28, %p29
    %p31 = scmp.ne.s32.totalorder %s20, %s21
    %p32 = scmp.eq.s32.totalorder %s12, 0
    %p33 = por %p31, %p32
    %p34 = scmp.ne.s32.totalorder %s20, %s21
    %p35 = scmp.eq.s32.totalorder %s13, 1
    %p36 = por %p34, %p35
    %p38 = scmp.ne.s32.totalorder %s21, %s37
    %p39 = scmp.eq.s32.totalorder %s13, 0
    %p40 = por %p38, %p39
    %s41 = ssub.s32 %s7, %s14
    %p42 = scmp.eq.s32.totalorder %s41, 0
    %s44 = sadd.s32 %s43, 1
    %s45 = scalar_select %p42, %s43, %s44
    %p48 = pneg %p42
    %p49 = scmp.eq.s32.totalorder %s7, 1
    %p50 = por %p48, %p49
    %p51 = scmp.ne.s32.totalorder %s43, %s46
    %p52 = scmp.eq.s32.totalorder %s7, 0
    %p53 = por %p51, %p52
    %p54 = scmp.ne.s32.totalorder %s43, %s46
    %p55 = scmp.eq.s32.totalorder %s12, 1
    %p56 = por %p54, %p55
    %p57 = scmp.ne.s32.totalorder %s46, %s47
    %p58 = scmp.eq.s32.totalorder %s12, 0
    %p59 = por %p57, %p58
    %p60 = scmp.ne.s32.totalorder %s46, %s47
    %p61 = scmp.eq.s32.totalorder %s13, 1
    %p62 = por %p60, %p61
    %p64 = scmp.ne.s32.totalorder %s47, %s63
    %p65 = scmp.eq.s32.totalorder %s13, 0
    %p66 = por %p64, %p65
    %p67 = scmp.le.s32.totalorder 1, %s7
    %p68 = scmp.lt.s32.totalorder %s7, 3
    %p69 = pnand %p67, %p68
    %p70 = pneg %p69
    // Predicated region
    $region9: #{_lambda_.13} parent=5 // pred_check
      _
    $region10: #{_lambda_.13} parent=5 // pred_check_branch
      %72 = sbr.rel (%p69) target = $region12
    $region11: #{_lambda_.13} parent=5 // pred_region
      %s73 = ssub.s32 %s7, 1
    $region12: #{_lambda_.13} parent=5 // pred_fallthru
      _
    %p74 = scmp.lt.s32.totalorder %s7, 2
    // Predicated region
    $region13: #{_lambda_.13} parent=5 // pred_check
      %p75 = pneg %p74
    $region14: #{_lambda_.13} parent=5 // pred_check_branch
      %77 = sbr.rel (%p75) target = $region16
    $region15: #{_lambda_.13} parent=5 // pred_region
      // Predicated region
      $region17: #{_lambda_.13} parent=15 // pred_check
        %p78 = pneg %p27
      $region18: #{_lambda_.13} parent=15 // pred_check_branch
        %80 = sbr.rel (%p78) target = $region20
      $region19: #{_lambda_.13} parent=15 // pred_region
        %p81 = scmp.lt.s32.totalorder %s7, 1
        %s82 = scalar_select %p81, %s7, 1
        %s83 = smul.addr %s82, 8
        %s84 = scalar_lea.vmem %s0, %s83
      $region20: #{_lambda_.13} parent=15 // pred_fallthru
        _
    $region16: #{_lambda_.13} parent=5 // pred_fallthru
      _
    %p85 = scmp.le.s32.totalorder 1, %s7
    %p86 = scmp.lt.s32.totalorder %s7, 3
    %p87 = pnand %p85, %p86
    %p88 = pneg %p87
    // Predicated region
    $region21: #{_lambda_.13} parent=5 // pred_check
      _
    $region22: #{_lambda_.13} parent=5 // pred_check_branch
      %90 = sbr.rel (%p87) target = $region24
    $region23: #{_lambda_.13} parent=5 // pred_region
      %s91 = ssub.s32 %s7, 1
      %p92 = scmp.lt.s32.totalorder %s12, 1
      %s93 = scalar_select %p92, %s12, 1
      %s94 = smul.addr %s93, 8
      %s95 = scalar_lea.vmem %s0, %s94
      %p96 = pneg %p33
      %p97 = pneg %p30
      %p98 = pneg %p59
      %p99 = pneg %p56
      %p100 = scmp.lt.s32.totalorder %s12, 1
      %s101 = scalar_select %p100, %s12, 1
      %s102 = smul.addr %s101, 8
      %s103 = scalar_lea.vmem %s1, %s102
      %p104 = scmp.lt.s32.totalorder %s12, 1
      %s105 = scalar_select %p104, %s12, 1
      %s106 = smul.addr %s105, 8
      %s107 = scalar_lea.vmem %s0, %s106
      %p108 = scmp.lt.s32.totalorder %s12, 1
      %s109 = scalar_select %p108, %s12, 1
      %s110 = smul.addr %s109, 8
      %s111 = scalar_lea.vmem %s1, %s110
      %v112 = vld [vmem:[%s107] sm:$0xff]
      %114 = vrot.lane.b32.xlu0 %v112, 96
      %v115 = vpop.permute.xlu0 %114
      %vm116 = vcmask 64512
      %v117 = vsel %vm116, %v112, 0
      %v119 = vsel %vm116, %v115, 0
      %121 = vmatprep.subr.mxu0 0.0
      %122 = vmatpush1.xpose.msra.mxu0 0.0
      %123 = vmatprep.subr.mxu0 0.0
      %124 = vmatpush1.xpose.msra.mxu0 0.0
      %125 = vmatprep.subr.mxu0 0.0
      %126 = vmatpush1.xpose.msra.mxu0 0.0
      %127 = vmatprep.subr.mxu0 0.0
      %128 = vmatpush1.xpose.msra.mxu0 0.0
      %129 = vmatprep.subr.mxu0 0.0
      %130 = vmatpush1.xpose.msra.mxu0 0.0
      %131 = vmatprep.subr.mxu0 0.0
      %132 = vmatpush1.xpose.msra.mxu0 0.0
      %133 = vmatprep.subr.mxu0 0.0
      %134 = vmatpush1.xpose.msra.mxu0 0.0
      %135 = vmatprep.subr.mxu0 0.0
      %136 = vmatpush1.xpose.msra.mxu0 0.0
      %137 = vmatprep.subr.mxu0 0.0
      %138 = vmatpush1.xpose.msra.mxu0 0.0
      %139 = vmatprep.subr.mxu0 0.0
      %140 = vmatpush1.xpose.msra.mxu0 0.0
      %141 = vmatprep.subr.mxu0 0.0
      %142 = vmatpush1.xpose.msra.mxu0 0.0
      %143 = vmatprep.subr.mxu0 0.0
      %144 = vmatpush1.xpose.msra.mxu0 0.0
      %145 = vmatprep.subr.mxu0 0.0
      %146 = vmatpush1.xpose.msra.mxu0 0.0
      %147 = vmatprep.subr.mxu0 0.0
      %148 = vmatpush1.xpose.msra.mxu0 0.0
      %149 = vmatprep.subr.mxu0 0.0
      %150 = vmatpush1.xpose.msra.mxu0 0.0
      %151 = vmatprep.subr.mxu0 0.0
      %152 = vmatpush1.xpose.msra.mxu0 %v119
      %153 = vmatprep.subr.mxu0 0.0
      %154 = vmatpush2.xpose.msra.mxu0 0.0
      %155 = vmatprep.subr.mxu0 0.0
      %156 = vmatpush2.xpose.msra.mxu0 0.0
      %157 = vmatprep.subr.mxu0 0.0
      %158 = vmatpush2.xpose.msra.mxu0 0.0
      %159 = vmatprep.subr.mxu0 0.0
      %160 = vmatpush2.xpose.msra.mxu0 0.0
      %161 = vmatprep.subr.mxu0 0.0
      %162 = vmatpush2.xpose.msra.mxu0 0.0
      %163 = vmatprep.subr.mxu0 0.0
      %164 = vmatpush2.xpose.msra.mxu0 0.0
      %165 = vmatprep.subr.mxu0 0.0
      %166 = vmatpush2.xpose.msra.mxu0 0.0
      %167 = vmatprep.subr.mxu0 0.0
      %168 = vmatpush2.xpose.msra.mxu0 0.0
      %169 = vmatprep.subr.mxu0 0.0
      %170 = vmatpush2.xpose.msra.mxu0 0.0
      %171 = vmatprep.subr.mxu0 0.0
      %172 = vmatpush2.xpose.msra.mxu0 0.0
      %173 = vmatprep.subr.mxu0 0.0
      %174 = vmatpush2.xpose.msra.mxu0 0.0
      %175 = vmatprep.subr.mxu0 0.0
      %176 = vmatpush2.xpose.msra.mxu0 0.0
      %177 = vmatprep.subr.mxu0 0.0
      %178 = vmatpush2.xpose.msra.mxu0 0.0
      %179 = vmatprep.subr.mxu0 0.0
      %180 = vmatpush2.xpose.msra.mxu0 0.0
      %181 = vmatprep.subr.mxu0 0.0
      %182 = vmatpush2.xpose.msra.mxu0 0.0
      %183 = vmatprep.subr.mxu0 0.0
      %184 = vmatpush2.xpose.msra.mxu0 0.0
      %185 = vmatprep.mubr.f32.mxu0 0.0
      %186 = vmatmul.mubr.f32.gmra.mxu0 %v117
      %v187 = vpop.f32.mrf.mxu0
      %v188 = vadd.f32 0.0, %v187
      %v189 = vpop.f32.mrf.mxu0
      %190 = vdwg.mxu0
      %v191 = vsel %vm116, %v188, -inf
      %192 = vmax.xlane.f32.xlu0 %v191
      %v193 = vpop.xlane.xlu0 %192
      %v194 = vsub.f32 %v188, %v193
      %v195 = vmul.f32 %v194, 1.442695
      %v196 = vpow.pop %v195
      %v197 = vsel %vm116, %v196, 0.0
      %198 = vadd.xlane.f32.xlu0 %v197
      %v199 = vpop.xlane.xlu0 %198
      %200 = vrot.lane.b32.xlu0 %v112, 64
      %v201 = vpop.permute.xlu0 %200
      %v204 = vsel %vm116, %v196, 0
      %206 = vmatprep.subr.mxu0 0.0
      %207 = vmatpush1.msra.mxu0 0.0
      %208 = vmatprep.subr.mxu0 0.0
      %209 = vmatpush1.msra.mxu0 0.0
      %210 = vmatprep.subr.mxu0 0.0
      %211 = vmatpush1.msra.mxu0 0.0
      %212 = vmatprep.subr.mxu0 0.0
      %213 = vmatpush1.msra.mxu0 0.0
      %214 = vmatprep.subr.mxu0 0.0
      %215 = vmatpush1.msra.mxu0 0.0
      %216 = vmatprep.subr.mxu0 0.0
      %217 = vmatpush1.msra.mxu0 0.0
      %218 = vmatprep.subr.mxu0 0.0
      %219 = vmatpush1.msra.mxu0 0.0
      %220 = vmatprep.subr.mxu0 0.0
      %221 = vmatpush1.msra.mxu0 0.0
      %222 = vmatprep.subr.mxu0 0.0
      %223 = vmatpush1.msra.mxu0 0.0
      %224 = vmatprep.subr.mxu0 0.0
      %225 = vmatpush1.msra.mxu0 0.0
      %226 = vmatprep.subr.mxu0 0.0
      %227 = vmatpush1.msra.mxu0 0.0
      %228 = vmatprep.subr.mxu0 0.0
      %229 = vmatpush1.msra.mxu0 0.0
      %230 = vmatprep.subr.mxu0 0.0
      %231 = vmatpush1.msra.mxu0 0.0
      %232 = vmatprep.subr.mxu0 0.0
      %233 = vmatpush1.msra.mxu0 0.0
      %234 = vmatprep.subr.mxu0 0.0
      %235 = vmatpush1.msra.mxu0 0.0
      %236 = vmatprep.subr.mxu0 0.0
      %237 = vmatpush1.msra.mxu0 %v201
      %238 = vmatprep.subr.mxu0 0.0
      %239 = vmatpush2.msra.mxu0 0.0
      %240 = vmatprep.subr.mxu0 0.0
      %241 = vmatpush2.msra.mxu0 0.0
      %242 = vmatprep.subr.mxu0 0.0
      %243 = vmatpush2.msra.mxu0 0.0
      %244 = vmatprep.subr.mxu0 0.0
      %245 = vmatpush2.msra.mxu0 0.0
      %246 = vmatprep.subr.mxu0 0.0
      %247 = vmatpush2.msra.mxu0 0.0
      %248 = vmatprep.subr.mxu0 0.0
      %249 = vmatpush2.msra.mxu0 0.0
      %250 = vmatprep.subr.mxu0 0.0
      %251 = vmatpush2.msra.mxu0 0.0
      %252 = vmatprep.subr.mxu0 0.0
      %253 = vmatpush2.msra.mxu0 0.0
      %254 = vmatprep.subr.mxu0 0.0
      %255 = vmatpush2.msra.mxu0 0.0
      %256 = vmatprep.subr.mxu0 0.0
      %257 = vmatpush2.msra.mxu0 0.0
      %258 = vmatprep.subr.mxu0 0.0
      %259 = vmatpush2.msra.mxu0 0.0
      %260 = vmatprep.subr.mxu0 0.0
      %261 = vmatpush2.msra.mxu0 0.0
      %262 = vmatprep.subr.mxu0 0.0
      %263 = vmatpush2.msra.mxu0 0.0
      %264 = vmatprep.subr.mxu0 0.0
      %265 = vmatpush2.msra.mxu0 0.0
      %266 = vmatprep.subr.mxu0 0.0
      %267 = vmatpush2.msra.mxu0 0.0
      %268 = vmatprep.subr.mxu0 0.0
      %269 = vmatpush2.msra.mxu0 0.0
      %270 = vmatprep.mubr.f32.mxu0 0.0
      %271 = vmatmul.mubr.f32.gmra.mxu0 %v204
      %v272 = vpop.f32.mrf.mxu0
      %v273 = vadd.f32 0.0, %v272
      %v274 = vpop.f32.mrf.mxu0
      %275 = vdwg.mxu0
      %v276 = vrcp.pop %v199
      %v277 = vmul.f32 %v273, %v276
      %278 = vrot.lane.b32.xlu0 %v112, 120
      %v279 = vpop.permute.xlu0 %278
      %280 = vrot.lane.b32.xlu0 %v112, 88
      %v281 = vpop.permute.xlu0 %280
      %v282 = vsel %vm116, %v279, 0
      %v284 = vsel %vm116, %v281, 0
      %286 = vmatprep.subr.mxu0 0.0
      %287 = vmatpush1.xpose.msra.mxu0 0.0
      %288 = vmatprep.subr.mxu0 0.0
      %289 = vmatpush1.xpose.msra.mxu0 0.0
      %290 = vmatprep.subr.mxu0 0.0
      %291 = vmatpush1.xpose.msra.mxu0 0.0
      %292 = vmatprep.subr.mxu0 0.0
      %293 = vmatpush1.xpose.msra.mxu0 0.0
      %294 = vmatprep.subr.mxu0 0.0
      %295 = vmatpush1.xpose.msra.mxu0 0.0
      %296 = vmatprep.subr.mxu0 0.0
      %297 = vmatpush1.xpose.msra.mxu0 0.0
      %298 = vmatprep.subr.mxu0 0.0
      %299 = vmatpush1.xpose.msra.mxu0 0.0
      %300 = vmatprep.subr.mxu0 0.0
      %301 = vmatpush1.xpose.msra.mxu0 0.0
      %302 = vmatprep.subr.mxu0 0.0
      %303 = vmatpush1.xpose.msra.mxu0 0.0
      %304 = vmatprep.subr.mxu0 0.0
      %305 = vmatpush1.xpose.msra.mxu0 0.0
      %306 = vmatprep.subr.mxu0 0.0
      %307 = vmatpush1.xpose.msra.mxu0 0.0
      %308 = vmatprep.subr.mxu0 0.0
      %309 = vmatpush1.xpose.msra.mxu0 0.0
      %310 = vmatprep.subr.mxu0 0.0
      %311 = vmatpush1.xpose.msra.mxu0 0.0
      %312 = vmatprep.subr.mxu0 0.0
      %313 = vmatpush1.xpose.msra.mxu0 0.0
      %314 = vmatprep.subr.mxu0 0.0
      %315 = vmatpush1.xpose.msra.mxu0 0.0
      %316 = vmatprep.subr.mxu0 0.0
      %317 = vmatpush1.xpose.msra.mxu0 %v284
      %318 = vmatprep.subr.mxu0 0.0
      %319 = vmatpush2.xpose.msra.mxu0 0.0
      %320 = vmatprep.subr.mxu0 0.0
      %321 = vmatpush2.xpose.msra.mxu0 0.0
      %322 = vmatprep.subr.mxu0 0.0
      %323 = vmatpush2.xpose.msra.mxu0 0.0
      %324 = vmatprep.subr.mxu0 0.0
      %325 = vmatpush2.xpose.msra.mxu0 0.0
      %326 = vmatprep.subr.mxu0 0.0
      %327 = vmatpush2.xpose.msra.mxu0 0.0
      %328 = vmatprep.subr.mxu0 0.0
      %329 = vmatpush2.xpose.msra.mxu0 0.0
      %330 = vmatprep.subr.mxu0 0.0
      %331 = vmatpush2.xpose.msra.mxu0 0.0
      %332 = vmatprep.subr.mxu0 0.0
      %333 = vmatpush2.xpose.msra.mxu0 0.0
      %334 = vmatprep.subr.mxu0 0.0
      %335 = vmatpush2.xpose.msra.mxu0 0.0
      %336 = vmatprep.subr.mxu0 0.0
      %337 = vmatpush2.xpose.msra.mxu0 0.0
      %338 = vmatprep.subr.mxu0 0.0
      %339 = vmatpush2.xpose.msra.mxu0 0.0
      %340 = vmatprep.subr.mxu0 0.0
      %341 = vmatpush2.xpose.msra.mxu0 0.0
      %342 = vmatprep.subr.mxu0 0.0
      %343 = vmatpush2.xpose.msra.mxu0 0.0
      %344 = vmatprep.subr.mxu0 0.0
      %345 = vmatpush2.xpose.msra.mxu0 0.0
      %346 = vmatprep.subr.mxu0 0.0
      %347 = vmatpush2.xpose.msra.mxu0 0.0
      %348 = vmatprep.subr.mxu0 0.0
      %349 = vmatpush2.xpose.msra.mxu0 0.0
      %350 = vmatprep.mubr.f32.mxu0 0.0
      %351 = vmatmul.mubr.f32.gmra.mxu0 %v282
      %v352 = vpop.f32.mrf.mxu0
      %v353 = vadd.f32 0.0, %v352
      %v354 = vpop.f32.mrf.mxu0
      %355 = vdwg.mxu0
      %v356 = vsel %vm116, %v353, -inf
      %357 = vmax.xlane.f32.xlu0 %v356
      %v358 = vpop.xlane.xlu0 %357
      %v359 = vsub.f32 %v353, %v358
      %v360 = vmul.f32 %v359, 1.442695
      %v361 = vpow.pop %v360
      %v362 = vsel %vm116, %v361, 0.0
      %363 = vadd.xlane.f32.xlu0 %v362
      %v364 = vpop.xlane.xlu0 %363
      %365 = vrot.lane.b32.xlu0 %v112, 56
      %v366 = vpop.permute.xlu0 %365
      %v369 = vsel %vm116, %v361, 0
      %371 = vmatprep.subr.mxu0 0.0
      %372 = vmatpush1.msra.mxu0 0.0
      %373 = vmatprep.subr.mxu0 0.0
      %374 = vmatpush1.msra.mxu0 0.0
      %375 = vmatprep.subr.mxu0 0.0
      %376 = vmatpush1.msra.mxu0 0.0
      %377 = vmatprep.subr.mxu0 0.0
      %378 = vmatpush1.msra.mxu0 0.0
      %379 = vmatprep.subr.mxu0 0.0
      %380 = vmatpush1.msra.mxu0 0.0
      %381 = vmatprep.subr.mxu0 0.0
      %382 = vmatpush1.msra.mxu0 0.0
      %383 = vmatprep.subr.mxu0 0.0
      %384 = vmatpush1.msra.mxu0 0.0
      %385 = vmatprep.subr.mxu0 0.0
      %386 = vmatpush1.msra.mxu0 0.0
      %387 = vmatprep.subr.mxu0 0.0
      %388 = vmatpush1.msra.mxu0 0.0
      %389 = vmatprep.subr.mxu0 0.0
      %390 = vmatpush1.msra.mxu0 0.0
      %391 = vmatprep.subr.mxu0 0.0
      %392 = vmatpush1.msra.mxu0 0.0
      %393 = vmatprep.subr.mxu0 0.0
      %394 = vmatpush1.msra.mxu0 0.0
      %395 = vmatprep.subr.mxu0 0.0
      %396 = vmatpush1.msra.mxu0 0.0
      %397 = vmatprep.subr.mxu0 0.0
      %398 = vmatpush1.msra.mxu0 0.0
      %399 = vmatprep.subr.mxu0 0.0
      %400 = vmatpush1.msra.mxu0 0.0
      %401 = vmatprep.subr.mxu0 0.0
      %402 = vmatpush1.msra.mxu0 %v366
      %403 = vmatprep.subr.mxu0 0.0
      %404 = vmatpush2.msra.mxu0 0.0
      %405 = vmatprep.subr.mxu0 0.0
      %406 = vmatpush2.msra.mxu0 0.0
      %407 = vmatprep.subr.mxu0 0.0
      %408 = vmatpush2.msra.mxu0 0.0
      %409 = vmatprep.subr.mxu0 0.0
      %410 = vmatpush2.msra.mxu0 0.0
      %411 = vmatprep.subr.mxu0 0.0
      %412 = vmatpush2.msra.mxu0 0.0
      %413 = vmatprep.subr.mxu0 0.0
      %414 = vmatpush2.msra.mxu0 0.0
      %415 = vmatprep.subr.mxu0 0.0
      %416 = vmatpush2.msra.mxu0 0.0
      %417 = vmatprep.subr.mxu0 0.0
      %418 = vmatpush2.msra.mxu0 0.0
      %419 = vmatprep.subr.mxu0 0.0
      %420 = vmatpush2.msra.mxu0 0.0
      %421 = vmatprep.subr.mxu0 0.0
      %422 = vmatpush2.msra.mxu0 0.0
      %423 = vmatprep.subr.mxu0 0.0
      %424 = vmatpush2.msra.mxu0 0.0
      %425 = vmatprep.subr.mxu0 0.0
      %426 = vmatpush2.msra.mxu0 0.0
      %427 = vmatprep.subr.mxu0 0.0
      %428 = vmatpush2.msra.mxu0 0.0
      %429 = vmatprep.subr.mxu0 0.0
      %430 = vmatpush2.msra.mxu0 0.0
      %431 = vmatprep.subr.mxu0 0.0
      %432 = vmatpush2.msra.mxu0 0.0
      %433 = vmatprep.subr.mxu0 0.0
      %434 = vmatpush2.msra.mxu0 0.0
      %435 = vmatprep.mubr.f32.mxu0 0.0
      %436 = vmatmul.mubr.f32.gmra.mxu0 %v369
      %v437 = vpop.f32.mrf.mxu0
      %v438 = vadd.f32 0.0, %v437
      %v439 = vpop.f32.mrf.mxu0
      %440 = vdwg.mxu0
      %v441 = vrcp.pop %v364
      %v442 = vmul.f32 %v438, %v441
      %443 = vrot.lane.b32.xlu0 %v112, 112
      %v444 = vpop.permute.xlu0 %443
      %445 = vrot.lane.b32.xlu0 %v112, 80
      %v446 = vpop.permute.xlu0 %445
      %v447 = vsel %vm116, %v444, 0
      %v449 = vsel %vm116, %v446, 0
      %451 = vmatprep.subr.mxu0 0.0
      %452 = vmatpush1.xpose.msra.mxu0 0.0
      %453 = vmatprep.subr.mxu0 0.0
      %454 = vmatpush1.xpose.msra.mxu0 0.0
      %455 = vmatprep.subr.mxu0 0.0
      %456 = vmatpush1.xpose.msra.mxu0 0.0
      %457 = vmatprep.subr.mxu0 0.0
      %458 = vmatpush1.xpose.msra.mxu0 0.0
      %459 = vmatprep.subr.mxu0 0.0
      %460 = vmatpush1.xpose.msra.mxu0 0.0
      %461 = vmatprep.subr.mxu0 0.0
      %462 = vmatpush1.xpose.msra.mxu0 0.0
      %463 = vmatprep.subr.mxu0 0.0
      %464 = vmatpush1.xpose.msra.mxu0 0.0
      %465 = vmatprep.subr.mxu0 0.0
      %466 = vmatpush1.xpose.msra.mxu0 0.0
      %467 = vmatprep.subr.mxu0 0.0
      %468 = vmatpush1.xpose.msra.mxu0 0.0
      %469 = vmatprep.subr.mxu0 0.0
      %470 = vmatpush1.xpose.msra.mxu0 0.0
      %471 = vmatprep.subr.mxu0 0.0
      %472 = vmatpush1.xpose.msra.mxu0 0.0
      %473 = vmatprep.subr.mxu0 0.0
      %474 = vmatpush1.xpose.msra.mxu0 0.0
      %475 = vmatprep.subr.mxu0 0.0
      %476 = vmatpush1.xpose.msra.mxu0 0.0
      %477 = vmatprep.subr.mxu0 0.0
      %478 = vmatpush1.xpose.msra.mxu0 0.0
      %479 = vmatprep.subr.mxu0 0.0
      %480 = vmatpush1.xpose.msra.mxu0 0.0
      %481 = vmatprep.subr.mxu0 0.0
      %482 = vmatpush1.xpose.msra.mxu0 %v449
      %483 = vmatprep.subr.mxu0 0.0
      %484 = vmatpush2.xpose.msra.mxu0 0.0
      %485 = vmatprep.subr.mxu0 0.0
      %486 = vmatpush2.xpose.msra.mxu0 0.0
      %487 = vmatprep.subr.mxu0 0.0
      %488 = vmatpush2.xpose.msra.mxu0 0.0
      %489 = vmatprep.subr.mxu0 0.0
      %490 = vmatpush2.xpose.msra.mxu0 0.0
      %491 = vmatprep.subr.mxu0 0.0
      %492 = vmatpush2.xpose.msra.mxu0 0.0
      %493 = vmatprep.subr.mxu0 0.0
      %494 = vmatpush2.xpose.msra.mxu0 0.0
      %495 = vmatprep.subr.mxu0 0.0
      %496 = vmatpush2.xpose.msra.mxu0 0.0
      %497 = vmatprep.subr.mxu0 0.0
      %498 = vmatpush2.xpose.msra.mxu0 0.0
      %499 = vmatprep.subr.mxu0 0.0
      %500 = vmatpush2.xpose.msra.mxu0 0.0
      %501 = vmatprep.subr.mxu0 0.0
      %502 = vmatpush2.xpose.msra.mxu0 0.0
      %503 = vmatprep.subr.mxu0 0.0
      %504 = vmatpush2.xpose.msra.mxu0 0.0
      %505 = vmatprep.subr.mxu0 0.0
      %506 = vmatpush2.xpose.msra.mxu0 0.0
      %507 = vmatprep.subr.mxu0 0.0
      %508 = vmatpush2.xpose.msra.mxu0 0.0
      %509 = vmatprep.subr.mxu0 0.0
      %510 = vmatpush2.xpose.msra.mxu0 0.0
      %511 = vmatprep.subr.mxu0 0.0
      %512 = vmatpush2.xpose.msra.mxu0 0.0
      %513 = vmatprep.subr.mxu0 0.0
      %514 = vmatpush2.xpose.msra.mxu0 0.0
      %515 = vmatprep.mubr.f32.mxu0 0.0
      %516 = vmatmul.mubr.f32.gmra.mxu0 %v447
      %v517 = vpop.f32.mrf.mxu0
      %v518 = vadd.f32 0.0, %v517
      %v519 = vpop.f32.mrf.mxu0
      %520 = vdwg.mxu0
      %v521 = vsel %vm116, %v518, -inf
      %522 = vmax.xlane.f32.xlu0 %v521
      %v523 = vpop.xlane.xlu0 %522
      %v524 = vsub.f32 %v518, %v523
      %v525 = vmul.f32 %v524, 1.442695
      %v526 = vpow.pop %v525
      %v527 = vsel %vm116, %v526, 0.0
      %528 = vadd.xlane.f32.xlu0 %v527
      %v529 = vpop.xlane.xlu0 %528
      %530 = vrot.lane.b32.xlu0 %v112, 48
      %v531 = vpop.permute.xlu0 %530
      %v534 = vsel %vm116, %v526, 0
      %536 = vmatprep.subr.mxu0 0.0
      %537 = vmatpush1.msra.mxu0 0.0
      %538 = vmatprep.subr.mxu0 0.0
      %539 = vmatpush1.msra.mxu0 0.0
      %540 = vmatprep.subr.mxu0 0.0
      %541 = vmatpush1.msra.mxu0 0.0
      %542 = vmatprep.subr.mxu0 0.0
      %543 = vmatpush1.msra.mxu0 0.0
      %544 = vmatprep.subr.mxu0 0.0
      %545 = vmatpush1.msra.mxu0 0.0
      %546 = vmatprep.subr.mxu0 0.0
      %547 = vmatpush1.msra.mxu0 0.0
      %548 = vmatprep.subr.mxu0 0.0
      %549 = vmatpush1.msra.mxu0 0.0
      %550 = vmatprep.subr.mxu0 0.0
      %551 = vmatpush1.msra.mxu0 0.0
      %552 = vmatprep.subr.mxu0 0.0
      %553 = vmatpush1.msra.mxu0 0.0
      %554 = vmatprep.subr.mxu0 0.0
      %555 = vmatpush1.msra.mxu0 0.0
      %556 = vmatprep.subr.mxu0 0.0
      %557 = vmatpush1.msra.mxu0 0.0
      %558 = vmatprep.subr.mxu0 0.0
      %559 = vmatpush1.msra.mxu0 0.0
      %560 = vmatprep.subr.mxu0 0.0
      %561 = vmatpush1.msra.mxu0 0.0
      %562 = vmatprep.subr.mxu0 0.0
      %563 = vmatpush1.msra.mxu0 0.0
      %564 = vmatprep.subr.mxu0 0.0
      %565 = vmatpush1.msra.mxu0 0.0
      %566 = vmatprep.subr.mxu0 0.0
      %567 = vmatpush1.msra.mxu0 %v531
      %568 = vmatprep.subr.mxu0 0.0
      %569 = vmatpush2.msra.mxu0 0.0
      %570 = vmatprep.subr.mxu0 0.0
      %571 = vmatpush2.msra.mxu0 0.0
      %572 = vmatprep.subr.mxu0 0.0
      %573 = vmatpush2.msra.mxu0 0.0
      %574 = vmatprep.subr.mxu0 0.0
      %575 = vmatpush2.msra.mxu0 0.0
      %576 = vmatprep.subr.mxu0 0.0
      %577 = vmatpush2.msra.mxu0 0.0
      %578 = vmatprep.subr.mxu0 0.0
      %579 = vmatpush2.msra.mxu0 0.0
      %580 = vmatprep.subr.mxu0 0.0
      %581 = vmatpush2.msra.mxu0 0.0
      %582 = vmatprep.subr.mxu0 0.0
      %583 = vmatpush2.msra.mxu0 0.0
      %584 = vmatprep.subr.mxu0 0.0
      %585 = vmatpush2.msra.mxu0 0.0
      %586 = vmatprep.subr.mxu0 0.0
      %587 = vmatpush2.msra.mxu0 0.0
      %588 = vmatprep.subr.mxu0 0.0
      %589 = vmatpush2.msra.mxu0 0.0
      %590 = vmatprep.subr.mxu0 0.0
      %591 = vmatpush2.msra.mxu0 0.0
      %592 = vmatprep.subr.mxu0 0.0
      %593 = vmatpush2.msra.mxu0 0.0
      %594 = vmatprep.subr.mxu0 0.0
      %595 = vmatpush2.msra.mxu0 0.0
      %596 = vmatprep.subr.mxu0 0.0
      %597 = vmatpush2.msra.mxu0 0.0
      %598 = vmatprep.subr.mxu0 0.0
      %599 = vmatpush2.msra.mxu0 0.0
      %600 = vmatprep.mubr.f32.mxu0 0.0
      %601 = vmatmul.mubr.f32.gmra.mxu0 %v534
      %v602 = vpop.f32.mrf.mxu0
      %v603 = vadd.f32 0.0, %v602
      %v604 = vpop.f32.mrf.mxu0
      %605 = vdwg.mxu0
      %v606 = vrcp.pop %v529
      %v607 = vmul.f32 %v603, %v606
      %608 = vrot.lane.b32.xlu0 %v112, 104
      %v609 = vpop.permute.xlu0 %608
      %610 = vrot.lane.b32.xlu0 %v112, 72
      %v611 = vpop.permute.xlu0 %610
      %v612 = vsel %vm116, %v609, 0
      %v614 = vsel %vm116, %v611, 0
      %616 = vmatprep.subr.mxu0 0.0
      %617 = vmatpush1.xpose.msra.mxu0 0.0
      %618 = vmatprep.subr.mxu0 0.0
      %619 = vmatpush1.xpose.msra.mxu0 0.0
      %620 = vmatprep.subr.mxu0 0.0
      %621 = vmatpush1.xpose.msra.mxu0 0.0
      %622 = vmatprep.subr.mxu0 0.0
      %623 = vmatpush1.xpose.msra.mxu0 0.0
      %624 = vmatprep.subr.mxu0 0.0
      %625 = vmatpush1.xpose.msra.mxu0 0.0
      %626 = vmatprep.subr.mxu0 0.0
      %627 = vmatpush1.xpose.msra.mxu0 0.0
      %628 = vmatprep.subr.mxu0 0.0
      %629 = vmatpush1.xpose.msra.mxu0 0.0
      %630 = vmatprep.subr.mxu0 0.0
      %631 = vmatpush1.xpose.msra.mxu0 0.0
      %632 = vmatprep.subr.mxu0 0.0
      %633 = vmatpush1.xpose.msra.mxu0 0.0
      %634 = vmatprep.subr.mxu0 0.0
      %635 = vmatpush1.xpose.msra.mxu0 0.0
      %636 = vmatprep.subr.mxu0 0.0
      %637 = vmatpush1.xpose.msra.mxu0 0.0
      %638 = vmatprep.subr.mxu0 0.0
      %639 = vmatpush1.xpose.msra.mxu0 0.0
      %640 = vmatprep.subr.mxu0 0.0
      %641 = vmatpush1.xpose.msra.mxu0 0.0
      %642 = vmatprep.subr.mxu0 0.0
      %643 = vmatpush1.xpose.msra.mxu0 0.0
      %644 = vmatprep.subr.mxu0 0.0
      %645 = vmatpush1.xpose.msra.mxu0 0.0
      %646 = vmatprep.subr.mxu0 0.0
      %647 = vmatpush1.xpose.msra.mxu0 %v614
      %648 = vmatprep.subr.mxu0 0.0
      %649 = vmatpush2.xpose.msra.mxu0 0.0
      %650 = vmatprep.subr.mxu0 0.0
      %651 = vmatpush2.xpose.msra.mxu0 0.0
      %652 = vmatprep.subr.mxu0 0.0
      %653 = vmatpush2.xpose.msra.mxu0 0.0
      %654 = vmatprep.subr.mxu0 0.0
      %655 = vmatpush2.xpose.msra.mxu0 0.0
      %656 = vmatprep.subr.mxu0 0.0
      %657 = vmatpush2.xpose.msra.mxu0 0.0
      %658 = vmatprep.subr.mxu0 0.0
      %659 = vmatpush2.xpose.msra.mxu0 0.0
      %660 = vmatprep.subr.mxu0 0.0
      %661 = vmatpush2.xpose.msra.mxu0 0.0
      %662 = vmatprep.subr.mxu0 0.0
      %663 = vmatpush2.xpose.msra.mxu0 0.0
      %664 = vmatprep.subr.mxu0 0.0
      %665 = vmatpush2.xpose.msra.mxu0 0.0
      %666 = vmatprep.subr.mxu0 0.0
      %667 = vmatpush2.xpose.msra.mxu0 0.0
      %668 = vmatprep.subr.mxu0 0.0
      %669 = vmatpush2.xpose.msra.mxu0 0.0
      %670 = vmatprep.subr.mxu0 0.0
      %671 = vmatpush2.xpose.msra.mxu0 0.0
      %672 = vmatprep.subr.mxu0 0.0
      %673 = vmatpush2.xpose.msra.mxu0 0.0
      %674 = vmatprep.subr.mxu0 0.0
      %675 = vmatpush2.xpose.msra.mxu0 0.0
      %676 = vmatprep.subr.mxu0 0.0
      %677 = vmatpush2.xpose.msra.mxu0 0.0
      %678 = vmatprep.subr.mxu0 0.0
      %679 = vmatpush2.xpose.msra.mxu0 0.0
      %680 = vmatprep.mubr.f32.mxu0 0.0
      %681 = vmatmul.mubr.f32.gmra.mxu0 %v612
      %v682 = vpop.f32.mrf.mxu0
      %v683 = vadd.f32 0.0, %v682
      %v684 = vpop.f32.mrf.mxu0
      %685 = vdwg.mxu0
      %v686 = vsel %vm116, %v683, -inf
      %687 = vmax.xlane.f32.xlu0 %v686
      %v688 = vpop.xlane.xlu0 %687
      %v689 = vsub.f32 %v683, %v688
      %v690 = vmul.f32 %v689, 1.442695
      %v691 = vpow.pop %v690
      %v692 = vsel %vm116, %v691, 0.0
      %693 = vadd.xlane.f32.xlu0 %v692
      %v694 = vpop.xlane.xlu0 %693
      %695 = vrot.lane.b32.xlu0 %v112, 40
      %v696 = vpop.permute.xlu0 %695
      %v699 = vsel %vm116, %v691, 0
      %701 = vmatprep.subr.mxu0 0.0
      %702 = vmatpush1.msra.mxu0 0.0
      %703 = vmatprep.subr.mxu0 0.0
      %704 = vmatpush1.msra.mxu0 0.0
      %705 = vmatprep.subr.mxu0 0.0
      %706 = vmatpush1.msra.mxu0 0.0
      %707 = vmatprep.subr.mxu0 0.0
      %708 = vmatpush1.msra.mxu0 0.0
      %709 = vmatprep.subr.mxu0 0.0
      %710 = vmatpush1.msra.mxu0 0.0
      %711 = vmatprep.subr.mxu0 0.0
      %712 = vmatpush1.msra.mxu0 0.0
      %713 = vmatprep.subr.mxu0 0.0
      %714 = vmatpush1.msra.mxu0 0.0
      %715 = vmatprep.subr.mxu0 0.0
      %716 = vmatpush1.msra.mxu0 0.0
      %717 = vmatprep.subr.mxu0 0.0
      %718 = vmatpush1.msra.mxu0 0.0
      %719 = vmatprep.subr.mxu0 0.0
      %720 = vmatpush1.msra.mxu0 0.0
      %721 = vmatprep.subr.mxu0 0.0
      %722 = vmatpush1.msra.mxu0 0.0
      %723 = vmatprep.subr.mxu0 0.0
      %724 = vmatpush1.msra.mxu0 0.0
      %725 = vmatprep.subr.mxu0 0.0
      %726 = vmatpush1.msra.mxu0 0.0
      %727 = vmatprep.subr.mxu0 0.0
      %728 = vmatpush1.msra.mxu0 0.0
      %729 = vmatprep.subr.mxu0 0.0
      %730 = vmatpush1.msra.mxu0 0.0
      %731 = vmatprep.subr.mxu0 0.0
      %732 = vmatpush1.msra.mxu0 %v696
      %733 = vmatprep.subr.mxu0 0.0
      %734 = vmatpush2.msra.mxu0 0.0
      %735 = vmatprep.subr.mxu0 0.0
      %736 = vmatpush2.msra.mxu0 0.0
      %737 = vmatprep.subr.mxu0 0.0
      %738 = vmatpush2.msra.mxu0 0.0
      %739 = vmatprep.subr.mxu0 0.0
      %740 = vmatpush2.msra.mxu0 0.0
      %741 = vmatprep.subr.mxu0 0.0
      %742 = vmatpush2.msra.mxu0 0.0
      %743 = vmatprep.subr.mxu0 0.0
      %744 = vmatpush2.msra.mxu0 0.0
      %745 = vmatprep.subr.mxu0 0.0
      %746 = vmatpush2.msra.mxu0 0.0
      %747 = vmatprep.subr.mxu0 0.0
      %748 = vmatpush2.msra.mxu0 0.0
      %749 = vmatprep.subr.mxu0 0.0
      %750 = vmatpush2.msra.mxu0 0.0
      %751 = vmatprep.subr.mxu0 0.0
      %752 = vmatpush2.msra.mxu0 0.0
      %753 = vmatprep.subr.mxu0 0.0
      %754 = vmatpush2.msra.mxu0 0.0
      %755 = vmatprep.subr.mxu0 0.0
      %756 = vmatpush2.msra.mxu0 0.0
      %757 = vmatprep.subr.mxu0 0.0
      %758 = vmatpush2.msra.mxu0 0.0
      %759 = vmatprep.subr.mxu0 0.0
      %760 = vmatpush2.msra.mxu0 0.0
      %761 = vmatprep.subr.mxu0 0.0
      %762 = vmatpush2.msra.mxu0 0.0
      %763 = vmatprep.subr.mxu0 0.0
      %764 = vmatpush2.msra.mxu0 0.0
      %765 = vmatprep.mubr.f32.mxu0 0.0
      %766 = vmatmul.mubr.f32.gmra.mxu0 %v699
      %v767 = vpop.f32.mrf.mxu0
      %v768 = vadd.f32 0.0, %v767
      %v769 = vpop.f32.mrf.mxu0
      %770 = vdwg.mxu0
      %v771 = vrcp.pop %v694
      %v772 = vmul.f32 %v768, %v771
      %774 = vrot.lane.b32.xlu0 %v442, 8
      %v775 = vpop.permute.xlu0 %774
      %778 = vrot.lane.b32.xlu0 %v607, 16
      %v779 = vpop.permute.xlu0 %778
      %782 = vrot.lane.b32.xlu0 %v772, 24
      %v783 = vpop.permute.xlu0 %782
      %v785 = vsel %vm116, %v277, %v775
      %vm786 = vcmask 130048
      %v787 = vsel %vm786, %v785, %v779
      %vm788 = vcmask 195584
      %v789 = vsel %vm788, %v787, %v783
      %vm790 = vcmask 261120
      %791 = vst.msk [vmem:[%s111] sm:$0xff] %vm790, %v789
      %p792 = scmp.lt.s32.totalorder %s12, 1
      %s793 = scalar_select %p792, %s12, 1
      %s794 = smul.addr %s793, 8
      %s795 = scalar_lea.vmem %s1, %s794
      // Predicated region
      $region25: #{_lambda_.13} parent=23 // pred_check
        %p796 = pneg %p56
      $region26: #{_lambda_.13} parent=23 // pred_check_branch
        %798 = sbr.rel (%p796) target = $region28
      $region27: #{_lambda_.13} parent=23 // pred_region
        _
      $region28: #{_lambda_.13} parent=23 // pred_fallthru
        _
    $region24: #{_lambda_.13} parent=5 // pred_fallthru
      _
    %p799 = scmp.le.s32.totalorder 2, %s7
    // Predicated region
    $region29: #{_lambda_.13} parent=5 // pred_check
      %p800 = pneg %p799
    $region30: #{_lambda_.13} parent=5 // pred_check_branch
      %802 = sbr.rel (%p800) target = $region32
    $region31: #{_lambda_.13} parent=5 // pred_region
      %s803 = ssub.s32 %s7, 2
      // Predicated region
      $region33: #{_lambda_.13} parent=31 // pred_check
        %p804 = pneg %p62
      $region34: #{_lambda_.13} parent=31 // pred_check_branch
        %806 = sbr.rel (%p804) target = $region36
      $region35: #{_lambda_.13} parent=31 // pred_region
        %p807 = scmp.lt.s32.totalorder %s13, 1
        %s808 = scalar_select %p807, %s13, 1
        %s809 = smul.addr %s808, 8
        %s810 = scalar_lea.vmem %s1, %s809
      $region36: #{_lambda_.13} parent=31 // pred_fallthru
        _
    $region32: #{_lambda_.13} parent=5 // pred_fallthru
      _
  $region6: #{_lambda_.13} parent=0 // loop_footer
    %s11 = sadd.s32 1, %s7
  $region7: #{_lambda_.13} parent=0 // loop_footer_branch
    %6 = sbr.rel target = $region3
  $region8: #{_lambda_.13} parent=0 // loop_exit
    _

// kernel: _lambda_.15
$region0: #{_lambda_.15}
  #allocation0 [shape = 'u32[]', space=smem, size = 0x4, offset = 0x4, fixed_abs, tag = 'smem constant byte address 0x4 - core index']
  #allocation1 [shape = 'u32[144,128]{1,0:T(1,128)}', space=vmem, size = 0x12000, scoped, tag = 'internal scratch']
  %s0 = inlined_call_operand.vmem [shape: f32[16,32], index: 0, kind: input, shape index: {}]
  %s1 = inlined_call_operand.vmem [shape: f32[16,32], index: 1, kind: input, shape index: {}, may-alias: {1,8}]
  %s2 = inlined_call_operand.vmem [shape: f32[32,64], index: 2, kind: input, shape index: {}]
  %s3 = inlined_call_operand.vmem [shape: f32[1,64], index: 3, kind: input, shape index: {}]
  %s4 = inlined_call_operand.vmem [shape: f32[64,32], index: 4, kind: input, shape index: {}]
  %s5 = inlined_call_operand.vmem [shape: f32[1,32], index: 5, kind: input, shape index: {}]
  %s6 = inlined_call_operand.vmem [shape: f32[1,32], index: 6, kind: input, shape index: {}]
  %s7 = inlined_call_operand.vmem [shape: f32[1,32], index: 7, kind: input, shape index: {}]
  %s8 = inlined_call_operand.vmem [shape: f32[16,32], index: 8, kind: output, shape index: {}, may-alias: {1,8}]
  %s9 = sld [smem:[#allocation0]]
  $region65: #{_lambda_.15} parent=0
    _
  %s11 = ssub.s32 1, %s9
  %s12 = scalar_select 0, %s11, %s9
  loop: start=0, step=1, limit=4
  $region2: #{_lambda_.15} parent=0 // loop_pre_header
    _
  $region3: #{_lambda_.15} parent=0 // loop_header
    %s14 = sphi 0, %s18
    %p15 = scmp.ge.s32.totalorder %s14, 4
    %s24 = sphi 0, %s26
    %s27 = sphi 0, %s24
    %s28 = sphi 0, %s27
    %s44 = sphi 0, %s28
    %s50 = sphi 0, %s52
    %s53 = sphi 0, %s50
    %s54 = sphi 0, %s53
    %s70 = sphi 0, %s54
    %s74 = sphi 0, %s74
    %s76 = sphi 0, %s74
    %s77 = sphi 0, %s76
    %s91 = sphi 0, %s77
    %s95 = sphi 0, %s95
    %s97 = sphi 0, %s95
    %s98 = sphi 0, %s97
    %s112 = sphi 0, %s98
    %s116 = sphi 0, %s116
    %s118 = sphi 0, %s116
    %s119 = sphi 0, %s118
    %s133 = sphi 0, %s119
    %s137 = sphi 0, %s137
    %s139 = sphi 0, %s137
    %s140 = sphi 0, %s139
    %s154 = sphi 0, %s140
    %s158 = sphi 0, %s158
    %s160 = sphi 0, %s158
    %s161 = sphi 0, %s160
    %s175 = sphi 0, %s161
    %s179 = sphi 0, %s179
    %s181 = sphi 0, %s179
    %s182 = sphi 0, %s181
    %s196 = sphi 0, %s182
    %s202 = sphi 0, %s204
    %s205 = sphi 0, %s202
    %s206 = sphi 0, %s205
    %s222 = sphi 0, %s206
  $region4: #{_lambda_.15} parent=0 // loop_header_branch
    %17 = sbr.rel (%p15) target = $region8
  $region5: #{_lambda_.15} parent=0 // loop_body
    %s19 = ssub.s32 %s14, 1
    %s20 = ssub.s32 %s14, 2
    %s21 = sadd.s32 %s14, 1
    %s22 = ssub.s32 %s14, %s21
    %p23 = scmp.eq.s32.totalorder %s22, 0
    %s25 = sadd.s32 %s24, 1
    %s26 = scalar_select %p23, %s24, %s25
    %p29 = pneg %p23
    %p30 = scmp.eq.s32.totalorder %s14, 1
    %p31 = por %p29, %p30
    %p32 = scmp.ne.s32.totalorder %s24, %s27
    %p33 = scmp.eq.s32.totalorder %s14, 0
    %p34 = por %p32, %p33
    %p35 = scmp.ne.s32.totalorder %s24, %s27
    %p36 = scmp.eq.s32.totalorder %s19, 1
    %p37 = por %p35, %p36
    %p38 = scmp.ne.s32.totalorder %s27, %s28
    %p39 = scmp.eq.s32.totalorder %s19, 0
    %p40 = por %p38, %p39
    %p41 = scmp.ne.s32.totalorder %s27, %s28
    %p42 = scmp.eq.s32.totalorder %s20, 1
    %p43 = por %p41, %p42
    %p45 = scmp.ne.s32.totalorder %s28, %s44
    %p46 = scmp.eq.s32.totalorder %s20, 0
    %p47 = por %p45, %p46
    %s48 = ssub.s32 %s14, %s21
    %p49 = scmp.eq.s32.totalorder %s48, 0
    %s51 = sadd.s32 %s50, 1
    %s52 = scalar_select %p49, %s50, %s51
    %p55 = pneg %p49
    %p56 = scmp.eq.s32.totalorder %s14, 1
    %p57 = por %p55, %p56
    %p58 = scmp.ne.s32.totalorder %s50, %s53
    %p59 = scmp.eq.s32.totalorder %s14, 0
    %p60 = por %p58, %p59
    %p61 = scmp.ne.s32.totalorder %s50, %s53
    %p62 = scmp.eq.s32.totalorder %s19, 1
    %p63 = por %p61, %p62
    %p64 = scmp.ne.s32.totalorder %s53, %s54
    %p65 = scmp.eq.s32.totalorder %s19, 0
    %p66 = por %p64, %p65
    %p67 = scmp.ne.s32.totalorder %s53, %s54
    %p68 = scmp.eq.s32.totalorder %s20, 1
    %p69 = por %p67, %p68
    %p71 = scmp.ne.s32.totalorder %s54, %s70
    %p72 = scmp.eq.s32.totalorder %s20, 0
    %p73 = por %p71, %p72
    %s75 = sadd.s32 %s74, 1
    %p78 = scmp.eq.s32.totalorder %s14, 1
    %p79 = scmp.ne.s32.totalorder %s74, %s76
    %p80 = scmp.eq.s32.totalorder %s14, 0
    %p81 = por %p79, %p80
    %p82 = scmp.ne.s32.totalorder %s74, %s76
    %p83 = scmp.eq.s32.totalorder %s19, 1
    %p84 = por %p82, %p83
    %p85 = scmp.ne.s32.totalorder %s76, %s77
    %p86 = scmp.eq.s32.totalorder %s19, 0
    %p87 = por %p85, %p86
    %p88 = scmp.ne.s32.totalorder %s76, %s77
    %p89 = scmp.eq.s32.totalorder %s20, 1
    %p90 = por %p88, %p89
    %p92 = scmp.ne.s32.totalorder %s77, %s91
    %p93 = scmp.eq.s32.totalorder %s20, 0
    %p94 = por %p92, %p93
    %s96 = sadd.s32 %s95, 1
    %p99 = scmp.eq.s32.totalorder %s14, 1
    %p100 = scmp.ne.s32.totalorder %s95, %s97
    %p101 = scmp.eq.s32.totalorder %s14, 0
    %p102 = por %p100, %p101
    %p103 = scmp.ne.s32.totalorder %s95, %s97
    %p104 = scmp.eq.s32.totalorder %s19, 1
    %p105 = por %p103, %p104
    %p106 = scmp.ne.s32.totalorder %s97, %s98
    %p107 = scmp.eq.s32.totalorder %s19, 0
    %p108 = por %p106, %p107
    %p109 = scmp.ne.s32.totalorder %s97, %s98
    %p110 = scmp.eq.s32.totalorder %s20, 1
    %p111 = por %p109, %p110
    %p113 = scmp.ne.s32.totalorder %s98, %s112
    %p114 = scmp.eq.s32.totalorder %s20, 0
    %p115 = por %p113, %p114
    %s117 = sadd.s32 %s116, 1
    %p120 = scmp.eq.s32.totalorder %s14, 1
    %p121 = scmp.ne.s32.totalorder %s116, %s118
    %p122 = scmp.eq.s32.totalorder %s14, 0
    %p123 = por %p121, %p122
    %p124 = scmp.ne.s32.totalorder %s116, %s118
    %p125 = scmp.eq.s32.totalorder %s19, 1
    %p126 = por %p124, %p125
    %p127 = scmp.ne.s32.totalorder %s118, %s119
    %p128 = scmp.eq.s32.totalorder %s19, 0
    %p129 = por %p127, %p128
    %p130 = scmp.ne.s32.totalorder %s118, %s119
    %p131 = scmp.eq.s32.totalorder %s20, 1
    %p132 = por %p130, %p131
    %p134 = scmp.ne.s32.totalorder %s119, %s133
    %p135 = scmp.eq.s32.totalorder %s20, 0
    %p136 = por %p134, %p135
    %s138 = sadd.s32 %s137, 1
    %p141 = scmp.eq.s32.totalorder %s14, 1
    %p142 = scmp.ne.s32.totalorder %s137, %s139
    %p143 = scmp.eq.s32.totalorder %s14, 0
    %p144 = por %p142, %p143
    %p145 = scmp.ne.s32.totalorder %s137, %s139
    %p146 = scmp.eq.s32.totalorder %s19, 1
    %p147 = por %p145, %p146
    %p148 = scmp.ne.s32.totalorder %s139, %s140
    %p149 = scmp.eq.s32.totalorder %s19, 0
    %p150 = por %p148, %p149
    %p151 = scmp.ne.s32.totalorder %s139, %s140
    %p152 = scmp.eq.s32.totalorder %s20, 1
    %p153 = por %p151, %p152
    %p155 = scmp.ne.s32.totalorder %s140, %s154
    %p156 = scmp.eq.s32.totalorder %s20, 0
    %p157 = por %p155, %p156
    %s159 = sadd.s32 %s158, 1
    %p162 = scmp.eq.s32.totalorder %s14, 1
    %p163 = scmp.ne.s32.totalorder %s158, %s160
    %p164 = scmp.eq.s32.totalorder %s14, 0
    %p165 = por %p163, %p164
    %p166 = scmp.ne.s32.totalorder %s158, %s160
    %p167 = scmp.eq.s32.totalorder %s19, 1
    %p168 = por %p166, %p167
    %p169 = scmp.ne.s32.totalorder %s160, %s161
    %p170 = scmp.eq.s32.totalorder %s19, 0
    %p171 = por %p169, %p170
    %p172 = scmp.ne.s32.totalorder %s160, %s161
    %p173 = scmp.eq.s32.totalorder %s20, 1
    %p174 = por %p172, %p173
    %p176 = scmp.ne.s32.totalorder %s161, %s175
    %p177 = scmp.eq.s32.totalorder %s20, 0
    %p178 = por %p176, %p177
    %s180 = sadd.s32 %s179, 1
    %p183 = scmp.eq.s32.totalorder %s14, 1
    %p184 = scmp.ne.s32.totalorder %s179, %s181
    %p185 = scmp.eq.s32.totalorder %s14, 0
    %p186 = por %p184, %p185
    %p187 = scmp.ne.s32.totalorder %s179, %s181
    %p188 = scmp.eq.s32.totalorder %s19, 1
    %p189 = por %p187, %p188
    %p190 = scmp.ne.s32.totalorder %s181, %s182
    %p191 = scmp.eq.s32.totalorder %s19, 0
    %p192 = por %p190, %p191
    %p193 = scmp.ne.s32.totalorder %s181, %s182
    %p194 = scmp.eq.s32.totalorder %s20, 1
    %p195 = por %p193, %p194
    %p197 = scmp.ne.s32.totalorder %s182, %s196
    %p198 = scmp.eq.s32.totalorder %s20, 0
    %p199 = por %p197, %p198
    %s200 = ssub.s32 %s14, %s21
    %p201 = scmp.eq.s32.totalorder %s200, 0
    %s203 = sadd.s32 %s202, 1
    %s204 = scalar_select %p201, %s202, %s203
    %p207 = pneg %p201
    %p208 = scmp.eq.s32.totalorder %s14, 1
    %p209 = por %p207, %p208
    %p210 = scmp.ne.s32.totalorder %s202, %s205
    %p211 = scmp.eq.s32.totalorder %s14, 0
    %p212 = por %p210, %p211
    %p213 = scmp.ne.s32.totalorder %s202, %s205
    %p214 = scmp.eq.s32.totalorder %s19, 1
    %p215 = por %p213, %p214
    %p216 = scmp.ne.s32.totalorder %s205, %s206
    %p217 = scmp.eq.s32.totalorder %s19, 0
    %p218 = por %p216, %p217
    %p219 = scmp.ne.s32.totalorder %s205, %s206
    %p220 = scmp.eq.s32.totalorder %s20, 1
    %p221 = por %p219, %p220
    %p223 = scmp.ne.s32.totalorder %s206, %s222
    %p224 = scmp.eq.s32.totalorder %s20, 0
    %p225 = por %p223, %p224
    %p226 = scmp.le.s32.totalorder 1, %s14
    %p227 = scmp.lt.s32.totalorder %s14, 3
    %p228 = pnand %p226, %p227
    %p229 = pneg %p228
    // Predicated region
    $region9: #{_lambda_.15} parent=5 // pred_check
      _
    $region10: #{_lambda_.15} parent=5 // pred_check_branch
      %231 = sbr.rel (%p228) target = $region12
    $region11: #{_lambda_.15} parent=5 // pred_region
      %s232 = ssub.s32 %s14, 1
      // Predicated region
      $region13: #{_lambda_.15} parent=11 // pred_check
        %p233 = pneg %p87
      $region14: #{_lambda_.15} parent=11 // pred_check_branch
        %235 = sbr.rel (%p233) target = $region16
      $region15: #{_lambda_.15} parent=11 // pred_region
        _
      $region16: #{_lambda_.15} parent=11 // pred_fallthru
        _
      // Predicated region
      $region17: #{_lambda_.15} parent=11 // pred_check
        %p236 = pneg %p108
      $region18: #{_lambda_.15} parent=11 // pred_check_branch
        %238 = sbr.rel (%p236) target = $region20
      $region19: #{_lambda_.15} parent=11 // pred_region
        _
      $region20: #{_lambda_.15} parent=11 // pred_fallthru
        _
      // Predicated region
      $region21: #{_lambda_.15} parent=11 // pred_check
        %p239 = pneg %p129
      $region22: #{_lambda_.15} parent=11 // pred_check_branch
        %241 = sbr.rel (%p239) target = $region24
      $region23: #{_lambda_.15} parent=11 // pred_region
        _
      $region24: #{_lambda_.15} parent=11 // pred_fallthru
        _
      // Predicated region
      $region25: #{_lambda_.15} parent=11 // pred_check
        %p242 = pneg %p150
      $region26: #{_lambda_.15} parent=11 // pred_check_branch
        %244 = sbr.rel (%p242) target = $region28
      $region27: #{_lambda_.15} parent=11 // pred_region
        _
      $region28: #{_lambda_.15} parent=11 // pred_fallthru
        _
      // Predicated region
      $region29: #{_lambda_.15} parent=11 // pred_check
        %p245 = pneg %p171
      $region30: #{_lambda_.15} parent=11 // pred_check_branch
        %247 = sbr.rel (%p245) target = $region32
      $region31: #{_lambda_.15} parent=11 // pred_region
        _
      $region32: #{_lambda_.15} parent=11 // pred_fallthru
        _
      // Predicated region
      $region33: #{_lambda_.15} parent=11 // pred_check
        %p248 = pneg %p192
      $region34: #{_lambda_.15} parent=11 // pred_check_branch
        %250 = sbr.rel (%p248) target = $region36
      $region35: #{_lambda_.15} parent=11 // pred_region
        _
      $region36: #{_lambda_.15} parent=11 // pred_fallthru
        _
    $region12: #{_lambda_.15} parent=5 // pred_fallthru
      _
    %p251 = scmp.lt.s32.totalorder %s14, 2
    // Predicated region
    $region37: #{_lambda_.15} parent=5 // pred_check
      %p252 = pneg %p251
    $region38: #{_lambda_.15} parent=5 // pred_check_branch
      %254 = sbr.rel (%p252) target = $region40
    $region39: #{_lambda_.15} parent=5 // pred_region
      // Predicated region
      $region41: #{_lambda_.15} parent=39 // pred_check
        %p255 = pneg %p34
      $region42: #{_lambda_.15} parent=39 // pred_check_branch
        %257 = sbr.rel (%p255) target = $region44
      $region43: #{_lambda_.15} parent=39 // pred_region
        %p258 = scmp.lt.s32.totalorder %s14, 1
        %s259 = scalar_select %p258, %s14, 1
        %s260 = smul.addr %s259, 8
        %s261 = scalar_lea.vmem %s0, %s260
      $region44: #{_lambda_.15} parent=39 // pred_fallthru
        _
      // Predicated region
      $region45: #{_lambda_.15} parent=39 // pred_check
        %p262 = pneg %p60
      $region46: #{_lambda_.15} parent=39 // pred_check_branch
        %264 = sbr.rel (%p262) target = $region48
      $region47: #{_lambda_.15} parent=39 // pred_region
        %p265 = scmp.lt.s32.totalorder %s14, 1
        %s266 = scalar_select %p265, %s14, 1
        %s267 = smul.addr %s266, 8
        %s268 = scalar_lea.vmem %s1, %s267
      $region48: #{_lambda_.15} parent=39 // pred_fallthru
        _
    $region40: #{_lambda_.15} parent=5 // pred_fallthru
      _
    %p269 = scmp.le.s32.totalorder 1, %s14
    %p270 = scmp.lt.s32.totalorder %s14, 3
    %p271 = pnand %p269, %p270
    %p272 = pneg %p271
    // Predicated region
    $region49: #{_lambda_.15} parent=5 // pred_check
      _
    $region50: #{_lambda_.15} parent=5 // pred_check_branch
      %274 = sbr.rel (%p271) target = $region52
    $region51: #{_lambda_.15} parent=5 // pred_region
      %s275 = ssub.s32 %s14, 1
      %p276 = scmp.lt.s32.totalorder %s19, 1
      %s277 = scalar_select %p276, %s19, 1
      %s278 = smul.addr %s277, 8
      %s279 = scalar_lea.vmem %s0, %s278
      %p280 = pneg %p40
      %p281 = pneg %p37
      %p282 = scmp.lt.s32.totalorder %s19, 1
      %s283 = scalar_select %p282, %s19, 1
      %s284 = smul.addr %s283, 8
      %s285 = scalar_lea.vmem %s1, %s284
      %p286 = pneg %p66
      %p287 = pneg %p63
      %p288 = pneg %p87
      %p289 = pneg %p84
      %p290 = pneg %p108
      %p291 = pneg %p105
      %p292 = pneg %p129
      %p293 = pneg %p126
      %p294 = pneg %p150
      %p295 = pneg %p147
      %p296 = pneg %p171
      %p297 = pneg %p168
      %p298 = pneg %p192
      %p299 = pneg %p189
      %p300 = pneg %p218
      %p301 = pneg %p215
      %p302 = scmp.lt.s32.totalorder %s19, 1
      %s303 = scalar_select %p302, %s19, 1
      %s304 = smul.addr %s303, 8
      %s305 = scalar_lea.vmem %s8, %s304
      %p306 = scmp.lt.s32.totalorder %s19, 1
      %s307 = scalar_select %p306, %s19, 1
      %s308 = smul.addr %s307, 8
      %s309 = scalar_lea.vmem %s0, %s308
      %p310 = scmp.lt.s32.totalorder %s19, 1
      %s311 = scalar_select %p310, %s19, 1
      %s312 = smul.addr %s311, 8
      %s313 = scalar_lea.vmem %s1, %s312
      %p314 = scmp.lt.s32.totalorder %s19, 1
      %s315 = scalar_select %p314, %s19, 1
      %s316 = smul.addr %s315, 8
      %s317 = scalar_lea.vmem %s8, %s316
      %v318 = vld [vmem:[%s309] sm:$0xff]
      %v319 = vld [vmem:[%s2] sm:$0xff]
      %v320 = vld [vmem:[%s2 + $0x8] sm:$0xff]
      %v321 = vld [vmem:[%s2 + $0x10] sm:$0xff]
      %v322 = vld [vmem:[%s2 + $0x18] sm:$0xff]
      %v323 = vld [vmem:[%s3] sm:$0x1]
      %v325 = vlaneseq
      %v326 = vshrl.u32 %v325, 7
      %v327 = vsub.s32 0, %v326
      %v328 = vrot.slane %v323, %v327
      %vm330 = vcmask 261120
      %v332 = vsel %vm330, %v318, 0
      %334 = vmatprep.subr.mxu0 0.0
      %335 = vmatpush1.msra.mxu0 0.0
      %336 = vmatprep.subr.mxu0 0.0
      %337 = vmatpush1.msra.mxu0 0.0
      %338 = vmatprep.subr.mxu0 0.0
      %339 = vmatpush1.msra.mxu0 0.0
      %340 = vmatprep.subr.mxu0 0.0
      %341 = vmatpush1.msra.mxu0 0.0
      %342 = vmatprep.subr.mxu0 0.0
      %343 = vmatpush1.msra.mxu0 0.0
      %344 = vmatprep.subr.mxu0 0.0
      %345 = vmatpush1.msra.mxu0 0.0
      %346 = vmatprep.subr.mxu0 0.0
      %347 = vmatpush1.msra.mxu0 0.0
      %348 = vmatprep.subr.mxu0 0.0
      %349 = vmatpush1.msra.mxu0 0.0
      %350 = vmatprep.subr.mxu0 0.0
      %351 = vmatpush1.msra.mxu0 0.0
      %352 = vmatprep.subr.mxu0 0.0
      %353 = vmatpush1.msra.mxu0 0.0
      %354 = vmatprep.subr.mxu0 0.0
      %355 = vmatpush1.msra.mxu0 0.0
      %356 = vmatprep.subr.mxu0 0.0
      %357 = vmatpush1.msra.mxu0 0.0
      %358 = vmatprep.subr.mxu0 0.0
      %359 = vmatpush1.msra.mxu0 %v322
      %360 = vmatprep.subr.mxu0 0.0
      %361 = vmatpush1.msra.mxu0 %v321
      %362 = vmatprep.subr.mxu0 0.0
      %363 = vmatpush1.msra.mxu0 %v320
      %364 = vmatprep.subr.mxu0 0.0
      %365 = vmatpush1.msra.mxu0 %v319
      %366 = vmatprep.subr.mxu0 0.0
      %367 = vmatpush2.msra.mxu0 0.0
      %368 = vmatprep.subr.mxu0 0.0
      %369 = vmatpush2.msra.mxu0 0.0
      %370 = vmatprep.subr.mxu0 0.0
      %371 = vmatpush2.msra.mxu0 0.0
      %372 = vmatprep.subr.mxu0 0.0
      %373 = vmatpush2.msra.mxu0 0.0
      %374 = vmatprep.subr.mxu0 0.0
      %375 = vmatpush2.msra.mxu0 0.0
      %376 = vmatprep.subr.mxu0 0.0
      %377 = vmatpush2.msra.mxu0 0.0
      %378 = vmatprep.subr.mxu0 0.0
      %379 = vmatpush2.msra.mxu0 0.0
      %380 = vmatprep.subr.mxu0 0.0
      %381 = vmatpush2.msra.mxu0 0.0
      %382 = vmatprep.subr.mxu0 0.0
      %383 = vmatpush2.msra.mxu0 0.0
      %384 = vmatprep.subr.mxu0 0.0
      %385 = vmatpush2.msra.mxu0 0.0
      %386 = vmatprep.subr.mxu0 0.0
      %387 = vmatpush2.msra.mxu0 0.0
      %388 = vmatprep.subr.mxu0 0.0
      %389 = vmatpush2.msra.mxu0 0.0
      %390 = vmatprep.subr.mxu0 0.0
      %391 = vmatpush2.msra.mxu0 0.0
      %392 = vmatprep.subr.mxu0 0.0
      %393 = vmatpush2.msra.mxu0 0.0
      %394 = vmatprep.subr.mxu0 0.0
      %395 = vmatpush2.msra.mxu0 0.0
      %396 = vmatprep.subr.mxu0 0.0
      %397 = vmatpush2.msra.mxu0 0.0
      %398 = vmatprep.mubr.f32.mxu0 0.0
      %399 = vmatmul.mubr.f32.gmra.mxu0 %v332
      %v400 = vpop.f32.mrf.mxu0
      %v401 = vadd.f32 %v328, %v400
      %v402 = vpop.f32.mrf.mxu0
      %403 = vdwg.mxu0
      %v404 = vmul.f32 %v401, 0.5
      %v405 = vmul.f32 %v401, 0.044715
      %v406 = vmul.f32 %v405, %v401
      %v407 = vmul.f32 %v406, %v401
      %v408 = vadd.f32 %v401, %v407
      %v409 = vmul.f32 %v408, 0.7978846
      %v410 = vtanh.pop %v409
      %v411 = vadd.f32 %v410, 1.0
      %v412 = vmul.f32 %v404, %v411
      %v413 = vld [vmem:[%s4] sm:$0xff]
      %v414 = vld [vmem:[%s4 + $0x8] sm:$0xff]
      %v415 = vld [vmem:[%s4 + $0x10] sm:$0xff]
      %v416 = vld [vmem:[%s4 + $0x18] sm:$0xff]
      %v417 = vld [vmem:[%s4 + $0x20] sm:$0xff]
      %v418 = vld [vmem:[%s4 + $0x28] sm:$0xff]
      %v419 = vld [vmem:[%s4 + $0x30] sm:$0xff]
      %v420 = vld [vmem:[%s4 + $0x38] sm:$0xff]
      %v421 = vld [vmem:[%s5] sm:$0x1]
      %v423 = vlaneseq
      %v424 = vshrl.u32 %v423, 7
      %v425 = vsub.s32 0, %v424
      %v426 = vrot.slane %v421, %v425
      %vm428 = vcmask 523264
      %v430 = vsel %vm428, %v412, 0
      %432 = vmatprep.subr.mxu0 0.0
      %433 = vmatpush1.msra.mxu0 0.0
      %434 = vmatprep.subr.mxu0 0.0
      %435 = vmatpush1.msra.mxu0 0.0
      %436 = vmatprep.subr.mxu0 0.0
      %437 = vmatpush1.msra.mxu0 0.0
      %438 = vmatprep.subr.mxu0 0.0
      %439 = vmatpush1.msra.mxu0 0.0
      %440 = vmatprep.subr.mxu0 0.0
      %441 = vmatpush1.msra.mxu0 0.0
      %442 = vmatprep.subr.mxu0 0.0
      %443 = vmatpush1.msra.mxu0 0.0
      %444 = vmatprep.subr.mxu0 0.0
      %445 = vmatpush1.msra.mxu0 0.0
      %446 = vmatprep.subr.mxu0 0.0
      %447 = vmatpush1.msra.mxu0 0.0
      %448 = vmatprep.subr.mxu0 0.0
      %449 = vmatpush1.msra.mxu0 %v420
      %450 = vmatprep.subr.mxu0 0.0
      %451 = vmatpush1.msra.mxu0 %v419
      %452 = vmatprep.subr.mxu0 0.0
      %453 = vmatpush1.msra.mxu0 %v418
      %454 = vmatprep.subr.mxu0 0.0
      %455 = vmatpush1.msra.mxu0 %v417
      %456 = vmatprep.subr.mxu0 0.0
      %457 = vmatpush1.msra.mxu0 %v416
      %458 = vmatprep.subr.mxu0 0.0
      %459 = vmatpush1.msra.mxu0 %v415
      %460 = vmatprep.subr.mxu0 0.0
      %461 = vmatpush1.msra.mxu0 %v414
      %462 = vmatprep.subr.mxu0 0.0
      %463 = vmatpush1.msra.mxu0 %v413
      %464 = vmatprep.subr.mxu0 0.0
      %465 = vmatpush2.msra.mxu0 0.0
      %466 = vmatprep.subr.mxu0 0.0
      %467 = vmatpush2.msra.mxu0 0.0
      %468 = vmatprep.subr.mxu0 0.0
      %469 = vmatpush2.msra.mxu0 0.0
      %470 = vmatprep.subr.mxu0 0.0
      %471 = vmatpush2.msra.mxu0 0.0
      %472 = vmatprep.subr.mxu0 0.0
      %473 = vmatpush2.msra.mxu0 0.0
      %474 = vmatprep.subr.mxu0 0.0
      %475 = vmatpush2.msra.mxu0 0.0
      %476 = vmatprep.subr.mxu0 0.0
      %477 = vmatpush2.msra.mxu0 0.0
      %478 = vmatprep.subr.mxu0 0.0
      %479 = vmatpush2.msra.mxu0 0.0
      %480 = vmatprep.subr.mxu0 0.0
      %481 = vmatpush2.msra.mxu0 0.0
      %482 = vmatprep.subr.mxu0 0.0
      %483 = vmatpush2.msra.mxu0 0.0
      %484 = vmatprep.subr.mxu0 0.0
      %485 = vmatpush2.msra.mxu0 0.0
      %486 = vmatprep.subr.mxu0 0.0
      %487 = vmatpush2.msra.mxu0 0.0
      %488 = vmatprep.subr.mxu0 0.0
      %489 = vmatpush2.msra.mxu0 0.0
      %490 = vmatprep.subr.mxu0 0.0
      %491 = vmatpush2.msra.mxu0 0.0
      %492 = vmatprep.subr.mxu0 0.0
      %493 = vmatpush2.msra.mxu0 0.0
      %494 = vmatprep.subr.mxu0 0.0
      %495 = vmatpush2.msra.mxu0 0.0
      %496 = vmatprep.mubr.f32.mxu0 0.0
      %497 = vmatmul.mubr.f32.gmra.mxu0 %v430
      %v498 = vpop.f32.mrf.mxu0
      %v499 = vadd.f32 %v426, %v498
      %v500 = vpop.f32.mrf.mxu0
      %501 = vdwg.mxu0
      %v502 = vld [vmem:[%s313] sm:$0xff]
      %v503 = vadd.f32 %v499, %v502
      %v504 = vsel %vm330, %v503, 0.0
      %505 = vadd.xlane.f32.xlu0 %v504
      %v506 = vpop.xlane.xlu0 %505
      %v507 = vrcp.pop 32.0
      %v508 = vmul.f32 %v506, %v507
      %v509 = vsub.f32 %v503, %v508
      %v510 = vmul.f32 %v509, %v509
      %v511 = vsel %vm330, %v510, 0.0
      %512 = vadd.xlane.f32.xlu0 %v511
      %v513 = vpop.xlane.xlu0 %512
      %v514 = vmul.f32 %v513, %v507
      %v515 = vadd.f32 %v514, 1e-12
      %v516 = vrsqrt.pop %v515
      %v517 = vmul.f32 %v509, %v516
      %v518 = vld [vmem:[%s6] sm:$0x1]
      %v520 = vlaneseq
      %v521 = vshrl.u32 %v520, 7
      %v522 = vsub.s32 0, %v521
      %v523 = vrot.slane %v518, %v522
      %v525 = vmul.f32 %v517, %v523
      %v526 = vld [vmem:[%s7] sm:$0x1]
      %v528 = vlaneseq
      %v529 = vshrl.u32 %v528, 7
      %v530 = vsub.s32 0, %v529
      %v531 = vrot.slane %v526, %v530
      %v533 = vadd.f32 %v525, %v531
      %534 = vst.msk [vmem:[%s317] sm:$0xff] %vm330, %v533
      %p535 = scmp.lt.s32.totalorder %s19, 1
      %s536 = scalar_select %p535, %s19, 1
      %s537 = smul.addr %s536, 8
      %s538 = scalar_lea.vmem %s8, %s537
      // Predicated region
      $region53: #{_lambda_.15} parent=51 // pred_check
        %p539 = pneg %p215
      $region54: #{_lambda_.15} parent=51 // pred_check_branch
        %541 = sbr.rel (%p539) target = $region56
      $region55: #{_lambda_.15} parent=51 // pred_region
        _
      $region56: #{_lambda_.15} parent=51 // pred_fallthru
        _
    $region52: #{_lambda_.15} parent=5 // pred_fallthru
      _
    %p542 = scmp.le.s32.totalorder 2, %s14
    // Predicated region
    $region57: #{_lambda_.15} parent=5 // pred_check
      %p543 = pneg %p542
    $region58: #{_lambda_.15} parent=5 // pred_check_branch
      %545 = sbr.rel (%p543) target = $region60
    $region59: #{_lambda_.15} parent=5 // pred_region
      %s546 = ssub.s32 %s14, 2
      // Predicated region
      $region61: #{_lambda_.15} parent=59 // pred_check
        %p547 = pneg %p221
      $region62: #{_lambda_.15} parent=59 // pred_check_branch
        %549 = sbr.rel (%p547) target = $region64
      $region63: #{_lambda_.15} parent=59 // pred_region
        %p550 = scmp.lt.s32.totalorder %s20, 1
        %s551 = scalar_select %p550, %s20, 1
        %s552 = smul.addr %s551, 8
        %s553 = scalar_lea.vmem %s8, %s552
      $region64: #{_lambda_.15} parent=59 // pred_fallthru
        _
    $region60: #{_lambda_.15} parent=5 // pred_fallthru
      _
  $region6: #{_lambda_.15} parent=0 // loop_footer
    %s18 = sadd.s32 1, %s14
  $region7: #{_lambda_.15} parent=0 // loop_footer_branch
    %13 = sbr.rel target = $region3
  $region8: #{_lambda_.15} parent=0 // loop_exit
    _

</llo_original>
